<compile_context>
chip_gen: v7x
topology: tpu7x:2x2x1
jax: 0.10.0
libtpu: 0.0.40
codegen_flags: <defaults>
</compile_context>

<pallas_src>
import functools
import numpy as np
import jax
import jax.numpy as jnp
from jax import lax
from jax.experimental import pallas as pl
from jax.experimental.pallas import tpu as pltpu


# ------------------------------ kernel helpers -------------------------------

def _tap_gather(a, off):
    """t[:, i] = a[:, i + off] for in-range i; out-of-range / wrapped lanes hold
    values that the caller MUST mask to zero.  Uses the XLU roll when the lane
    dim is 128-aligned, otherwise a slice + zero-pad concat."""
    if off == 0:
        return a
    c, n = a.shape
    if n % 128 == 0:
        return pltpu.roll(a, shift=(-off) % n, axis=1)
    z = jnp.zeros((c, abs(off)), a.dtype)
    if off > 0:
        return jnp.concatenate([a[:, off:], z], axis=1)
    return jnp.concatenate([z, a[:, :n + off]], axis=1)


def _decoder_kernel(*refs, n_deconv, s0):
    f32, bf16 = jnp.float32, jnp.bfloat16

    out_ref = refs[-1]
    x_ref, wfc_ref, bfc_ref, amask_ref, eplace_ref = refs[:5]
    pos = 5
    layer_refs = [refs[pos + 4 * i: pos + 4 * i + 4] for i in range(n_deconv)]
    pos += 4 * n_deconv
    wf_ref, fmask_ref, bf_ref = refs[pos:pos + 3]

    # ---- fc + ReLU : (1, F), one batch element per grid step ----
    h = jnp.dot(x_ref[0].astype(bf16), wfc_ref[...], preferred_element_type=f32)
    h = jnp.maximum(h + bfc_ref[...], 0.0)

    # ---- (1, F) -> channel-major (C0, s0*s0) via batch-shared select/place ----
    hm = (amask_ref[...] * h).astype(bf16)                        # (C0, F)
    a = jnp.dot(hm, eplace_ref[...], preferred_element_type=f32)  # (C0, hw0)

    # ---- ConvTranspose2d(k3, s2, p1, op1) + ReLU layers ----
    # Each layer: 4 shifted/masked taps, 4 phase-stacked weight matmuls
    # (-> (4*Cout, N) with the 4 output phases stacked in sublanes), then a
    # 2x2 phase interleave via 4 batch-shared 0/1 spread matmuls (N, 4N).
    H = s0
    for wt_ref, m_ref, sp_ref, b_ref in layer_refs:
        W = H
        cout = b_ref.shape[0]
        mx = m_ref[0]                                             # x < W-1 mask, (1, N)
        my = m_ref[1]                                             # y < H-1 mask, (1, N)

        a_id = a.astype(bf16)
        a_x = (_tap_gather(a, 1) * mx).astype(bf16)               # in[y,   x+1]
        a_y = (_tap_gather(a, W) * my).astype(bf16)               # in[y+1, x  ]
        a_xy = (_tap_gather(a, W + 1) * (mx * my)).astype(bf16)   # in[y+1, x+1]

        p = jnp.dot(wt_ref[0], a_id, preferred_element_type=f32)
        p = p + jnp.dot(wt_ref[1], a_x, preferred_element_type=f32)
        p = p + jnp.dot(wt_ref[2], a_y, preferred_element_type=f32)
        p = p + jnp.dot(wt_ref[3], a_xy, preferred_element_type=f32)   # (4*cout, N)

        y = jnp.dot(p[0 * cout:1 * cout, :].astype(bf16), sp_ref[0],
                    preferred_element_type=f32)
        y = y + jnp.dot(p[1 * cout:2 * cout, :].astype(bf16), sp_ref[1],
                        preferred_element_type=f32)
        y = y + jnp.dot(p[2 * cout:3 * cout, :].astype(bf16), sp_ref[2],
                        preferred_element_type=f32)
        y = y + jnp.dot(p[3 * cout:4 * cout, :].astype(bf16), sp_ref[3],
                        preferred_element_type=f32)                # (cout, 4N)
        a = jnp.maximum(y + b_ref[...], 0.0)
        H = 2 * H

    # ---- final Conv2d(k3, s1, p1) + Sigmoid: per-tap accumulation ----
    W = H
    cpad = bf_ref.shape[0]
    acc = jnp.zeros((cpad, H * W), f32)
    for ky in range(3):
        for kx in range(3):
            t = 3 * ky + kx
            dy, dx = ky - 1, kx - 1
            if dy == 0 and dx == 0:
                tap = a.astype(bf16)
            else:
                tap = (_tap_gather(a, dy * W + dx) * fmask_ref[t]).astype(bf16)
            acc = acc + jnp.dot(wf_ref[t], tap, preferred_element_type=f32)
    out = jax.nn.sigmoid(acc + bf_ref[...])                        # (cpad, H*W), lane-dense
    out_ref[0, :, :] = out


# ------------------- constant routing matrices (batch-shared) ----------------

def _phase_spread_mats(H, W):
    """(4, H*W, 4*H*W) 0/1 matrices interleaving the 4 ConvTranspose output
    phases (even/odd row x even/odd col) into the 2H x 2W output raster."""
    N, Wo = H * W, 2 * W
    s = np.zeros((4, N, 4 * N), np.float32)
    for pidx, (py, px) in enumerate(((0, 0), (0, 1), (1, 0), (1, 1))):
        for m in range(H):
            for n in range(W):
                s[pidx, m * W + n, (2 * m + py) * Wo + (2 * n + px)] = 1.0
    return s


def _upper_boundary_masks(H, W):
    """(2, 1, H*W): [x < W-1 mask, y < H-1 mask] for the shifted deconv taps."""
    m = np.zeros((2, 1, H * W), np.float32)
    for yy in range(H):
        for xx in range(W):
            i = yy * W + xx
            m[0, 0, i] = 1.0 if xx < W - 1 else 0.0
            m[1, 0, i] = 1.0 if yy < H - 1 else 0.0
    return m


def _conv3x3_tap_masks(H, W):
    """(9, 1, H*W) zero-padding boundary masks for a 3x3 stride-1 pad-1 conv."""
    m = np.zeros((9, 1, H * W), np.float32)
    for ky in range(3):
        for kx in range(3):
            t, dy, dx = 3 * ky + kx, ky - 1, kx - 1
            for yy in range(H):
                for xx in range(W):
                    if 0 <= yy + dy < H and 0 <= xx + dx < W:
                        m[t, 0, yy * W + xx] = 1.0
    return m


def build_kernel_params(tp, image_size, conv_dims, output_dim):
    L = len(conv_dims)
    s0 = image_size // 2 ** L
    hw0 = s0 * s0
    c0 = conv_dims[-1]
    F = c0 * hw0

    kp = {
        "wfc_t": jnp.asarray(tp["fc_w"]).T.astype(jnp.bfloat16),   # (latent, F)
        "bfc": jnp.asarray(tp["fc_b"]).reshape(1, F),              # f32
    }
    # Batch-shared select / place matrices for the post-fc channel-major split.
    amask = np.zeros((c0, F), np.float32)
    for c in range(c0):
        amask[c, c * hw0:(c + 1) * hw0] = 1.0
    eplace = np.zeros((F, hw0), np.float32)
    for f in range(F):
        eplace[f, f % hw0] = 1.0
    kp["amask"] = jnp.asarray(amask)                               # f32 (VPU mult)
    kp["eplace"] = jnp.asarray(eplace, dtype=jnp.bfloat16)

    layers = []
    H = s0
    for (wt, bt) in tp["deconvs"]:                 # wt: (Cin, Cout, 3, 3) PyTorch layout
        w = np.asarray(wt)
        cin, cout = w.shape[0], w.shape[1]

        def blk(ky, kx):
            return w[:, :, ky, kx].T               # (Cout, Cin)

        z = np.zeros((cout, cin), np.float32)
        # Phase-stacked per-tap weights; phase order (py,px)=(0,0),(0,1),(1,0),(1,1):
        #   out[2m+py, 2n+px] uses only the kernel taps with ky = 1-py (+2), kx = 1-px (+2)
        wt_id = np.concatenate([blk(1, 1), blk(1, 2), blk(2, 1), blk(2, 2)], axis=0)
        wt_x = np.concatenate([z, blk(1, 0), z, blk(2, 0)], axis=0)
        wt_y = np.concatenate([z, z, blk(0, 1), blk(0, 2)], axis=0)
        wt_xy = np.concatenate([z, z, z, blk(0, 0)], axis=0)
        layers.append({
            "wt": jnp.asarray(np.stack([wt_id, wt_x, wt_y, wt_xy]), dtype=jnp.bfloat16),
            "masks": jnp.asarray(_upper_boundary_masks(H, H)),
            "spread": jnp.asarray(_phase_spread_mats(H, H), dtype=jnp.bfloat16),
            "bias": jnp.asarray(bt).reshape(cout, 1),              # f32
        })
        H *= 2
    kp["layers"] = layers

    # Final conv: pad Cout (= output_dim) to a sublane multiple of 8.
    cpad = max(8, ((output_dim + 7) // 8) * 8)
    pw = np.asarray(tp["pred_w"])                                  # (O, Cin, 3, 3)
    cin_f = pw.shape[1]
    wf = np.zeros((9, cpad, cin_f), np.float32)
    for ky in range(3):
        for kx in range(3):
            wf[3 * ky + kx, :output_dim, :] = pw[:, :, ky, kx]
    bf = np.zeros((cpad, 1), np.float32)
    bf[:output_dim, 0] = np.asarray(tp["pred_b"])
    kp["wf"] = jnp.asarray(wf, dtype=jnp.bfloat16)
    kp["fmask"] = jnp.asarray(_conv3x3_tap_masks(H, H))
    kp["bf"] = jnp.asarray(bf)
    kp["cpad"] = cpad
    return kp


# ----------------------------------- wrapper ----------------------------------

def _full_spec(arr):
    nd = arr.ndim
    return pl.BlockSpec(arr.shape, lambda b, _nd=nd: (0,) * _nd)   # resident constant


def decoder_forward(x, kp, conv_dims, image_size, output_dim):
    B, latent = x.shape
    L = len(conv_dims)
    s0 = image_size // 2 ** L
    cpad = kp["cpad"]
    nf = image_size * image_size

    inputs = [x.reshape(B, 1, latent), kp["wfc_t"], kp["bfc"], kp["amask"], kp["eplace"]]
    in_specs = [pl.BlockSpec((1, 1, latent), lambda b: (b, 0, 0))]
    in_specs += [_full_spec(a) for a in inputs[1:]]
    for lyr in kp["layers"]:
        for name in ("wt", "masks", "spread", "bias"):
            inputs.append(lyr[name])
            in_specs.append(_full_spec(lyr[name]))
    for name in ("wf", "fmask", "bf"):
        inputs.append(kp[name])
        in_specs.append(_full_spec(kp[name]))

    kern = functools.partial(_decoder_kernel, n_deconv=L, s0=s0)
    out = pl.pallas_call(
        kern,
        grid=(B,),
        out_shape=jax.ShapeDtypeStruct((B, cpad, nf), jnp.float32),
        in_specs=in_specs,
        out_specs=pl.BlockSpec((1, cpad, nf), lambda b: (b, 0, 0)),
        compiler_params=pltpu.CompilerParams(
            dimension_semantics=("parallel",),          # megacore split on v7x
            vmem_limit_bytes=48 * 1024 * 1024),         # fits v7x 64 MiB w/ headroom
    )(*inputs)
    # Drop channel padding; reshape to NCHW is metadata-only (output is lane-dense).
    return out[:, :output_dim, :].reshape(B, output_dim, image_size, image_size)


# --------------------------- params (PyTorch layout) --------------------------

def init_torch_params(key, latent_dim, image_size, conv_dims, output_dim):
    n = len(conv_dims)
    s = image_size // 2 ** n
    fc_dim = s * s * conv_dims[-1]
    keys = jax.random.split(key, 2 * (n + 2))
    ki = iter(keys)
    tp = {}
    tp["fc_w"] = 0.05 * jax.random.normal(next(ki), (fc_dim, latent_dim), jnp.float32)
    tp["fc_b"] = 0.05 * jax.random.normal(next(ki), (fc_dim,), jnp.float32)
    deconvs = []
    prev = conv_dims[-1]
    for cd in conv_dims[::-1]:
        wt = 0.05 * jax.random.normal(next(ki), (prev, cd, 3, 3), jnp.float32)
        bt = 0.05 * jax.random.normal(next(ki), (cd,), jnp.float32)
        deconvs.append((wt, bt))
        prev = cd
    tp["deconvs"] = deconvs
    tp["pred_w"] = 0.05 * jax.random.normal(next(ki), (output_dim, prev, 3, 3), jnp.float32)
    tp["pred_b"] = 0.05 * jax.random.normal(next(ki), (output_dim,), jnp.float32)
    return tp


# ----------------------------- pure-JAX reference -----------------------------

def reference_forward(x, tp, conv_dims, image_size):
    s = image_size // (2 ** len(conv_dims))
    B = x.shape[0]
    h = jnp.maximum(x @ tp["fc_w"].T + tp["fc_b"], 0.0)
    h = h.reshape(B, conv_dims[-1], s, s)
    for (wt, bt) in tp["deconvs"]:
        wc = jnp.transpose(wt[:, :, ::-1, ::-1], (1, 0, 2, 3))   # (Cout,Cin,3,3)
        h = lax.conv_general_dilated(
            h, wc, window_strides=(1, 1), padding=((1, 2), (1, 2)),
            lhs_dilation=(2, 2), dimension_numbers=("NCHW", "OIHW", "NCHW"),
            precision=lax.Precision.HIGHEST)
        h = jnp.maximum(h + bt[None, :, None, None], 0.0)
    h = lax.conv_general_dilated(
        h, tp["pred_w"], (1, 1), ((1, 1), (1, 1)),
        dimension_numbers=("NCHW", "OIHW", "NCHW"),
        precision=lax.Precision.HIGHEST)
    return jax.nn.sigmoid(h + tp["pred_b"][None, :, None, None])


# ----------------------------------- main --------------------------------------

if __name__ == "__main__":
    latent_dim = 32
    image_size = 16
    conv_dims = (8, 16)      # -> two ConvTranspose layers, start spatial = 16/4 = 4
    output_dim = 3
    batch = 2

    key = jax.random.PRNGKey(0)
    k_x, k_p = jax.random.split(key)
    x = jax.random.normal(k_x, (batch, latent_dim), jnp.float32)
    tp = init_torch_params(k_p, latent_dim, image_size, conv_dims, output_dim)
    kp = build_kernel_params(tp, image_size, conv_dims, output_dim)

    out = jax.block_until_ready(
        decoder_forward(x, kp, conv_dims, image_size, output_dim))
    ref = jax.block_until_ready(
        reference_forward(x, tp, conv_dims, image_size))

    assert out.shape == (batch, output_dim, image_size, image_size), out.shape
    # bf16 MXU tolerance (routing constants are exact in bf16; activations round once per matmul)
    np.testing.assert_allclose(np.asarray(out), np.asarray(ref),
                               rtol=2e-2, atol=2e-2)
    print("KERNEL_OK")
</pallas_src>

<mosaic_0001>
module attributes {stable_mosaic.version = 11 : i64} {
  func.func @_decoder_kernel(%arg0: i32, %arg1: memref<1x1x32xf32, #tpu.memory_space<vmem>>, %arg2: memref<32x256xbf16, #tpu.memory_space<vmem>>, %arg3: memref<1x256xf32, #tpu.memory_space<vmem>>, %arg4: memref<16x256xf32, #tpu.memory_space<vmem>>, %arg5: memref<256x16xbf16, #tpu.memory_space<vmem>>, %arg6: memref<4x64x16xbf16, #tpu.memory_space<vmem>>, %arg7: memref<2x1x16xf32, #tpu.memory_space<vmem>>, %arg8: memref<4x16x64xbf16, #tpu.memory_space<vmem>>, %arg9: memref<16x1xf32, #tpu.memory_space<vmem>>, %arg10: memref<4x32x16xbf16, #tpu.memory_space<vmem>>, %arg11: memref<2x1x64xf32, #tpu.memory_space<vmem>>, %arg12: memref<4x64x256xbf16, #tpu.memory_space<vmem>>, %arg13: memref<8x1xf32, #tpu.memory_space<vmem>>, %arg14: memref<9x8x8xbf16, #tpu.memory_space<vmem>>, %arg15: memref<9x1x256xf32, #tpu.memory_space<vmem>>, %arg16: memref<8x1xf32, #tpu.memory_space<vmem>>, %arg17: memref<1x8x256xf32, #tpu.memory_space<vmem>>) attributes {dimension_semantics = [#tpu.dimension_semantics<parallel>], iteration_bounds = array<i64: 2>, scalar_prefetch = 0 : i64, scratch_operands = 0 : i64, tpu.core_type = #tpu.core_type<tc>, window_params = [{transform_indices = @transform_0, window_bounds = array<i64: 1, 1, 32>}, {pipeline_mode = #tpu.pipeline_mode<synchronous>, transform_indices = @transform_1, window_bounds = array<i64: 32, 256>}, {pipeline_mode = #tpu.pipeline_mode<synchronous>, transform_indices = @transform_2, window_bounds = array<i64: 1, 256>}, {pipeline_mode = #tpu.pipeline_mode<synchronous>, transform_indices = @transform_3, window_bounds = array<i64: 16, 256>}, {pipeline_mode = #tpu.pipeline_mode<synchronous>, transform_indices = @transform_4, window_bounds = array<i64: 256, 16>}, {pipeline_mode = #tpu.pipeline_mode<synchronous>, transform_indices = @transform_5, window_bounds = array<i64: 4, 64, 16>}, {pipeline_mode = #tpu.pipeline_mode<synchronous>, transform_indices = @transform_6, window_bounds = array<i64: 2, 1, 16>}, {pipeline_mode = #tpu.pipeline_mode<synchronous>, transform_indices = @transform_7, window_bounds = array<i64: 4, 16, 64>}, {pipeline_mode = #tpu.pipeline_mode<synchronous>, transform_indices = @transform_8, window_bounds = array<i64: 16, 1>}, {pipeline_mode = #tpu.pipeline_mode<synchronous>, transform_indices = @transform_9, window_bounds = array<i64: 4, 32, 16>}, {pipeline_mode = #tpu.pipeline_mode<synchronous>, transform_indices = @transform_10, window_bounds = array<i64: 2, 1, 64>}, {pipeline_mode = #tpu.pipeline_mode<synchronous>, transform_indices = @transform_11, window_bounds = array<i64: 4, 64, 256>}, {pipeline_mode = #tpu.pipeline_mode<synchronous>, transform_indices = @transform_12, window_bounds = array<i64: 8, 1>}, {pipeline_mode = #tpu.pipeline_mode<synchronous>, transform_indices = @transform_13, window_bounds = array<i64: 9, 8, 8>}, {pipeline_mode = #tpu.pipeline_mode<synchronous>, transform_indices = @transform_14, window_bounds = array<i64: 9, 1, 256>}, {pipeline_mode = #tpu.pipeline_mode<synchronous>, transform_indices = @transform_15, window_bounds = array<i64: 8, 1>}, {transform_indices = @transform_16, window_bounds = array<i64: 1, 8, 256>}]} {
    %c0 = arith.constant 0 : index
    %c0_0 = arith.constant 0 : index
    %c0_1 = arith.constant 0 : index
    %0 = vector.load %arg1[%c0, %c0_0, %c0_1] : memref<1x1x32xf32, #tpu.memory_space<vmem>>, vector<1x1x32xf32>
    %1 = vector.shape_cast %0 : vector<1x1x32xf32> to vector<1x32xf32>
    %2 = arith.truncf %1 : vector<1x32xf32> to vector<1x32xbf16>
    %c0_2 = arith.constant 0 : index
    %c0_3 = arith.constant 0 : index
    %3 = vector.load %arg2[%c0_2, %c0_3] : memref<32x256xbf16, #tpu.memory_space<vmem>>, vector<32x256xbf16>
    %cst = arith.constant dense<0.000000e+00> : vector<1x256xf32>
    %4 = tpu.matmul %2, %3, %cst {dimension_numbers = #tpu.dot_dimension_numbers<[1], [0], [0], [1], [0, 0, 1, 1], [], []>} : vector<1x32xbf16>, vector<32x256xbf16>, vector<1x256xf32> -> vector<1x256xf32>
    %c0_4 = arith.constant 0 : index
    %c0_5 = arith.constant 0 : index
    %5 = vector.load %arg3[%c0_4, %c0_5] : memref<1x256xf32, #tpu.memory_space<vmem>>, vector<1x256xf32>
    %6 = arith.addf %4, %5 : vector<1x256xf32>
    %cst_6 = arith.constant 0.000000e+00 : f32
    %7 = vector.broadcast %cst_6 : f32 to vector<1x256xf32>
    %8 = arith.maximumf %6, %7 : vector<1x256xf32>
    %c0_7 = arith.constant 0 : index
    %c0_8 = arith.constant 0 : index
    %9 = vector.load %arg4[%c0_7, %c0_8] : memref<16x256xf32, #tpu.memory_space<vmem>>, vector<16x256xf32>
    %10 = vector.broadcast %8 : vector<1x256xf32> to vector<16x256xf32>
    %11 = arith.mulf %9, %10 : vector<16x256xf32>
    %12 = arith.truncf %11 : vector<16x256xf32> to vector<16x256xbf16>
    %c0_9 = arith.constant 0 : index
    %c0_10 = arith.constant 0 : index
    %13 = vector.load %arg5[%c0_9, %c0_10] : memref<256x16xbf16, #tpu.memory_space<vmem>>, vector<256x16xbf16>
    %cst_11 = arith.constant dense<0.000000e+00> : vector<16x16xf32>
    %14 = tpu.matmul %12, %13, %cst_11 {dimension_numbers = #tpu.dot_dimension_numbers<[1], [0], [0], [1], [0, 0, 1, 1], [], []>} : vector<16x256xbf16>, vector<256x16xbf16>, vector<16x16xf32> -> vector<16x16xf32>
    %c0_12 = arith.constant 0 : index
    %c0_13 = arith.constant 0 : index
    %c0_14 = arith.constant 0 : index
    %15 = vector.load %arg7[%c0_12, %c0_13, %c0_14] : memref<2x1x16xf32, #tpu.memory_space<vmem>>, vector<1x1x16xf32>
    %16 = vector.shape_cast %15 : vector<1x1x16xf32> to vector<1x16xf32>
    %c1 = arith.constant 1 : index
    %c0_15 = arith.constant 0 : index
    %c0_16 = arith.constant 0 : index
    %17 = vector.load %arg7[%c1, %c0_15, %c0_16] : memref<2x1x16xf32, #tpu.memory_space<vmem>>, vector<1x1x16xf32>
    %18 = vector.shape_cast %17 : vector<1x1x16xf32> to vector<1x16xf32>
    %19 = arith.truncf %14 : vector<16x16xf32> to vector<16x16xbf16>
    %cst_17 = arith.constant 0.000000e+00 : f32
    %20 = vector.broadcast %cst_17 : f32 to vector<16x1xf32>
    %21 = vector.extract_strided_slice %14 {offsets = [0, 1], sizes = [16, 15], strides = [1, 1]} : vector<16x16xf32> to vector<16x15xf32>
    %22 = tpu.concatenate %21, %20 in 1 : vector<16x15xf32>, vector<16x1xf32> -> vector<16x16xf32>
    %23 = vector.broadcast %16 : vector<1x16xf32> to vector<16x16xf32>
    %24 = arith.mulf %22, %23 : vector<16x16xf32>
    %25 = arith.truncf %24 : vector<16x16xf32> to vector<16x16xbf16>
    %cst_18 = arith.constant 0.000000e+00 : f32
    %26 = vector.broadcast %cst_18 : f32 to vector<16x4xf32>
    %27 = vector.extract_strided_slice %14 {offsets = [0, 4], sizes = [16, 12], strides = [1, 1]} : vector<16x16xf32> to vector<16x12xf32>
    %28 = tpu.concatenate %27, %26 in 1 : vector<16x12xf32>, vector<16x4xf32> -> vector<16x16xf32>
    %29 = vector.broadcast %18 : vector<1x16xf32> to vector<16x16xf32>
    %30 = arith.mulf %28, %29 : vector<16x16xf32>
    %31 = arith.truncf %30 : vector<16x16xf32> to vector<16x16xbf16>
    %cst_19 = arith.constant 0.000000e+00 : f32
    %32 = vector.broadcast %cst_19 : f32 to vector<16x5xf32>
    %33 = vector.extract_strided_slice %14 {offsets = [0, 5], sizes = [16, 11], strides = [1, 1]} : vector<16x16xf32> to vector<16x11xf32>
    %34 = tpu.concatenate %33, %32 in 1 : vector<16x11xf32>, vector<16x5xf32> -> vector<16x16xf32>
    %35 = arith.mulf %16, %18 : vector<1x16xf32>
    %36 = vector.broadcast %35 : vector<1x16xf32> to vector<16x16xf32>
    %37 = arith.mulf %34, %36 : vector<16x16xf32>
    %38 = arith.truncf %37 : vector<16x16xf32> to vector<16x16xbf16>
    %c0_20 = arith.constant 0 : index
    %c0_21 = arith.constant 0 : index
    %c0_22 = arith.constant 0 : index
    %39 = vector.load %arg6[%c0_20, %c0_21, %c0_22] : memref<4x64x16xbf16, #tpu.memory_space<vmem>>, vector<1x64x16xbf16>
    %40 = vector.shape_cast %39 : vector<1x64x16xbf16> to vector<64x16xbf16>
    %cst_23 = arith.constant dense<0.000000e+00> : vector<64x16xf32>
    %41 = tpu.matmul %40, %19, %cst_23 {dimension_numbers = #tpu.dot_dimension_numbers<[1], [0], [0], [1], [0, 0, 1, 1], [], []>} : vector<64x16xbf16>, vector<16x16xbf16>, vector<64x16xf32> -> vector<64x16xf32>
    %c1_24 = arith.constant 1 : index
    %c0_25 = arith.constant 0 : index
    %c0_26 = arith.constant 0 : index
    %42 = vector.load %arg6[%c1_24, %c0_25, %c0_26] : memref<4x64x16xbf16, #tpu.memory_space<vmem>>, vector<1x64x16xbf16>
    %43 = vector.shape_cast %42 : vector<1x64x16xbf16> to vector<64x16xbf16>
    %cst_27 = arith.constant dense<0.000000e+00> : vector<64x16xf32>
    %44 = tpu.matmul %43, %25, %cst_27 {dimension_numbers = #tpu.dot_dimension_numbers<[1], [0], [0], [1], [0, 0, 1, 1], [], []>} : vector<64x16xbf16>, vector<16x16xbf16>, vector<64x16xf32> -> vector<64x16xf32>
    %45 = arith.addf %41, %44 : vector<64x16xf32>
    %c2 = arith.constant 2 : index
    %c0_28 = arith.constant 0 : index
    %c0_29 = arith.constant 0 : index
    %46 = vector.load %arg6[%c2, %c0_28, %c0_29] : memref<4x64x16xbf16, #tpu.memory_space<vmem>>, vector<1x64x16xbf16>
    %47 = vector.shape_cast %46 : vector<1x64x16xbf16> to vector<64x16xbf16>
    %cst_30 = arith.constant dense<0.000000e+00> : vector<64x16xf32>
    %48 = tpu.matmul %47, %31, %cst_30 {dimension_numbers = #tpu.dot_dimension_numbers<[1], [0], [0], [1], [0, 0, 1, 1], [], []>} : vector<64x16xbf16>, vector<16x16xbf16>, vector<64x16xf32> -> vector<64x16xf32>
    %49 = arith.addf %45, %48 : vector<64x16xf32>
    %c3 = arith.constant 3 : index
    %c0_31 = arith.constant 0 : index
    %c0_32 = arith.constant 0 : index
    %50 = vector.load %arg6[%c3, %c0_31, %c0_32] : memref<4x64x16xbf16, #tpu.memory_space<vmem>>, vector<1x64x16xbf16>
    %51 = vector.shape_cast %50 : vector<1x64x16xbf16> to vector<64x16xbf16>
    %cst_33 = arith.constant dense<0.000000e+00> : vector<64x16xf32>
    %52 = tpu.matmul %51, %38, %cst_33 {dimension_numbers = #tpu.dot_dimension_numbers<[1], [0], [0], [1], [0, 0, 1, 1], [], []>} : vector<64x16xbf16>, vector<16x16xbf16>, vector<64x16xf32> -> vector<64x16xf32>
    %53 = arith.addf %49, %52 : vector<64x16xf32>
    %54 = vector.extract_strided_slice %53 {offsets = [0, 0], sizes = [16, 16], strides = [1, 1]} : vector<64x16xf32> to vector<16x16xf32>
    %55 = arith.truncf %54 : vector<16x16xf32> to vector<16x16xbf16>
    %c0_34 = arith.constant 0 : index
    %c0_35 = arith.constant 0 : index
    %c0_36 = arith.constant 0 : index
    %56 = vector.load %arg8[%c0_34, %c0_35, %c0_36] : memref<4x16x64xbf16, #tpu.memory_space<vmem>>, vector<1x16x64xbf16>
    %57 = vector.shape_cast %56 : vector<1x16x64xbf16> to vector<16x64xbf16>
    %cst_37 = arith.constant dense<0.000000e+00> : vector<16x64xf32>
    %58 = tpu.matmul %55, %57, %cst_37 {dimension_numbers = #tpu.dot_dimension_numbers<[1], [0], [0], [1], [0, 0, 1, 1], [], []>} : vector<16x16xbf16>, vector<16x64xbf16>, vector<16x64xf32> -> vector<16x64xf32>
    %59 = vector.extract_strided_slice %53 {offsets = [16, 0], sizes = [16, 16], strides = [1, 1]} : vector<64x16xf32> to vector<16x16xf32>
    %60 = arith.truncf %59 : vector<16x16xf32> to vector<16x16xbf16>
    %c1_38 = arith.constant 1 : index
    %c0_39 = arith.constant 0 : index
    %c0_40 = arith.constant 0 : index
    %61 = vector.load %arg8[%c1_38, %c0_39, %c0_40] : memref<4x16x64xbf16, #tpu.memory_space<vmem>>, vector<1x16x64xbf16>
    %62 = vector.shape_cast %61 : vector<1x16x64xbf16> to vector<16x64xbf16>
    %cst_41 = arith.constant dense<0.000000e+00> : vector<16x64xf32>
    %63 = tpu.matmul %60, %62, %cst_41 {dimension_numbers = #tpu.dot_dimension_numbers<[1], [0], [0], [1], [0, 0, 1, 1], [], []>} : vector<16x16xbf16>, vector<16x64xbf16>, vector<16x64xf32> -> vector<16x64xf32>
    %64 = arith.addf %58, %63 : vector<16x64xf32>
    %65 = vector.extract_strided_slice %53 {offsets = [32, 0], sizes = [16, 16], strides = [1, 1]} : vector<64x16xf32> to vector<16x16xf32>
    %66 = arith.truncf %65 : vector<16x16xf32> to vector<16x16xbf16>
    %c2_42 = arith.constant 2 : index
    %c0_43 = arith.constant 0 : index
    %c0_44 = arith.constant 0 : index
    %67 = vector.load %arg8[%c2_42, %c0_43, %c0_44] : memref<4x16x64xbf16, #tpu.memory_space<vmem>>, vector<1x16x64xbf16>
    %68 = vector.shape_cast %67 : vector<1x16x64xbf16> to vector<16x64xbf16>
    %cst_45 = arith.constant dense<0.000000e+00> : vector<16x64xf32>
    %69 = tpu.matmul %66, %68, %cst_45 {dimension_numbers = #tpu.dot_dimension_numbers<[1], [0], [0], [1], [0, 0, 1, 1], [], []>} : vector<16x16xbf16>, vector<16x64xbf16>, vector<16x64xf32> -> vector<16x64xf32>
    %70 = arith.addf %64, %69 : vector<16x64xf32>
    %71 = vector.extract_strided_slice %53 {offsets = [48, 0], sizes = [16, 16], strides = [1, 1]} : vector<64x16xf32> to vector<16x16xf32>
    %72 = arith.truncf %71 : vector<16x16xf32> to vector<16x16xbf16>
    %c3_46 = arith.constant 3 : index
    %c0_47 = arith.constant 0 : index
    %c0_48 = arith.constant 0 : index
    %73 = vector.load %arg8[%c3_46, %c0_47, %c0_48] : memref<4x16x64xbf16, #tpu.memory_space<vmem>>, vector<1x16x64xbf16>
    %74 = vector.shape_cast %73 : vector<1x16x64xbf16> to vector<16x64xbf16>
    %cst_49 = arith.constant dense<0.000000e+00> : vector<16x64xf32>
    %75 = tpu.matmul %72, %74, %cst_49 {dimension_numbers = #tpu.dot_dimension_numbers<[1], [0], [0], [1], [0, 0, 1, 1], [], []>} : vector<16x16xbf16>, vector<16x64xbf16>, vector<16x64xf32> -> vector<16x64xf32>
    %76 = arith.addf %70, %75 : vector<16x64xf32>
    %c0_50 = arith.constant 0 : index
    %c0_51 = arith.constant 0 : index
    %77 = vector.load %arg9[%c0_50, %c0_51] : memref<16x1xf32, #tpu.memory_space<vmem>>, vector<16x1xf32>
    %78 = vector.broadcast %77 : vector<16x1xf32> to vector<16x64xf32>
    %79 = arith.addf %76, %78 : vector<16x64xf32>
    %cst_52 = arith.constant 0.000000e+00 : f32
    %80 = vector.broadcast %cst_52 : f32 to vector<16x64xf32>
    %81 = arith.maximumf %79, %80 : vector<16x64xf32>
    %c0_53 = arith.constant 0 : index
    %c0_54 = arith.constant 0 : index
    %c0_55 = arith.constant 0 : index
    %82 = vector.load %arg11[%c0_53, %c0_54, %c0_55] : memref<2x1x64xf32, #tpu.memory_space<vmem>>, vector<1x1x64xf32>
    %83 = vector.shape_cast %82 : vector<1x1x64xf32> to vector<1x64xf32>
    %c1_56 = arith.constant 1 : index
    %c0_57 = arith.constant 0 : index
    %c0_58 = arith.constant 0 : index
    %84 = vector.load %arg11[%c1_56, %c0_57, %c0_58] : memref<2x1x64xf32, #tpu.memory_space<vmem>>, vector<1x1x64xf32>
    %85 = vector.shape_cast %84 : vector<1x1x64xf32> to vector<1x64xf32>
    %86 = arith.truncf %81 : vector<16x64xf32> to vector<16x64xbf16>
    %cst_59 = arith.constant 0.000000e+00 : f32
    %87 = vector.broadcast %cst_59 : f32 to vector<16x1xf32>
    %88 = vector.extract_strided_slice %81 {offsets = [0, 1], sizes = [16, 63], strides = [1, 1]} : vector<16x64xf32> to vector<16x63xf32>
    %89 = tpu.concatenate %88, %87 in 1 : vector<16x63xf32>, vector<16x1xf32> -> vector<16x64xf32>
    %90 = vector.broadcast %83 : vector<1x64xf32> to vector<16x64xf32>
    %91 = arith.mulf %89, %90 : vector<16x64xf32>
    %92 = arith.truncf %91 : vector<16x64xf32> to vector<16x64xbf16>
    %cst_60 = arith.constant 0.000000e+00 : f32
    %93 = vector.broadcast %cst_60 : f32 to vector<16x8xf32>
    %94 = vector.extract_strided_slice %81 {offsets = [0, 8], sizes = [16, 56], strides = [1, 1]} : vector<16x64xf32> to vector<16x56xf32>
    %95 = tpu.concatenate %94, %93 in 1 : vector<16x56xf32>, vector<16x8xf32> -> vector<16x64xf32>
    %96 = vector.broadcast %85 : vector<1x64xf32> to vector<16x64xf32>
    %97 = arith.mulf %95, %96 : vector<16x64xf32>
    %98 = arith.truncf %97 : vector<16x64xf32> to vector<16x64xbf16>
    %cst_61 = arith.constant 0.000000e+00 : f32
    %99 = vector.broadcast %cst_61 : f32 to vector<16x9xf32>
    %100 = vector.extract_strided_slice %81 {offsets = [0, 9], sizes = [16, 55], strides = [1, 1]} : vector<16x64xf32> to vector<16x55xf32>
    %101 = tpu.concatenate %100, %99 in 1 : vector<16x55xf32>, vector<16x9xf32> -> vector<16x64xf32>
    %102 = arith.mulf %83, %85 : vector<1x64xf32>
    %103 = vector.broadcast %102 : vector<1x64xf32> to vector<16x64xf32>
    %104 = arith.mulf %101, %103 : vector<16x64xf32>
    %105 = arith.truncf %104 : vector<16x64xf32> to vector<16x64xbf16>
    %c0_62 = arith.constant 0 : index
    %c0_63 = arith.constant 0 : index
    %c0_64 = arith.constant 0 : index
    %106 = vector.load %arg10[%c0_62, %c0_63, %c0_64] : memref<4x32x16xbf16, #tpu.memory_space<vmem>>, vector<1x32x16xbf16>
    %107 = vector.shape_cast %106 : vector<1x32x16xbf16> to vector<32x16xbf16>
    %cst_65 = arith.constant dense<0.000000e+00> : vector<32x64xf32>
    %108 = tpu.matmul %107, %86, %cst_65 {dimension_numbers = #tpu.dot_dimension_numbers<[1], [0], [0], [1], [0, 0, 1, 1], [], []>} : vector<32x16xbf16>, vector<16x64xbf16>, vector<32x64xf32> -> vector<32x64xf32>
    %c1_66 = arith.constant 1 : index
    %c0_67 = arith.constant 0 : index
    %c0_68 = arith.constant 0 : index
    %109 = vector.load %arg10[%c1_66, %c0_67, %c0_68] : memref<4x32x16xbf16, #tpu.memory_space<vmem>>, vector<1x32x16xbf16>
    %110 = vector.shape_cast %109 : vector<1x32x16xbf16> to vector<32x16xbf16>
    %cst_69 = arith.constant dense<0.000000e+00> : vector<32x64xf32>
    %111 = tpu.matmul %110, %92, %cst_69 {dimension_numbers = #tpu.dot_dimension_numbers<[1], [0], [0], [1], [0, 0, 1, 1], [], []>} : vector<32x16xbf16>, vector<16x64xbf16>, vector<32x64xf32> -> vector<32x64xf32>
    %112 = arith.addf %108, %111 : vector<32x64xf32>
    %c2_70 = arith.constant 2 : index
    %c0_71 = arith.constant 0 : index
    %c0_72 = arith.constant 0 : index
    %113 = vector.load %arg10[%c2_70, %c0_71, %c0_72] : memref<4x32x16xbf16, #tpu.memory_space<vmem>>, vector<1x32x16xbf16>
    %114 = vector.shape_cast %113 : vector<1x32x16xbf16> to vector<32x16xbf16>
    %cst_73 = arith.constant dense<0.000000e+00> : vector<32x64xf32>
    %115 = tpu.matmul %114, %98, %cst_73 {dimension_numbers = #tpu.dot_dimension_numbers<[1], [0], [0], [1], [0, 0, 1, 1], [], []>} : vector<32x16xbf16>, vector<16x64xbf16>, vector<32x64xf32> -> vector<32x64xf32>
    %116 = arith.addf %112, %115 : vector<32x64xf32>
    %c3_74 = arith.constant 3 : index
    %c0_75 = arith.constant 0 : index
    %c0_76 = arith.constant 0 : index
    %117 = vector.load %arg10[%c3_74, %c0_75, %c0_76] : memref<4x32x16xbf16, #tpu.memory_space<vmem>>, vector<1x32x16xbf16>
    %118 = vector.shape_cast %117 : vector<1x32x16xbf16> to vector<32x16xbf16>
    %cst_77 = arith.constant dense<0.000000e+00> : vector<32x64xf32>
    %119 = tpu.matmul %118, %105, %cst_77 {dimension_numbers = #tpu.dot_dimension_numbers<[1], [0], [0], [1], [0, 0, 1, 1], [], []>} : vector<32x16xbf16>, vector<16x64xbf16>, vector<32x64xf32> -> vector<32x64xf32>
    %120 = arith.addf %116, %119 : vector<32x64xf32>
    %121 = vector.extract_strided_slice %120 {offsets = [0, 0], sizes = [8, 64], strides = [1, 1]} : vector<32x64xf32> to vector<8x64xf32>
    %122 = arith.truncf %121 : vector<8x64xf32> to vector<8x64xbf16>
    %c0_78 = arith.constant 0 : index
    %c0_79 = arith.constant 0 : index
    %c0_80 = arith.constant 0 : index
    %123 = vector.load %arg12[%c0_78, %c0_79, %c0_80] : memref<4x64x256xbf16, #tpu.memory_space<vmem>>, vector<1x64x256xbf16>
    %124 = vector.shape_cast %123 : vector<1x64x256xbf16> to vector<64x256xbf16>
    %cst_81 = arith.constant dense<0.000000e+00> : vector<8x256xf32>
    %125 = tpu.matmul %122, %124, %cst_81 {dimension_numbers = #tpu.dot_dimension_numbers<[1], [0], [0], [1], [0, 0, 1, 1], [], []>} : vector<8x64xbf16>, vector<64x256xbf16>, vector<8x256xf32> -> vector<8x256xf32>
    %126 = vector.extract_strided_slice %120 {offsets = [8, 0], sizes = [8, 64], strides = [1, 1]} : vector<32x64xf32> to vector<8x64xf32>
    %127 = arith.truncf %126 : vector<8x64xf32> to vector<8x64xbf16>
    %c1_82 = arith.constant 1 : index
    %c0_83 = arith.constant 0 : index
    %c0_84 = arith.constant 0 : index
    %128 = vector.load %arg12[%c1_82, %c0_83, %c0_84] : memref<4x64x256xbf16, #tpu.memory_space<vmem>>, vector<1x64x256xbf16>
    %129 = vector.shape_cast %128 : vector<1x64x256xbf16> to vector<64x256xbf16>
    %cst_85 = arith.constant dense<0.000000e+00> : vector<8x256xf32>
    %130 = tpu.matmul %127, %129, %cst_85 {dimension_numbers = #tpu.dot_dimension_numbers<[1], [0], [0], [1], [0, 0, 1, 1], [], []>} : vector<8x64xbf16>, vector<64x256xbf16>, vector<8x256xf32> -> vector<8x256xf32>
    %131 = arith.addf %125, %130 : vector<8x256xf32>
    %132 = vector.extract_strided_slice %120 {offsets = [16, 0], sizes = [8, 64], strides = [1, 1]} : vector<32x64xf32> to vector<8x64xf32>
    %133 = arith.truncf %132 : vector<8x64xf32> to vector<8x64xbf16>
    %c2_86 = arith.constant 2 : index
    %c0_87 = arith.constant 0 : index
    %c0_88 = arith.constant 0 : index
    %134 = vector.load %arg12[%c2_86, %c0_87, %c0_88] : memref<4x64x256xbf16, #tpu.memory_space<vmem>>, vector<1x64x256xbf16>
    %135 = vector.shape_cast %134 : vector<1x64x256xbf16> to vector<64x256xbf16>
    %cst_89 = arith.constant dense<0.000000e+00> : vector<8x256xf32>
    %136 = tpu.matmul %133, %135, %cst_89 {dimension_numbers = #tpu.dot_dimension_numbers<[1], [0], [0], [1], [0, 0, 1, 1], [], []>} : vector<8x64xbf16>, vector<64x256xbf16>, vector<8x256xf32> -> vector<8x256xf32>
    %137 = arith.addf %131, %136 : vector<8x256xf32>
    %138 = vector.extract_strided_slice %120 {offsets = [24, 0], sizes = [8, 64], strides = [1, 1]} : vector<32x64xf32> to vector<8x64xf32>
    %139 = arith.truncf %138 : vector<8x64xf32> to vector<8x64xbf16>
    %c3_90 = arith.constant 3 : index
    %c0_91 = arith.constant 0 : index
    %c0_92 = arith.constant 0 : index
    %140 = vector.load %arg12[%c3_90, %c0_91, %c0_92] : memref<4x64x256xbf16, #tpu.memory_space<vmem>>, vector<1x64x256xbf16>
    %141 = vector.shape_cast %140 : vector<1x64x256xbf16> to vector<64x256xbf16>
    %cst_93 = arith.constant dense<0.000000e+00> : vector<8x256xf32>
    %142 = tpu.matmul %139, %141, %cst_93 {dimension_numbers = #tpu.dot_dimension_numbers<[1], [0], [0], [1], [0, 0, 1, 1], [], []>} : vector<8x64xbf16>, vector<64x256xbf16>, vector<8x256xf32> -> vector<8x256xf32>
    %143 = arith.addf %137, %142 : vector<8x256xf32>
    %c0_94 = arith.constant 0 : index
    %c0_95 = arith.constant 0 : index
    %144 = vector.load %arg13[%c0_94, %c0_95] : memref<8x1xf32, #tpu.memory_space<vmem>>, vector<8x1xf32>
    %145 = vector.broadcast %144 : vector<8x1xf32> to vector<8x256xf32>
    %146 = arith.addf %143, %145 : vector<8x256xf32>
    %cst_96 = arith.constant 0.000000e+00 : f32
    %147 = vector.broadcast %cst_96 : f32 to vector<8x256xf32>
    %148 = arith.maximumf %146, %147 : vector<8x256xf32>
    %cst_97 = arith.constant 0.000000e+00 : f32
    %149 = vector.broadcast %cst_97 : f32 to vector<8x256xf32>
    %c17_i32 = arith.constant 17 : i32
    %150 = tpu.dynamic_rotate %148 by %c17_i32 dim 1 : vector<8x256xf32>, i32 -> vector<8x256xf32>
    %c0_98 = arith.constant 0 : index
    %c0_99 = arith.constant 0 : index
    %c0_100 = arith.constant 0 : index
    %151 = vector.load %arg15[%c0_98, %c0_99, %c0_100] : memref<9x1x256xf32, #tpu.memory_space<vmem>>, vector<1x1x256xf32>
    %152 = vector.shape_cast %151 : vector<1x1x256xf32> to vector<1x256xf32>
    %153 = vector.broadcast %152 : vector<1x256xf32> to vector<8x256xf32>
    %154 = arith.mulf %150, %153 : vector<8x256xf32>
    %155 = arith.truncf %154 : vector<8x256xf32> to vector<8x256xbf16>
    %c0_101 = arith.constant 0 : index
    %c0_102 = arith.constant 0 : index
    %c0_103 = arith.constant 0 : index
    %156 = vector.load %arg14[%c0_101, %c0_102, %c0_103] : memref<9x8x8xbf16, #tpu.memory_space<vmem>>, vector<1x8x8xbf16>
    %157 = vector.shape_cast %156 : vector<1x8x8xbf16> to vector<8x8xbf16>
    %cst_104 = arith.constant dense<0.000000e+00> : vector<8x256xf32>
    %158 = tpu.matmul %157, %155, %cst_104 {dimension_numbers = #tpu.dot_dimension_numbers<[1], [0], [0], [1], [0, 0, 1, 1], [], []>} : vector<8x8xbf16>, vector<8x256xbf16>, vector<8x256xf32> -> vector<8x256xf32>
    %159 = arith.addf %149, %158 : vector<8x256xf32>
    %c16_i32 = arith.constant 16 : i32
    %160 = tpu.dynamic_rotate %148 by %c16_i32 dim 1 : vector<8x256xf32>, i32 -> vector<8x256xf32>
    %c1_105 = arith.constant 1 : index
    %c0_106 = arith.constant 0 : index
    %c0_107 = arith.constant 0 : index
    %161 = vector.load %arg15[%c1_105, %c0_106, %c0_107] : memref<9x1x256xf32, #tpu.memory_space<vmem>>, vector<1x1x256xf32>
    %162 = vector.shape_cast %161 : vector<1x1x256xf32> to vector<1x256xf32>
    %163 = vector.broadcast %162 : vector<1x256xf32> to vector<8x256xf32>
    %164 = arith.mulf %160, %163 : vector<8x256xf32>
    %165 = arith.truncf %164 : vector<8x256xf32> to vector<8x256xbf16>
    %c1_108 = arith.constant 1 : index
    %c0_109 = arith.constant 0 : index
    %c0_110 = arith.constant 0 : index
    %166 = vector.load %arg14[%c1_108, %c0_109, %c0_110] : memref<9x8x8xbf16, #tpu.memory_space<vmem>>, vector<1x8x8xbf16>
    %167 = vector.shape_cast %166 : vector<1x8x8xbf16> to vector<8x8xbf16>
    %cst_111 = arith.constant dense<0.000000e+00> : vector<8x256xf32>
    %168 = tpu.matmul %167, %165, %cst_111 {dimension_numbers = #tpu.dot_dimension_numbers<[1], [0], [0], [1], [0, 0, 1, 1], [], []>} : vector<8x8xbf16>, vector<8x256xbf16>, vector<8x256xf32> -> vector<8x256xf32>
    %169 = arith.addf %159, %168 : vector<8x256xf32>
    %c15_i32 = arith.constant 15 : i32
    %170 = tpu.dynamic_rotate %148 by %c15_i32 dim 1 : vector<8x256xf32>, i32 -> vector<8x256xf32>
    %c2_112 = arith.constant 2 : index
    %c0_113 = arith.constant 0 : index
    %c0_114 = arith.constant 0 : index
    %171 = vector.load %arg15[%c2_112, %c0_113, %c0_114] : memref<9x1x256xf32, #tpu.memory_space<vmem>>, vector<1x1x256xf32>
    %172 = vector.shape_cast %171 : vector<1x1x256xf32> to vector<1x256xf32>
    %173 = vector.broadcast %172 : vector<1x256xf32> to vector<8x256xf32>
    %174 = arith.mulf %170, %173 : vector<8x256xf32>
    %175 = arith.truncf %174 : vector<8x256xf32> to vector<8x256xbf16>
    %c2_115 = arith.constant 2 : index
    %c0_116 = arith.constant 0 : index
    %c0_117 = arith.constant 0 : index
    %176 = vector.load %arg14[%c2_115, %c0_116, %c0_117] : memref<9x8x8xbf16, #tpu.memory_space<vmem>>, vector<1x8x8xbf16>
    %177 = vector.shape_cast %176 : vector<1x8x8xbf16> to vector<8x8xbf16>
    %cst_118 = arith.constant dense<0.000000e+00> : vector<8x256xf32>
    %178 = tpu.matmul %177, %175, %cst_118 {dimension_numbers = #tpu.dot_dimension_numbers<[1], [0], [0], [1], [0, 0, 1, 1], [], []>} : vector<8x8xbf16>, vector<8x256xbf16>, vector<8x256xf32> -> vector<8x256xf32>
    %179 = arith.addf %169, %178 : vector<8x256xf32>
    %c1_i32 = arith.constant 1 : i32
    %180 = tpu.dynamic_rotate %148 by %c1_i32 dim 1 : vector<8x256xf32>, i32 -> vector<8x256xf32>
    %c3_119 = arith.constant 3 : index
    %c0_120 = arith.constant 0 : index
    %c0_121 = arith.constant 0 : index
    %181 = vector.load %arg15[%c3_119, %c0_120, %c0_121] : memref<9x1x256xf32, #tpu.memory_space<vmem>>, vector<1x1x256xf32>
    %182 = vector.shape_cast %181 : vector<1x1x256xf32> to vector<1x256xf32>
    %183 = vector.broadcast %182 : vector<1x256xf32> to vector<8x256xf32>
    %184 = arith.mulf %180, %183 : vector<8x256xf32>
    %185 = arith.truncf %184 : vector<8x256xf32> to vector<8x256xbf16>
    %c3_122 = arith.constant 3 : index
    %c0_123 = arith.constant 0 : index
    %c0_124 = arith.constant 0 : index
    %186 = vector.load %arg14[%c3_122, %c0_123, %c0_124] : memref<9x8x8xbf16, #tpu.memory_space<vmem>>, vector<1x8x8xbf16>
    %187 = vector.shape_cast %186 : vector<1x8x8xbf16> to vector<8x8xbf16>
    %cst_125 = arith.constant dense<0.000000e+00> : vector<8x256xf32>
    %188 = tpu.matmul %187, %185, %cst_125 {dimension_numbers = #tpu.dot_dimension_numbers<[1], [0], [0], [1], [0, 0, 1, 1], [], []>} : vector<8x8xbf16>, vector<8x256xbf16>, vector<8x256xf32> -> vector<8x256xf32>
    %189 = arith.addf %179, %188 : vector<8x256xf32>
    %190 = arith.truncf %148 : vector<8x256xf32> to vector<8x256xbf16>
    %c4 = arith.constant 4 : index
    %c0_126 = arith.constant 0 : index
    %c0_127 = arith.constant 0 : index
    %191 = vector.load %arg14[%c4, %c0_126, %c0_127] : memref<9x8x8xbf16, #tpu.memory_space<vmem>>, vector<1x8x8xbf16>
    %192 = vector.shape_cast %191 : vector<1x8x8xbf16> to vector<8x8xbf16>
    %cst_128 = arith.constant dense<0.000000e+00> : vector<8x256xf32>
    %193 = tpu.matmul %192, %190, %cst_128 {dimension_numbers = #tpu.dot_dimension_numbers<[1], [0], [0], [1], [0, 0, 1, 1], [], []>} : vector<8x8xbf16>, vector<8x256xbf16>, vector<8x256xf32> -> vector<8x256xf32>
    %194 = arith.addf %189, %193 : vector<8x256xf32>
    %c255_i32 = arith.constant 255 : i32
    %195 = tpu.dynamic_rotate %148 by %c255_i32 dim 1 : vector<8x256xf32>, i32 -> vector<8x256xf32>
    %c5 = arith.constant 5 : index
    %c0_129 = arith.constant 0 : index
    %c0_130 = arith.constant 0 : index
    %196 = vector.load %arg15[%c5, %c0_129, %c0_130] : memref<9x1x256xf32, #tpu.memory_space<vmem>>, vector<1x1x256xf32>
    %197 = vector.shape_cast %196 : vector<1x1x256xf32> to vector<1x256xf32>
    %198 = vector.broadcast %197 : vector<1x256xf32> to vector<8x256xf32>
    %199 = arith.mulf %195, %198 : vector<8x256xf32>
    %200 = arith.truncf %199 : vector<8x256xf32> to vector<8x256xbf16>
    %c5_131 = arith.constant 5 : index
    %c0_132 = arith.constant 0 : index
    %c0_133 = arith.constant 0 : index
    %201 = vector.load %arg14[%c5_131, %c0_132, %c0_133] : memref<9x8x8xbf16, #tpu.memory_space<vmem>>, vector<1x8x8xbf16>
    %202 = vector.shape_cast %201 : vector<1x8x8xbf16> to vector<8x8xbf16>
    %cst_134 = arith.constant dense<0.000000e+00> : vector<8x256xf32>
    %203 = tpu.matmul %202, %200, %cst_134 {dimension_numbers = #tpu.dot_dimension_numbers<[1], [0], [0], [1], [0, 0, 1, 1], [], []>} : vector<8x8xbf16>, vector<8x256xbf16>, vector<8x256xf32> -> vector<8x256xf32>
    %204 = arith.addf %194, %203 : vector<8x256xf32>
    %c241_i32 = arith.constant 241 : i32
    %205 = tpu.dynamic_rotate %148 by %c241_i32 dim 1 : vector<8x256xf32>, i32 -> vector<8x256xf32>
    %c6 = arith.constant 6 : index
    %c0_135 = arith.constant 0 : index
    %c0_136 = arith.constant 0 : index
    %206 = vector.load %arg15[%c6, %c0_135, %c0_136] : memref<9x1x256xf32, #tpu.memory_space<vmem>>, vector<1x1x256xf32>
    %207 = vector.shape_cast %206 : vector<1x1x256xf32> to vector<1x256xf32>
    %208 = vector.broadcast %207 : vector<1x256xf32> to vector<8x256xf32>
    %209 = arith.mulf %205, %208 : vector<8x256xf32>
    %210 = arith.truncf %209 : vector<8x256xf32> to vector<8x256xbf16>
    %c6_137 = arith.constant 6 : index
    %c0_138 = arith.constant 0 : index
    %c0_139 = arith.constant 0 : index
    %211 = vector.load %arg14[%c6_137, %c0_138, %c0_139] : memref<9x8x8xbf16, #tpu.memory_space<vmem>>, vector<1x8x8xbf16>
    %212 = vector.shape_cast %211 : vector<1x8x8xbf16> to vector<8x8xbf16>
    %cst_140 = arith.constant dense<0.000000e+00> : vector<8x256xf32>
    %213 = tpu.matmul %212, %210, %cst_140 {dimension_numbers = #tpu.dot_dimension_numbers<[1], [0], [0], [1], [0, 0, 1, 1], [], []>} : vector<8x8xbf16>, vector<8x256xbf16>, vector<8x256xf32> -> vector<8x256xf32>
    %214 = arith.addf %204, %213 : vector<8x256xf32>
    %c240_i32 = arith.constant 240 : i32
    %215 = tpu.dynamic_rotate %148 by %c240_i32 dim 1 : vector<8x256xf32>, i32 -> vector<8x256xf32>
    %c7 = arith.constant 7 : index
    %c0_141 = arith.constant 0 : index
    %c0_142 = arith.constant 0 : index
    %216 = vector.load %arg15[%c7, %c0_141, %c0_142] : memref<9x1x256xf32, #tpu.memory_space<vmem>>, vector<1x1x256xf32>
    %217 = vector.shape_cast %216 : vector<1x1x256xf32> to vector<1x256xf32>
    %218 = vector.broadcast %217 : vector<1x256xf32> to vector<8x256xf32>
    %219 = arith.mulf %215, %218 : vector<8x256xf32>
    %220 = arith.truncf %219 : vector<8x256xf32> to vector<8x256xbf16>
    %c7_143 = arith.constant 7 : index
    %c0_144 = arith.constant 0 : index
    %c0_145 = arith.constant 0 : index
    %221 = vector.load %arg14[%c7_143, %c0_144, %c0_145] : memref<9x8x8xbf16, #tpu.memory_space<vmem>>, vector<1x8x8xbf16>
    %222 = vector.shape_cast %221 : vector<1x8x8xbf16> to vector<8x8xbf16>
    %cst_146 = arith.constant dense<0.000000e+00> : vector<8x256xf32>
    %223 = tpu.matmul %222, %220, %cst_146 {dimension_numbers = #tpu.dot_dimension_numbers<[1], [0], [0], [1], [0, 0, 1, 1], [], []>} : vector<8x8xbf16>, vector<8x256xbf16>, vector<8x256xf32> -> vector<8x256xf32>
    %224 = arith.addf %214, %223 : vector<8x256xf32>
    %c239_i32 = arith.constant 239 : i32
    %225 = tpu.dynamic_rotate %148 by %c239_i32 dim 1 : vector<8x256xf32>, i32 -> vector<8x256xf32>
    %c8 = arith.constant 8 : index
    %c0_147 = arith.constant 0 : index
    %c0_148 = arith.constant 0 : index
    %226 = vector.load %arg15[%c8, %c0_147, %c0_148] : memref<9x1x256xf32, #tpu.memory_space<vmem>>, vector<1x1x256xf32>
    %227 = vector.shape_cast %226 : vector<1x1x256xf32> to vector<1x256xf32>
    %228 = vector.broadcast %227 : vector<1x256xf32> to vector<8x256xf32>
    %229 = arith.mulf %225, %228 : vector<8x256xf32>
    %230 = arith.truncf %229 : vector<8x256xf32> to vector<8x256xbf16>
    %c8_149 = arith.constant 8 : index
    %c0_150 = arith.constant 0 : index
    %c0_151 = arith.constant 0 : index
    %231 = vector.load %arg14[%c8_149, %c0_150, %c0_151] : memref<9x8x8xbf16, #tpu.memory_space<vmem>>, vector<1x8x8xbf16>
    %232 = vector.shape_cast %231 : vector<1x8x8xbf16> to vector<8x8xbf16>
    %cst_152 = arith.constant dense<0.000000e+00> : vector<8x256xf32>
    %233 = tpu.matmul %232, %230, %cst_152 {dimension_numbers = #tpu.dot_dimension_numbers<[1], [0], [0], [1], [0, 0, 1, 1], [], []>} : vector<8x8xbf16>, vector<8x256xbf16>, vector<8x256xf32> -> vector<8x256xf32>
    %234 = arith.addf %224, %233 : vector<8x256xf32>
    %c0_153 = arith.constant 0 : index
    %c0_154 = arith.constant 0 : index
    %235 = vector.load %arg16[%c0_153, %c0_154] : memref<8x1xf32, #tpu.memory_space<vmem>>, vector<8x1xf32>
    %236 = vector.broadcast %235 : vector<8x1xf32> to vector<8x256xf32>
    %237 = arith.addf %234, %236 : vector<8x256xf32>
    %238 = arith.negf %237 : vector<8x256xf32>
    %239 = math.exp %238 : vector<8x256xf32>
    %cst_155 = arith.constant 1.000000e+00 : f32
    %240 = vector.broadcast %cst_155 : f32 to vector<8x256xf32>
    %241 = arith.addf %240, %239 : vector<8x256xf32>
    %242 = arith.divf %240, %241 : vector<8x256xf32>
    %c0_156 = arith.constant 0 : index
    %c0_157 = arith.constant 0 : index
    %c0_158 = arith.constant 0 : index
    %243 = vector.load %arg17[%c0_156, %c0_157, %c0_158] : memref<1x8x256xf32, #tpu.memory_space<vmem>>, vector<1x8x256xf32>
    %244 = vector.shape_cast %243 : vector<1x8x256xf32> to vector<8x256xf32>
    %245 = vector.shape_cast %242 : vector<8x256xf32> to vector<1x8x256xf32>
    tpu.vector_store %arg17[%c0_156, %c0_157, %c0_158], %245 {strides = array<i32>} : memref<1x8x256xf32, #tpu.memory_space<vmem>>, vector<1x8x256xf32>,
    return
  }
  func.func @transform_0(%arg0: i32) -> (i32, i32, i32) {
    %c0_i32 = arith.constant 0 : i32
    %c0_i32_0 = arith.constant 0 : i32
    %c0_i32_1 = arith.constant 0 : i32
    return %arg0, %c0_i32, %c0_i32_0 : i32, i32, i32
  }
  func.func @transform_1(%arg0: i32) -> (i32, i32) {
    %c0_i32 = arith.constant 0 : i32
    %c0_i32_0 = arith.constant 0 : i32
    %c0_i32_1 = arith.constant 0 : i32
    return %c0_i32, %c0_i32_0 : i32, i32
  }
  func.func @transform_2(%arg0: i32) -> (i32, i32) {
    %c0_i32 = arith.constant 0 : i32
    %c0_i32_0 = arith.constant 0 : i32
    %c0_i32_1 = arith.constant 0 : i32
    return %c0_i32, %c0_i32_0 : i32, i32
  }
  func.func @transform_3(%arg0: i32) -> (i32, i32) {
    %c0_i32 = arith.constant 0 : i32
    %c0_i32_0 = arith.constant 0 : i32
    %c0_i32_1 = arith.constant 0 : i32
    return %c0_i32, %c0_i32_0 : i32, i32
  }
  func.func @transform_4(%arg0: i32) -> (i32, i32) {
    %c0_i32 = arith.constant 0 : i32
    %c0_i32_0 = arith.constant 0 : i32
    %c0_i32_1 = arith.constant 0 : i32
    return %c0_i32, %c0_i32_0 : i32, i32
  }
  func.func @transform_5(%arg0: i32) -> (i32, i32, i32) {
    %c0_i32 = arith.constant 0 : i32
    %c0_i32_0 = arith.constant 0 : i32
    %c0_i32_1 = arith.constant 0 : i32
    %c0_i32_2 = arith.constant 0 : i32
    return %c0_i32, %c0_i32_0, %c0_i32_1 : i32, i32, i32
  }
  func.func @transform_6(%arg0: i32) -> (i32, i32, i32) {
    %c0_i32 = arith.constant 0 : i32
    %c0_i32_0 = arith.constant 0 : i32
    %c0_i32_1 = arith.constant 0 : i32
    %c0_i32_2 = arith.constant 0 : i32
    return %c0_i32, %c0_i32_0, %c0_i32_1 : i32, i32, i32
  }
  func.func @transform_7(%arg0: i32) -> (i32, i32, i32) {
    %c0_i32 = arith.constant 0 : i32
    %c0_i32_0 = arith.constant 0 : i32
    %c0_i32_1 = arith.constant 0 : i32
    %c0_i32_2 = arith.constant 0 : i32
    return %c0_i32, %c0_i32_0, %c0_i32_1 : i32, i32, i32
  }
  func.func @transform_8(%arg0: i32) -> (i32, i32) {
    %c0_i32 = arith.constant 0 : i32
    %c0_i32_0 = arith.constant 0 : i32
    %c0_i32_1 = arith.constant 0 : i32
    return %c0_i32, %c0_i32_0 : i32, i32
  }
  func.func @transform_9(%arg0: i32) -> (i32, i32, i32) {
    %c0_i32 = arith.constant 0 : i32
    %c0_i32_0 = arith.constant 0 : i32
    %c0_i32_1 = arith.constant 0 : i32
    %c0_i32_2 = arith.constant 0 : i32
    return %c0_i32, %c0_i32_0, %c0_i32_1 : i32, i32, i32
  }
  func.func @transform_10(%arg0: i32) -> (i32, i32, i32) {
    %c0_i32 = arith.constant 0 : i32
    %c0_i32_0 = arith.constant 0 : i32
    %c0_i32_1 = arith.constant 0 : i32
    %c0_i32_2 = arith.constant 0 : i32
    return %c0_i32, %c0_i32_0, %c0_i32_1 : i32, i32, i32
  }
  func.func @transform_11(%arg0: i32) -> (i32, i32, i32) {
    %c0_i32 = arith.constant 0 : i32
    %c0_i32_0 = arith.constant 0 : i32
    %c0_i32_1 = arith.constant 0 : i32
    %c0_i32_2 = arith.constant 0 : i32
    return %c0_i32, %c0_i32_0, %c0_i32_1 : i32, i32, i32
  }
  func.func @transform_12(%arg0: i32) -> (i32, i32) {
    %c0_i32 = arith.constant 0 : i32
    %c0_i32_0 = arith.constant 0 : i32
    %c0_i32_1 = arith.constant 0 : i32
    return %c0_i32, %c0_i32_0 : i32, i32
  }
  func.func @transform_13(%arg0: i32) -> (i32, i32, i32) {
    %c0_i32 = arith.constant 0 : i32
    %c0_i32_0 = arith.constant 0 : i32
    %c0_i32_1 = arith.constant 0 : i32
    %c0_i32_2 = arith.constant 0 : i32
    return %c0_i32, %c0_i32_0, %c0_i32_1 : i32, i32, i32
  }
  func.func @transform_14(%arg0: i32) -> (i32, i32, i32) {
    %c0_i32 = arith.constant 0 : i32
    %c0_i32_0 = arith.constant 0 : i32
    %c0_i32_1 = arith.constant 0 : i32
    %c0_i32_2 = arith.constant 0 : i32
    return %c0_i32, %c0_i32_0, %c0_i32_1 : i32, i32, i32
  }
  func.func @transform_15(%arg0: i32) -> (i32, i32) {
    %c0_i32 = arith.constant 0 : i32
    %c0_i32_0 = arith.constant 0 : i32
    %c0_i32_1 = arith.constant 0 : i32
    return %c0_i32, %c0_i32_0 : i32, i32
  }
  func.func @transform_16(%arg0: i32) -> (i32, i32, i32) {
    %c0_i32 = arith.constant 0 : i32
    %c0_i32_0 = arith.constant 0 : i32
    %c0_i32_1 = arith.constant 0 : i32
    return %arg0, %c0_i32, %c0_i32_0 : i32, i32, i32
  }
}

</mosaic_0001>

<llo_original>
// kernel: tpu_custom_call.1
$region0: #{tpu_custom_call.1}
  #allocation0 [shape = 'u32[]', space=smem, size = 0x4, offset = 0x4, fixed_abs, tag = 'smem constant byte address 0x4 - core index']
  #allocation1 [shape = 'u32[144,128]{1,0:T(1,128)}', space=vmem, size = 0x12000, scoped, tag = 'internal scratch']
  %s0 = inlined_call_operand.vmem [shape: f32[2,1,32], index: 0, kind: input, shape index: {}]
  %s1 = inlined_call_operand.vmem [shape: bf16[32,256], index: 1, kind: input, shape index: {}]
  %s2 = inlined_call_operand.vmem [shape: f32[1,256], index: 2, kind: input, shape index: {}]
  %s3 = inlined_call_operand.vmem [shape: f32[16,256], index: 3, kind: input, shape index: {}]
  %s4 = inlined_call_operand.vmem [shape: bf16[256,16], index: 4, kind: input, shape index: {}]
  %s5 = inlined_call_operand.vmem [shape: bf16[4,64,16], index: 5, kind: input, shape index: {}]
  %s6 = inlined_call_operand.vmem [shape: f32[2,1,16], index: 6, kind: input, shape index: {}]
  %s7 = inlined_call_operand.vmem [shape: bf16[4,16,64], index: 7, kind: input, shape index: {}]
  %s8 = inlined_call_operand.vmem [shape: f32[16,1], index: 8, kind: input, shape index: {}]
  %s9 = inlined_call_operand.vmem [shape: bf16[4,32,16], index: 9, kind: input, shape index: {}]
  %s10 = inlined_call_operand.vmem [shape: f32[2,1,64], index: 10, kind: input, shape index: {}]
  %s11 = inlined_call_operand.vmem [shape: bf16[4,64,256], index: 11, kind: input, shape index: {}]
  %s12 = inlined_call_operand.vmem [shape: f32[8,1], index: 12, kind: input, shape index: {}]
  %s13 = inlined_call_operand.vmem [shape: bf16[9,8,8], index: 13, kind: input, shape index: {}]
  %s14 = inlined_call_operand.vmem [shape: f32[9,1,256], index: 14, kind: input, shape index: {}]
  %s15 = inlined_call_operand.vmem [shape: f32[8,1], index: 15, kind: input, shape index: {}]
  %s16 = inlined_call_operand.hbm [shape: f32[2,8,256], index: 16, kind: output, shape index: {}]
  %s17 = sld [smem:[#allocation0]]
  $region97: #{tpu_custom_call.1} parent=0
    _
  %s19 = ssub.s32 1, %s17
  %s20 = scalar_select 0, %s19, %s17
  $region1: #{tpu_custom_call.1} parent=0
    #allocation2 [shape = 'u8[16384]{0}', space=vmem, size = 0x4000, scoped, tag = 'output window, operand 0']
    #allocation3 [shape = 's32[2]{0}', space=sflag, size = 0x8, scoped, tag = 'scoped memory for tpu_custom_call.1']
    %21 = vsyncpa [#allocation3], 0
    %s22 = scalar_lea.sflag [#allocation3], 1
    %23 = vsyncpa %s22, 0
    loop: start=0, step=1, limit=4
    $region2: #{tpu_custom_call.1} parent=1 // loop_pre_header
      _
    $region3: #{tpu_custom_call.1} parent=1 // loop_header
      %s25 = sphi 0, %s29
      %p26 = scmp.ge.s32.totalorder %s25, 4
      %s35 = sphi 0, %s37
      %s38 = sphi 0, %s35
      %s39 = sphi 0, %s38
      %s55 = sphi 0, %s39
      %s59 = sphi 0, %s59
      %s61 = sphi 0, %s59
      %s62 = sphi 0, %s61
      %s76 = sphi 0, %s62
      %s80 = sphi 0, %s80
      %s82 = sphi 0, %s80
      %s83 = sphi 0, %s82
      %s97 = sphi 0, %s83
      %s101 = sphi 0, %s101
      %s103 = sphi 0, %s101
      %s104 = sphi 0, %s103
      %s118 = sphi 0, %s104
      %s122 = sphi 0, %s122
      %s124 = sphi 0, %s122
      %s125 = sphi 0, %s124
      %s139 = sphi 0, %s125
      %s143 = sphi 0, %s143
      %s145 = sphi 0, %s143
      %s146 = sphi 0, %s145
      %s160 = sphi 0, %s146
      %s164 = sphi 0, %s164
      %s166 = sphi 0, %s164
      %s167 = sphi 0, %s166
      %s181 = sphi 0, %s167
      %s185 = sphi 0, %s185
      %s187 = sphi 0, %s185
      %s188 = sphi 0, %s187
      %s202 = sphi 0, %s188
      %s206 = sphi 0, %s206
      %s208 = sphi 0, %s206
      %s209 = sphi 0, %s208
      %s223 = sphi 0, %s209
      %s227 = sphi 0, %s227
      %s229 = sphi 0, %s227
      %s230 = sphi 0, %s229
      %s244 = sphi 0, %s230
      %s248 = sphi 0, %s248
      %s250 = sphi 0, %s248
      %s251 = sphi 0, %s250
      %s265 = sphi 0, %s251
      %s269 = sphi 0, %s269
      %s271 = sphi 0, %s269
      %s272 = sphi 0, %s271
      %s286 = sphi 0, %s272
      %s290 = sphi 0, %s290
      %s292 = sphi 0, %s290
      %s293 = sphi 0, %s292
      %s307 = sphi 0, %s293
      %s311 = sphi 0, %s311
      %s313 = sphi 0, %s311
      %s314 = sphi 0, %s313
      %s328 = sphi 0, %s314
      %s332 = sphi 0, %s332
      %s334 = sphi 0, %s332
      %s335 = sphi 0, %s334
      %s349 = sphi 0, %s335
      %s353 = sphi 0, %s353
      %s355 = sphi 0, %s353
      %s356 = sphi 0, %s355
      %s370 = sphi 0, %s356
      %s376 = sphi 0, %s378
      %s379 = sphi 0, %s376
      %s380 = sphi 0, %s379
      %s396 = sphi 0, %s380
    $region4: #{tpu_custom_call.1} parent=1 // loop_header_branch
      %28 = sbr.rel (%p26) target = $region8
    $region5: #{tpu_custom_call.1} parent=1 // loop_body
      %s30 = ssub.s32 %s25, 1
      %s31 = ssub.s32 %s25, 2
      %s32 = sadd.s32 %s25, 1
      %s33 = ssub.s32 %s25, %s32
      %p34 = scmp.eq.s32.totalorder %s33, 0
      %s36 = sadd.s32 %s35, 1
      %s37 = scalar_select %p34, %s35, %s36
      %p40 = pneg %p34
      %p41 = scmp.eq.s32.totalorder %s25, 1
      %p42 = por %p40, %p41
      %p43 = scmp.ne.s32.totalorder %s35, %s38
      %p44 = scmp.eq.s32.totalorder %s25, 0
      %p45 = por %p43, %p44
      %p46 = scmp.ne.s32.totalorder %s35, %s38
      %p47 = scmp.eq.s32.totalorder %s30, 1
      %p48 = por %p46, %p47
      %p49 = scmp.ne.s32.totalorder %s38, %s39
      %p50 = scmp.eq.s32.totalorder %s30, 0
      %p51 = por %p49, %p50
      %p52 = scmp.ne.s32.totalorder %s38, %s39
      %p53 = scmp.eq.s32.totalorder %s31, 1
      %p54 = por %p52, %p53
      %p56 = scmp.ne.s32.totalorder %s39, %s55
      %p57 = scmp.eq.s32.totalorder %s31, 0
      %p58 = por %p56, %p57
      %s60 = sadd.s32 %s59, 1
      %p63 = scmp.eq.s32.totalorder %s25, 1
      %p64 = scmp.ne.s32.totalorder %s59, %s61
      %p65 = scmp.eq.s32.totalorder %s25, 0
      %p66 = por %p64, %p65
      %p67 = scmp.ne.s32.totalorder %s59, %s61
      %p68 = scmp.eq.s32.totalorder %s30, 1
      %p69 = por %p67, %p68
      %p70 = scmp.ne.s32.totalorder %s61, %s62
      %p71 = scmp.eq.s32.totalorder %s30, 0
      %p72 = por %p70, %p71
      %p73 = scmp.ne.s32.totalorder %s61, %s62
      %p74 = scmp.eq.s32.totalorder %s31, 1
      %p75 = por %p73, %p74
      %p77 = scmp.ne.s32.totalorder %s62, %s76
      %p78 = scmp.eq.s32.totalorder %s31, 0
      %p79 = por %p77, %p78
      %s81 = sadd.s32 %s80, 1
      %p84 = scmp.eq.s32.totalorder %s25, 1
      %p85 = scmp.ne.s32.totalorder %s80, %s82
      %p86 = scmp.eq.s32.totalorder %s25, 0
      %p87 = por %p85, %p86
      %p88 = scmp.ne.s32.totalorder %s80, %s82
      %p89 = scmp.eq.s32.totalorder %s30, 1
      %p90 = por %p88, %p89
      %p91 = scmp.ne.s32.totalorder %s82, %s83
      %p92 = scmp.eq.s32.totalorder %s30, 0
      %p93 = por %p91, %p92
      %p94 = scmp.ne.s32.totalorder %s82, %s83
      %p95 = scmp.eq.s32.totalorder %s31, 1
      %p96 = por %p94, %p95
      %p98 = scmp.ne.s32.totalorder %s83, %s97
      %p99 = scmp.eq.s32.totalorder %s31, 0
      %p100 = por %p98, %p99
      %s102 = sadd.s32 %s101, 1
      %p105 = scmp.eq.s32.totalorder %s25, 1
      %p106 = scmp.ne.s32.totalorder %s101, %s103
      %p107 = scmp.eq.s32.totalorder %s25, 0
      %p108 = por %p106, %p107
      %p109 = scmp.ne.s32.totalorder %s101, %s103
      %p110 = scmp.eq.s32.totalorder %s30, 1
      %p111 = por %p109, %p110
      %p112 = scmp.ne.s32.totalorder %s103, %s104
      %p113 = scmp.eq.s32.totalorder %s30, 0
      %p114 = por %p112, %p113
      %p115 = scmp.ne.s32.totalorder %s103, %s104
      %p116 = scmp.eq.s32.totalorder %s31, 1
      %p117 = por %p115, %p116
      %p119 = scmp.ne.s32.totalorder %s104, %s118
      %p120 = scmp.eq.s32.totalorder %s31, 0
      %p121 = por %p119, %p120
      %s123 = sadd.s32 %s122, 1
      %p126 = scmp.eq.s32.totalorder %s25, 1
      %p127 = scmp.ne.s32.totalorder %s122, %s124
      %p128 = scmp.eq.s32.totalorder %s25, 0
      %p129 = por %p127, %p128
      %p130 = scmp.ne.s32.totalorder %s122, %s124
      %p131 = scmp.eq.s32.totalorder %s30, 1
      %p132 = por %p130, %p131
      %p133 = scmp.ne.s32.totalorder %s124, %s125
      %p134 = scmp.eq.s32.totalorder %s30, 0
      %p135 = por %p133, %p134
      %p136 = scmp.ne.s32.totalorder %s124, %s125
      %p137 = scmp.eq.s32.totalorder %s31, 1
      %p138 = por %p136, %p137
      %p140 = scmp.ne.s32.totalorder %s125, %s139
      %p141 = scmp.eq.s32.totalorder %s31, 0
      %p142 = por %p140, %p141
      %s144 = sadd.s32 %s143, 1
      %p147 = scmp.eq.s32.totalorder %s25, 1
      %p148 = scmp.ne.s32.totalorder %s143, %s145
      %p149 = scmp.eq.s32.totalorder %s25, 0
      %p150 = por %p148, %p149
      %p151 = scmp.ne.s32.totalorder %s143, %s145
      %p152 = scmp.eq.s32.totalorder %s30, 1
      %p153 = por %p151, %p152
      %p154 = scmp.ne.s32.totalorder %s145, %s146
      %p155 = scmp.eq.s32.totalorder %s30, 0
      %p156 = por %p154, %p155
      %p157 = scmp.ne.s32.totalorder %s145, %s146
      %p158 = scmp.eq.s32.totalorder %s31, 1
      %p159 = por %p157, %p158
      %p161 = scmp.ne.s32.totalorder %s146, %s160
      %p162 = scmp.eq.s32.totalorder %s31, 0
      %p163 = por %p161, %p162
      %s165 = sadd.s32 %s164, 1
      %p168 = scmp.eq.s32.totalorder %s25, 1
      %p169 = scmp.ne.s32.totalorder %s164, %s166
      %p170 = scmp.eq.s32.totalorder %s25, 0
      %p171 = por %p169, %p170
      %p172 = scmp.ne.s32.totalorder %s164, %s166
      %p173 = scmp.eq.s32.totalorder %s30, 1
      %p174 = por %p172, %p173
      %p175 = scmp.ne.s32.totalorder %s166, %s167
      %p176 = scmp.eq.s32.totalorder %s30, 0
      %p177 = por %p175, %p176
      %p178 = scmp.ne.s32.totalorder %s166, %s167
      %p179 = scmp.eq.s32.totalorder %s31, 1
      %p180 = por %p178, %p179
      %p182 = scmp.ne.s32.totalorder %s167, %s181
      %p183 = scmp.eq.s32.totalorder %s31, 0
      %p184 = por %p182, %p183
      %s186 = sadd.s32 %s185, 1
      %p189 = scmp.eq.s32.totalorder %s25, 1
      %p190 = scmp.ne.s32.totalorder %s185, %s187
      %p191 = scmp.eq.s32.totalorder %s25, 0
      %p192 = por %p190, %p191
      %p193 = scmp.ne.s32.totalorder %s185, %s187
      %p194 = scmp.eq.s32.totalorder %s30, 1
      %p195 = por %p193, %p194
      %p196 = scmp.ne.s32.totalorder %s187, %s188
      %p197 = scmp.eq.s32.totalorder %s30, 0
      %p198 = por %p196, %p197
      %p199 = scmp.ne.s32.totalorder %s187, %s188
      %p200 = scmp.eq.s32.totalorder %s31, 1
      %p201 = por %p199, %p200
      %p203 = scmp.ne.s32.totalorder %s188, %s202
      %p204 = scmp.eq.s32.totalorder %s31, 0
      %p205 = por %p203, %p204
      %s207 = sadd.s32 %s206, 1
      %p210 = scmp.eq.s32.totalorder %s25, 1
      %p211 = scmp.ne.s32.totalorder %s206, %s208
      %p212 = scmp.eq.s32.totalorder %s25, 0
      %p213 = por %p211, %p212
      %p214 = scmp.ne.s32.totalorder %s206, %s208
      %p215 = scmp.eq.s32.totalorder %s30, 1
      %p216 = por %p214, %p215
      %p217 = scmp.ne.s32.totalorder %s208, %s209
      %p218 = scmp.eq.s32.totalorder %s30, 0
      %p219 = por %p217, %p218
      %p220 = scmp.ne.s32.totalorder %s208, %s209
      %p221 = scmp.eq.s32.totalorder %s31, 1
      %p222 = por %p220, %p221
      %p224 = scmp.ne.s32.totalorder %s209, %s223
      %p225 = scmp.eq.s32.totalorder %s31, 0
      %p226 = por %p224, %p225
      %s228 = sadd.s32 %s227, 1
      %p231 = scmp.eq.s32.totalorder %s25, 1
      %p232 = scmp.ne.s32.totalorder %s227, %s229
      %p233 = scmp.eq.s32.totalorder %s25, 0
      %p234 = por %p232, %p233
      %p235 = scmp.ne.s32.totalorder %s227, %s229
      %p236 = scmp.eq.s32.totalorder %s30, 1
      %p237 = por %p235, %p236
      %p238 = scmp.ne.s32.totalorder %s229, %s230
      %p239 = scmp.eq.s32.totalorder %s30, 0
      %p240 = por %p238, %p239
      %p241 = scmp.ne.s32.totalorder %s229, %s230
      %p242 = scmp.eq.s32.totalorder %s31, 1
      %p243 = por %p241, %p242
      %p245 = scmp.ne.s32.totalorder %s230, %s244
      %p246 = scmp.eq.s32.totalorder %s31, 0
      %p247 = por %p245, %p246
      %s249 = sadd.s32 %s248, 1
      %p252 = scmp.eq.s32.totalorder %s25, 1
      %p253 = scmp.ne.s32.totalorder %s248, %s250
      %p254 = scmp.eq.s32.totalorder %s25, 0
      %p255 = por %p253, %p254
      %p256 = scmp.ne.s32.totalorder %s248, %s250
      %p257 = scmp.eq.s32.totalorder %s30, 1
      %p258 = por %p256, %p257
      %p259 = scmp.ne.s32.totalorder %s250, %s251
      %p260 = scmp.eq.s32.totalorder %s30, 0
      %p261 = por %p259, %p260
      %p262 = scmp.ne.s32.totalorder %s250, %s251
      %p263 = scmp.eq.s32.totalorder %s31, 1
      %p264 = por %p262, %p263
      %p266 = scmp.ne.s32.totalorder %s251, %s265
      %p267 = scmp.eq.s32.totalorder %s31, 0
      %p268 = por %p266, %p267
      %s270 = sadd.s32 %s269, 1
      %p273 = scmp.eq.s32.totalorder %s25, 1
      %p274 = scmp.ne.s32.totalorder %s269, %s271
      %p275 = scmp.eq.s32.totalorder %s25, 0
      %p276 = por %p274, %p275
      %p277 = scmp.ne.s32.totalorder %s269, %s271
      %p278 = scmp.eq.s32.totalorder %s30, 1
      %p279 = por %p277, %p278
      %p280 = scmp.ne.s32.totalorder %s271, %s272
      %p281 = scmp.eq.s32.totalorder %s30, 0
      %p282 = por %p280, %p281
      %p283 = scmp.ne.s32.totalorder %s271, %s272
      %p284 = scmp.eq.s32.totalorder %s31, 1
      %p285 = por %p283, %p284
      %p287 = scmp.ne.s32.totalorder %s272, %s286
      %p288 = scmp.eq.s32.totalorder %s31, 0
      %p289 = por %p287, %p288
      %s291 = sadd.s32 %s290, 1
      %p294 = scmp.eq.s32.totalorder %s25, 1
      %p295 = scmp.ne.s32.totalorder %s290, %s292
      %p296 = scmp.eq.s32.totalorder %s25, 0
      %p297 = por %p295, %p296
      %p298 = scmp.ne.s32.totalorder %s290, %s292
      %p299 = scmp.eq.s32.totalorder %s30, 1
      %p300 = por %p298, %p299
      %p301 = scmp.ne.s32.totalorder %s292, %s293
      %p302 = scmp.eq.s32.totalorder %s30, 0
      %p303 = por %p301, %p302
      %p304 = scmp.ne.s32.totalorder %s292, %s293
      %p305 = scmp.eq.s32.totalorder %s31, 1
      %p306 = por %p304, %p305
      %p308 = scmp.ne.s32.totalorder %s293, %s307
      %p309 = scmp.eq.s32.totalorder %s31, 0
      %p310 = por %p308, %p309
      %s312 = sadd.s32 %s311, 1
      %p315 = scmp.eq.s32.totalorder %s25, 1
      %p316 = scmp.ne.s32.totalorder %s311, %s313
      %p317 = scmp.eq.s32.totalorder %s25, 0
      %p318 = por %p316, %p317
      %p319 = scmp.ne.s32.totalorder %s311, %s313
      %p320 = scmp.eq.s32.totalorder %s30, 1
      %p321 = por %p319, %p320
      %p322 = scmp.ne.s32.totalorder %s313, %s314
      %p323 = scmp.eq.s32.totalorder %s30, 0
      %p324 = por %p322, %p323
      %p325 = scmp.ne.s32.totalorder %s313, %s314
      %p326 = scmp.eq.s32.totalorder %s31, 1
      %p327 = por %p325, %p326
      %p329 = scmp.ne.s32.totalorder %s314, %s328
      %p330 = scmp.eq.s32.totalorder %s31, 0
      %p331 = por %p329, %p330
      %s333 = sadd.s32 %s332, 1
      %p336 = scmp.eq.s32.totalorder %s25, 1
      %p337 = scmp.ne.s32.totalorder %s332, %s334
      %p338 = scmp.eq.s32.totalorder %s25, 0
      %p339 = por %p337, %p338
      %p340 = scmp.ne.s32.totalorder %s332, %s334
      %p341 = scmp.eq.s32.totalorder %s30, 1
      %p342 = por %p340, %p341
      %p343 = scmp.ne.s32.totalorder %s334, %s335
      %p344 = scmp.eq.s32.totalorder %s30, 0
      %p345 = por %p343, %p344
      %p346 = scmp.ne.s32.totalorder %s334, %s335
      %p347 = scmp.eq.s32.totalorder %s31, 1
      %p348 = por %p346, %p347
      %p350 = scmp.ne.s32.totalorder %s335, %s349
      %p351 = scmp.eq.s32.totalorder %s31, 0
      %p352 = por %p350, %p351
      %s354 = sadd.s32 %s353, 1
      %p357 = scmp.eq.s32.totalorder %s25, 1
      %p358 = scmp.ne.s32.totalorder %s353, %s355
      %p359 = scmp.eq.s32.totalorder %s25, 0
      %p360 = por %p358, %p359
      %p361 = scmp.ne.s32.totalorder %s353, %s355
      %p362 = scmp.eq.s32.totalorder %s30, 1
      %p363 = por %p361, %p362
      %p364 = scmp.ne.s32.totalorder %s355, %s356
      %p365 = scmp.eq.s32.totalorder %s30, 0
      %p366 = por %p364, %p365
      %p367 = scmp.ne.s32.totalorder %s355, %s356
      %p368 = scmp.eq.s32.totalorder %s31, 1
      %p369 = por %p367, %p368
      %p371 = scmp.ne.s32.totalorder %s356, %s370
      %p372 = scmp.eq.s32.totalorder %s31, 0
      %p373 = por %p371, %p372
      %s374 = ssub.s32 %s25, %s32
      %p375 = scmp.eq.s32.totalorder %s374, 0
      %s377 = sadd.s32 %s376, 1
      %s378 = scalar_select %p375, %s376, %s377
      %p381 = pneg %p375
      %p382 = scmp.eq.s32.totalorder %s25, 1
      %p383 = por %p381, %p382
      %p384 = scmp.ne.s32.totalorder %s376, %s379
      %p385 = scmp.eq.s32.totalorder %s25, 0
      %p386 = por %p384, %p385
      %p387 = scmp.ne.s32.totalorder %s376, %s379
      %p388 = scmp.eq.s32.totalorder %s30, 1
      %p389 = por %p387, %p388
      %p390 = scmp.ne.s32.totalorder %s379, %s380
      %p391 = scmp.eq.s32.totalorder %s30, 0
      %p392 = por %p390, %p391
      %p393 = scmp.ne.s32.totalorder %s379, %s380
      %p394 = scmp.eq.s32.totalorder %s31, 1
      %p395 = por %p393, %p394
      %p397 = scmp.ne.s32.totalorder %s380, %s396
      %p398 = scmp.eq.s32.totalorder %s31, 0
      %p399 = por %p397, %p398
      %p400 = scmp.le.s32.totalorder 1, %s25
      %p401 = scmp.lt.s32.totalorder %s25, 3
      %p402 = pnand %p400, %p401
      %p403 = pneg %p402
      // Predicated region
      $region9: #{tpu_custom_call.1} parent=5 // pred_check
        _
      $region10: #{tpu_custom_call.1} parent=5 // pred_check_branch
        %405 = sbr.rel (%p402) target = $region12
      $region11: #{tpu_custom_call.1} parent=5 // pred_region
        %s406 = ssub.s32 %s25, 1
        // Predicated region
        $region13: #{tpu_custom_call.1} parent=11 // pred_check
          %p407 = pneg %p72
        $region14: #{tpu_custom_call.1} parent=11 // pred_check_branch
          %409 = sbr.rel (%p407) target = $region16
        $region15: #{tpu_custom_call.1} parent=11 // pred_region
          _
        $region16: #{tpu_custom_call.1} parent=11 // pred_fallthru
          _
        // Predicated region
        $region17: #{tpu_custom_call.1} parent=11 // pred_check
          %p410 = pneg %p93
        $region18: #{tpu_custom_call.1} parent=11 // pred_check_branch
          %412 = sbr.rel (%p410) target = $region20
        $region19: #{tpu_custom_call.1} parent=11 // pred_region
          _
        $region20: #{tpu_custom_call.1} parent=11 // pred_fallthru
          _
        // Predicated region
        $region21: #{tpu_custom_call.1} parent=11 // pred_check
          %p413 = pneg %p114
        $region22: #{tpu_custom_call.1} parent=11 // pred_check_branch
          %415 = sbr.rel (%p413) target = $region24
        $region23: #{tpu_custom_call.1} parent=11 // pred_region
          _
        $region24: #{tpu_custom_call.1} parent=11 // pred_fallthru
          _
        // Predicated region
        $region25: #{tpu_custom_call.1} parent=11 // pred_check
          %p416 = pneg %p135
        $region26: #{tpu_custom_call.1} parent=11 // pred_check_branch
          %418 = sbr.rel (%p416) target = $region28
        $region27: #{tpu_custom_call.1} parent=11 // pred_region
          _
        $region28: #{tpu_custom_call.1} parent=11 // pred_fallthru
          _
        // Predicated region
        $region29: #{tpu_custom_call.1} parent=11 // pred_check
          %p419 = pneg %p156
        $region30: #{tpu_custom_call.1} parent=11 // pred_check_branch
          %421 = sbr.rel (%p419) target = $region32
        $region31: #{tpu_custom_call.1} parent=11 // pred_region
          _
        $region32: #{tpu_custom_call.1} parent=11 // pred_fallthru
          _
        // Predicated region
        $region33: #{tpu_custom_call.1} parent=11 // pred_check
          %p422 = pneg %p177
        $region34: #{tpu_custom_call.1} parent=11 // pred_check_branch
          %424 = sbr.rel (%p422) target = $region36
        $region35: #{tpu_custom_call.1} parent=11 // pred_region
          _
        $region36: #{tpu_custom_call.1} parent=11 // pred_fallthru
          _
        // Predicated region
        $region37: #{tpu_custom_call.1} parent=11 // pred_check
          %p425 = pneg %p198
        $region38: #{tpu_custom_call.1} parent=11 // pred_check_branch
          %427 = sbr.rel (%p425) target = $region40
        $region39: #{tpu_custom_call.1} parent=11 // pred_region
          _
        $region40: #{tpu_custom_call.1} parent=11 // pred_fallthru
          _
        // Predicated region
        $region41: #{tpu_custom_call.1} parent=11 // pred_check
          %p428 = pneg %p219
        $region42: #{tpu_custom_call.1} parent=11 // pred_check_branch
          %430 = sbr.rel (%p428) target = $region44
        $region43: #{tpu_custom_call.1} parent=11 // pred_region
          _
        $region44: #{tpu_custom_call.1} parent=11 // pred_fallthru
          _
        // Predicated region
        $region45: #{tpu_custom_call.1} parent=11 // pred_check
          %p431 = pneg %p240
        $region46: #{tpu_custom_call.1} parent=11 // pred_check_branch
          %433 = sbr.rel (%p431) target = $region48
        $region47: #{tpu_custom_call.1} parent=11 // pred_region
          _
        $region48: #{tpu_custom_call.1} parent=11 // pred_fallthru
          _
        // Predicated region
        $region49: #{tpu_custom_call.1} parent=11 // pred_check
          %p434 = pneg %p261
        $region50: #{tpu_custom_call.1} parent=11 // pred_check_branch
          %436 = sbr.rel (%p434) target = $region52
        $region51: #{tpu_custom_call.1} parent=11 // pred_region
          _
        $region52: #{tpu_custom_call.1} parent=11 // pred_fallthru
          _
        // Predicated region
        $region53: #{tpu_custom_call.1} parent=11 // pred_check
          %p437 = pneg %p282
        $region54: #{tpu_custom_call.1} parent=11 // pred_check_branch
          %439 = sbr.rel (%p437) target = $region56
        $region55: #{tpu_custom_call.1} parent=11 // pred_region
          _
        $region56: #{tpu_custom_call.1} parent=11 // pred_fallthru
          _
        // Predicated region
        $region57: #{tpu_custom_call.1} parent=11 // pred_check
          %p440 = pneg %p303
        $region58: #{tpu_custom_call.1} parent=11 // pred_check_branch
          %442 = sbr.rel (%p440) target = $region60
        $region59: #{tpu_custom_call.1} parent=11 // pred_region
          _
        $region60: #{tpu_custom_call.1} parent=11 // pred_fallthru
          _
        // Predicated region
        $region61: #{tpu_custom_call.1} parent=11 // pred_check
          %p443 = pneg %p324
        $region62: #{tpu_custom_call.1} parent=11 // pred_check_branch
          %445 = sbr.rel (%p443) target = $region64
        $region63: #{tpu_custom_call.1} parent=11 // pred_region
          _
        $region64: #{tpu_custom_call.1} parent=11 // pred_fallthru
          _
        // Predicated region
        $region65: #{tpu_custom_call.1} parent=11 // pred_check
          %p446 = pneg %p345
        $region66: #{tpu_custom_call.1} parent=11 // pred_check_branch
          %448 = sbr.rel (%p446) target = $region68
        $region67: #{tpu_custom_call.1} parent=11 // pred_region
          _
        $region68: #{tpu_custom_call.1} parent=11 // pred_fallthru
          _
        // Predicated region
        $region69: #{tpu_custom_call.1} parent=11 // pred_check
          %p449 = pneg %p366
        $region70: #{tpu_custom_call.1} parent=11 // pred_check_branch
          %451 = sbr.rel (%p449) target = $region72
        $region71: #{tpu_custom_call.1} parent=11 // pred_region
          _
        $region72: #{tpu_custom_call.1} parent=11 // pred_fallthru
          _
      $region12: #{tpu_custom_call.1} parent=5 // pred_fallthru
        _
      %p452 = scmp.lt.s32.totalorder %s25, 2
      // Predicated region
      $region73: #{tpu_custom_call.1} parent=5 // pred_check
        %p453 = pneg %p452
      $region74: #{tpu_custom_call.1} parent=5 // pred_check_branch
        %455 = sbr.rel (%p453) target = $region76
      $region75: #{tpu_custom_call.1} parent=5 // pred_region
        // Predicated region
        $region77: #{tpu_custom_call.1} parent=75 // pred_check
          %p456 = pneg %p45
        $region78: #{tpu_custom_call.1} parent=75 // pred_check_branch
          %458 = sbr.rel (%p456) target = $region80
        $region79: #{tpu_custom_call.1} parent=75 // pred_region
          %p459 = scmp.lt.s32.totalorder %s25, 1
          %s460 = scalar_select %p459, %s25, 1
          %s461 = scalar_lea.vmem %s0, %s460
        $region80: #{tpu_custom_call.1} parent=75 // pred_fallthru
          _
      $region76: #{tpu_custom_call.1} parent=5 // pred_fallthru
        _
      %p462 = scmp.le.s32.totalorder 1, %s25
      %p463 = scmp.lt.s32.totalorder %s25, 3
      %p464 = pnand %p462, %p463
      %p465 = pneg %p464
      // Predicated region
      $region81: #{tpu_custom_call.1} parent=5 // pred_check
        _
      $region82: #{tpu_custom_call.1} parent=5 // pred_check_branch
        %467 = sbr.rel (%p464) target = $region84
      $region83: #{tpu_custom_call.1} parent=5 // pred_region
        %s468 = ssub.s32 %s25, 1
        %p469 = scmp.lt.s32.totalorder %s30, 1
        %s470 = scalar_select %p469, %s30, 1
        %s471 = scalar_lea.vmem %s0, %s470
        %p472 = pneg %p51
        %p473 = pneg %p48
        %p474 = pneg %p72
        %p475 = pneg %p69
        %p476 = pneg %p93
        %p477 = pneg %p90
        %p478 = pneg %p114
        %p479 = pneg %p111
        %p480 = pneg %p135
        %p481 = pneg %p132
        %p482 = pneg %p156
        %p483 = pneg %p153
        %p484 = pneg %p177
        %p485 = pneg %p174
        %p486 = pneg %p198
        %p487 = pneg %p195
        %p488 = pneg %p219
        %p489 = pneg %p216
        %p490 = pneg %p240
        %p491 = pneg %p237
        %p492 = pneg %p261
        %p493 = pneg %p258
        %p494 = pneg %p282
        %p495 = pneg %p279
        %p496 = pneg %p303
        %p497 = pneg %p300
        %p498 = pneg %p324
        %p499 = pneg %p321
        %p500 = pneg %p345
        %p501 = pneg %p342
        %p502 = pneg %p366
        %p503 = pneg %p363
        %p504 = pneg %p392
        %p505 = pneg %p389
        %s506 = sand.u32 %s379, 1
        %s507 = scalar_lea.sflag [#allocation3], %s506
        %s508 = sand.u32 %s379, 1
        %s509 = smul.addr %s508, 16
        %s510 = scalar_lea.vmem [#allocation2], %s509
        %p511 = scmp.lt.s32.totalorder %s30, 1
        %s512 = scalar_select %p511, %s30, 1
        %s513 = scalar_lea.vmem %s0, %s512
        %v515 = vld [vmem:[%s513] sm:$0x1]
        %v516 = vpack.c.bf16 %v515, %v515
        %v517 = vld [vmem:[%s1] sm:$0xff]
        %v518 = vld [vmem:[%s1 + $0x8] sm:$0xff]
        %v519 = vld [vmem:[%s1 + $0x10] sm:$0xff]
        %v520 = vld [vmem:[%s1 + $0x18] sm:$0xff]
        %v521 = vld [vmem:[%s2] sm:$0x3]
        %v526 = vunpack.c.l.b16 %v517
        %v527 = vunpack.c.h.b16 %v517
        %v528 = vunpack.c.l.b16 %v518
        %v529 = vunpack.c.h.b16 %v518
        %v530 = vunpack.c.l.b16 %v519
        %v531 = vunpack.c.h.b16 %v519
        %v532 = vunpack.c.l.b16 %v520
        %v533 = vunpack.c.h.b16 %v520
        %v534 = vpack.c.b16 %v528, %v526
        %v535 = vpack.c.b16 %v529, %v527
        %v536 = vpack.c.b16 %v532, %v530
        %v537 = vpack.c.b16 %v533, %v531
        %v543 = vlaneseq
        %v544 = vshrl.u32 %v543, 7
        %v545 = vsub.s32 0, %v544
        %v546 = vrot.slane %v521, %v545
        %v547 = vlaneseq
        %v548 = vshrl.u32 %v547, 7
        %v549 = vsub.s32 1, %v548
        %v550 = vrot.slane %v521, %v549
        %vm553 = vcmask 261120
        %v555 = vsel %vm553, %v516, 0
        %557 = vmatprep.subr.bf16.mxu0 %v535
        %558 = vmatpush1.bf16.msra.mxu0 %v534
        %559 = vmatprep.subr.bf16.mxu0 %v537
        %560 = vmatpush1.bf16.msra.mxu0 %v536
        %561 = vmatprep.subr.bf16.mxu0 0
        %562 = vmatpush1.bf16.msra.mxu0 0
        %563 = vmatprep.subr.bf16.mxu0 0
        %564 = vmatpush1.bf16.msra.mxu0 0
        %565 = vmatprep.subr.bf16.mxu0 0
        %566 = vmatpush1.bf16.msra.mxu0 0
        %567 = vmatprep.subr.bf16.mxu0 0
        %568 = vmatpush1.bf16.msra.mxu0 0
        %569 = vmatprep.subr.bf16.mxu0 0
        %570 = vmatpush1.bf16.msra.mxu0 0
        %571 = vmatprep.subr.bf16.mxu0 0
        %572 = vmatpush1.bf16.msra.mxu0 0
        %573 = vmatprep.subr.bf16.mxu0 0
        %574 = vmatpush1.bf16.msra.mxu0 0
        %575 = vmatprep.subr.bf16.mxu0 0
        %576 = vmatpush1.bf16.msra.mxu0 0
        %577 = vmatprep.subr.bf16.mxu0 0
        %578 = vmatpush1.bf16.msra.mxu0 0
        %579 = vmatprep.subr.bf16.mxu0 0
        %580 = vmatpush1.bf16.msra.mxu0 0
        %581 = vmatprep.subr.bf16.mxu0 0
        %582 = vmatpush1.bf16.msra.mxu0 0
        %583 = vmatprep.subr.bf16.mxu0 0
        %584 = vmatpush1.bf16.msra.mxu0 0
        %585 = vmatprep.subr.bf16.mxu0 0
        %586 = vmatpush1.bf16.msra.mxu0 0
        %587 = vmatprep.subr.bf16.mxu0 0
        %588 = vmatpush1.bf16.msra.mxu0 0
        %589 = vmatprep.mubr.bf16.mxu0 0
        %590 = vmatmul.mubr.bf16.gmra.mrb[0].mxu0 %v555
        %v591 = vpop.f32.mrb[0].mxu0
        %v592 = vadd.f32 %v546, %v591
        %v593 = vpop.f32.mrb[0].mxu0
        %v594 = vadd.f32 %v550, %v593
        %v595 = vpop.f32.mrb[0].mxu0
        %v596 = vpop.f32.mrb[0].mxu0
        %597 = vdwg.mxu0
        %v598 = vmax.f32 %v592, 0.0
        %v599 = vmax.f32 %v594, 0.0
        %v600 = vld [vmem:[%s3] sm:$0xff]
        %v601 = vld [vmem:[%s3 + $0x8] sm:$0xff]
        %v602 = vld [vmem:[%s3 + $0x10] sm:$0xff]
        %v603 = vld [vmem:[%s3 + $0x18] sm:$0xff]
        %v604 = vlaneseq
        %v605 = vshrl.u32 %v604, 7
        %v606 = vsub.s32 0, %v605
        %v607 = vrot.slane %v598, %v606
        %v608 = vlaneseq
        %v609 = vshrl.u32 %v608, 7
        %v610 = vsub.s32 0, %v609
        %v611 = vrot.slane %v599, %v610
        %v612 = vmul.f32 %v600, %v607
        %v613 = vmul.f32 %v601, %v611
        %v614 = vmul.f32 %v602, %v607
        %v615 = vmul.f32 %v603, %v611
        %v616 = vpack.c.bf16 %v614, %v612
        %v617 = vpack.c.bf16 %v615, %v613
        %v618 = vld [vmem:[%s4] sm:$0xf]
        %v619 = vld [vmem:[%s4 + $0x4] sm:$0xf]
        %v620 = vld [vmem:[%s4 + $0x8] sm:$0xf]
        %v621 = vld [vmem:[%s4 + $0xc] sm:$0xf]
        %v622 = vld [vmem:[%s4 + $0x10] sm:$0xf]
        %v623 = vld [vmem:[%s4 + $0x14] sm:$0xf]
        %v624 = vld [vmem:[%s4 + $0x18] sm:$0xf]
        %v625 = vld [vmem:[%s4 + $0x1c] sm:$0xf]
        %v626 = vld [vmem:[%s4 + $0x20] sm:$0xf]
        %v627 = vld [vmem:[%s4 + $0x24] sm:$0xf]
        %v628 = vld [vmem:[%s4 + $0x28] sm:$0xf]
        %v629 = vld [vmem:[%s4 + $0x2c] sm:$0xf]
        %v630 = vld [vmem:[%s4 + $0x30] sm:$0xf]
        %v631 = vld [vmem:[%s4 + $0x34] sm:$0xf]
        %v632 = vld [vmem:[%s4 + $0x38] sm:$0xf]
        %v633 = vld [vmem:[%s4 + $0x3c] sm:$0xf]
        %v634 = vld [vmem:[%s4 + $0x40] sm:$0xf]
        %v635 = vld [vmem:[%s4 + $0x44] sm:$0xf]
        %v636 = vld [vmem:[%s4 + $0x48] sm:$0xf]
        %v637 = vld [vmem:[%s4 + $0x4c] sm:$0xf]
        %v638 = vld [vmem:[%s4 + $0x50] sm:$0xf]
        %v639 = vld [vmem:[%s4 + $0x54] sm:$0xf]
        %v640 = vld [vmem:[%s4 + $0x58] sm:$0xf]
        %v641 = vld [vmem:[%s4 + $0x5c] sm:$0xf]
        %v642 = vld [vmem:[%s4 + $0x60] sm:$0xf]
        %v643 = vld [vmem:[%s4 + $0x64] sm:$0xf]
        %v644 = vld [vmem:[%s4 + $0x68] sm:$0xf]
        %v645 = vld [vmem:[%s4 + $0x6c] sm:$0xf]
        %v646 = vld [vmem:[%s4 + $0x70] sm:$0xf]
        %v647 = vld [vmem:[%s4 + $0x74] sm:$0xf]
        %v648 = vld [vmem:[%s4 + $0x78] sm:$0xf]
        %v649 = vld [vmem:[%s4 + $0x7c] sm:$0xf]
        %v682 = vunpack.c.l.b16 %v618
        %v683 = vunpack.c.l.b16 %v619
        %v684 = vunpack.c.l.b16 %v620
        %v685 = vunpack.c.l.b16 %v621
        %v686 = vunpack.c.l.b16 %v622
        %v687 = vunpack.c.l.b16 %v623
        %v688 = vunpack.c.l.b16 %v624
        %v689 = vunpack.c.l.b16 %v625
        %v690 = vunpack.c.l.b16 %v626
        %v691 = vunpack.c.l.b16 %v627
        %v692 = vunpack.c.l.b16 %v628
        %v693 = vunpack.c.l.b16 %v629
        %v694 = vunpack.c.l.b16 %v630
        %v695 = vunpack.c.l.b16 %v631
        %v696 = vunpack.c.l.b16 %v632
        %v697 = vunpack.c.l.b16 %v633
        %v698 = vunpack.c.l.b16 %v634
        %v699 = vunpack.c.l.b16 %v635
        %v700 = vunpack.c.l.b16 %v636
        %v701 = vunpack.c.l.b16 %v637
        %v702 = vunpack.c.l.b16 %v638
        %v703 = vunpack.c.l.b16 %v639
        %v704 = vunpack.c.l.b16 %v640
        %v705 = vunpack.c.l.b16 %v641
        %v706 = vunpack.c.l.b16 %v642
        %v707 = vunpack.c.l.b16 %v643
        %v708 = vunpack.c.l.b16 %v644
        %v709 = vunpack.c.l.b16 %v645
        %v710 = vunpack.c.l.b16 %v646
        %v711 = vunpack.c.l.b16 %v647
        %v712 = vunpack.c.l.b16 %v648
        %v713 = vunpack.c.l.b16 %v649
        %v714 = vpack.c.b16 %v683, %v682
        %v715 = vpack.c.b16 %v685, %v684
        %v716 = vpack.c.b16 %v687, %v686
        %v717 = vpack.c.b16 %v689, %v688
        %v718 = vpack.c.b16 %v691, %v690
        %v719 = vpack.c.b16 %v693, %v692
        %v720 = vpack.c.b16 %v695, %v694
        %v721 = vpack.c.b16 %v697, %v696
        %v722 = vpack.c.b16 %v699, %v698
        %v723 = vpack.c.b16 %v701, %v700
        %v724 = vpack.c.b16 %v703, %v702
        %v725 = vpack.c.b16 %v705, %v704
        %v726 = vpack.c.b16 %v707, %v706
        %v727 = vpack.c.b16 %v709, %v708
        %v728 = vpack.c.b16 %v711, %v710
        %v729 = vpack.c.b16 %v713, %v712
        %746 = vmatprep.subr.bf16.mxu0 0
        %747 = vmatpush1.bf16.msra.mxu0 %v714
        %748 = vmatprep.subr.bf16.mxu0 0
        %749 = vmatpush1.bf16.msra.mxu0 %v715
        %750 = vmatprep.subr.bf16.mxu0 0
        %751 = vmatpush1.bf16.msra.mxu0 %v716
        %752 = vmatprep.subr.bf16.mxu0 0
        %753 = vmatpush1.bf16.msra.mxu0 %v717
        %754 = vmatprep.subr.bf16.mxu0 0
        %755 = vmatpush1.bf16.msra.mxu0 %v718
        %756 = vmatprep.subr.bf16.mxu0 0
        %757 = vmatpush1.bf16.msra.mxu0 %v719
        %758 = vmatprep.subr.bf16.mxu0 0
        %759 = vmatpush1.bf16.msra.mxu0 %v720
        %760 = vmatprep.subr.bf16.mxu0 0
        %761 = vmatpush1.bf16.msra.mxu0 %v721
        %762 = vmatprep.subr.bf16.mxu0 0
        %763 = vmatpush1.bf16.msra.mxu0 %v722
        %764 = vmatprep.subr.bf16.mxu0 0
        %765 = vmatpush1.bf16.msra.mxu0 %v723
        %766 = vmatprep.subr.bf16.mxu0 0
        %767 = vmatpush1.bf16.msra.mxu0 %v724
        %768 = vmatprep.subr.bf16.mxu0 0
        %769 = vmatpush1.bf16.msra.mxu0 %v725
        %770 = vmatprep.subr.bf16.mxu0 0
        %771 = vmatpush1.bf16.msra.mxu0 %v726
        %772 = vmatprep.subr.bf16.mxu0 0
        %773 = vmatpush1.bf16.msra.mxu0 %v727
        %774 = vmatprep.subr.bf16.mxu0 0
        %775 = vmatpush1.bf16.msra.mxu0 %v728
        %776 = vmatprep.subr.bf16.mxu0 0
        %777 = vmatpush1.bf16.msra.mxu0 %v729
        %778 = vmatprep.mubr.bf16.mxu0 %v617
        %779 = vmatmul.mubr.bf16.gmra.mrb[0].mxu0 %v616
        %v780 = vpop.f32.mrb[0].mxu0
        %v781 = vadd.f32 0.0, %v780
        %v782 = vpop.f32.mrb[0].mxu0
        %v783 = vpop.f32.mrb[0].mxu0
        %v784 = vadd.f32 0.0, %v783
        %v785 = vpop.f32.mrb[0].mxu0
        %786 = vdwg.mxu0
        %v787 = vld [vmem:[%s6] sm:$0x1]
        %s788 = scalar_lea.vmem %s6, 1
        %v789 = vld [vmem:[%s788] sm:$0x1]
        %v790 = vpack.c.bf16 %v784, %v781
        %793 = vrot.lane.b32.xlu0 %v781, 127
        %v794 = vpop.permute.xlu0 %793
        %795 = vrot.lane.b32.xlu0 %v784, 127
        %v796 = vpop.permute.xlu0 %795
        %vm799 = vcmask 121856
        %v800 = vsel %vm799, %v794, 0.0
        %v801 = vsel %vm799, %v796, 0.0
        %v803 = vlaneseq
        %v804 = vshrl.u32 %v803, 7
        %v805 = vsub.s32 0, %v804
        %v806 = vrot.slane %v787, %v805
        %v808 = vmul.f32 %v800, %v806
        %v809 = vmul.f32 %v801, %v806
        %v810 = vpack.c.bf16 %v809, %v808
        %811 = vrot.lane.b32.xlu0 %v781, 124
        %v812 = vpop.permute.xlu0 %811
        %813 = vrot.lane.b32.xlu0 %v784, 124
        %v814 = vpop.permute.xlu0 %813
        %vm817 = vcmask 97280
        %v818 = vsel %vm817, %v812, 0.0
        %v819 = vsel %vm817, %v814, 0.0
        %v821 = vlaneseq
        %v822 = vshrl.u32 %v821, 7
        %v823 = vsub.s32 0, %v822
        %v824 = vrot.slane %v789, %v823
        %v826 = vmul.f32 %v818, %v824
        %v827 = vmul.f32 %v819, %v824
        %v828 = vpack.c.bf16 %v827, %v826
        %829 = vrot.lane.b32.xlu0 %v781, 123
        %v830 = vpop.permute.xlu0 %829
        %831 = vrot.lane.b32.xlu0 %v784, 123
        %v832 = vpop.permute.xlu0 %831
        %vm835 = vcmask 89088
        %v836 = vsel %vm835, %v830, 0.0
        %v837 = vsel %vm835, %v832, 0.0
        %v838 = vmul.f32 %v787, %v789
        %v840 = vlaneseq
        %v841 = vshrl.u32 %v840, 7
        %v842 = vsub.s32 0, %v841
        %v843 = vrot.slane %v838, %v842
        %v845 = vmul.f32 %v836, %v843
        %v846 = vmul.f32 %v837, %v843
        %v847 = vpack.c.bf16 %v846, %v845
        %v848 = vld [vmem:[%s5] sm:$0xf]
        %v849 = vld [vmem:[%s5 + $0x4] sm:$0xf]
        %v850 = vld [vmem:[%s5 + $0x8] sm:$0xf]
        %v851 = vld [vmem:[%s5 + $0xc] sm:$0xf]
        %v852 = vld [vmem:[%s5 + $0x10] sm:$0xf]
        %v853 = vld [vmem:[%s5 + $0x14] sm:$0xf]
        %v854 = vld [vmem:[%s5 + $0x18] sm:$0xf]
        %v855 = vld [vmem:[%s5 + $0x1c] sm:$0xf]
        %s856 = scalar_lea.vmem %s5, 32
        %v857 = vld [vmem:[%s856] sm:$0xf]
        %v858 = vld [vmem:[%s856 + $0x4] sm:$0xf]
        %v859 = vld [vmem:[%s856 + $0x8] sm:$0xf]
        %v860 = vld [vmem:[%s856 + $0xc] sm:$0xf]
        %v861 = vld [vmem:[%s856 + $0x10] sm:$0xf]
        %v862 = vld [vmem:[%s856 + $0x14] sm:$0xf]
        %v863 = vld [vmem:[%s856 + $0x18] sm:$0xf]
        %v864 = vld [vmem:[%s856 + $0x1c] sm:$0xf]
        %v873 = vunpack.c.l.b16 %v857
        %v874 = vunpack.c.l.b16 %v858
        %v875 = vunpack.c.l.b16 %v859
        %v876 = vunpack.c.l.b16 %v860
        %v877 = vunpack.c.l.b16 %v861
        %v878 = vunpack.c.l.b16 %v862
        %v879 = vunpack.c.l.b16 %v863
        %v880 = vunpack.c.l.b16 %v864
        %v881 = vpack.c.b16 %v874, %v873
        %v882 = vpack.c.b16 %v876, %v875
        %v883 = vpack.c.b16 %v878, %v877
        %v884 = vpack.c.b16 %v880, %v879
        %vm885 = vcmask 130048
        %v887 = vsel %vm885, %v881, 0
        %v890 = vsel %vm885, %v882, 0
        %v893 = vsel %vm885, %v883, 0
        %v896 = vsel %vm885, %v884, 0
        %898 = vmatprep.subr.bf16.mxu0 0
        %899 = vmatpush1.bf16.msra.mxu0 %v810
        %900 = vmatprep.subr.bf16.mxu0 0
        %901 = vmatpush1.bf16.msra.mxu0 0
        %902 = vmatprep.subr.bf16.mxu0 0
        %903 = vmatpush1.bf16.msra.mxu0 0
        %904 = vmatprep.subr.bf16.mxu0 0
        %905 = vmatpush1.bf16.msra.mxu0 0
        %906 = vmatprep.subr.bf16.mxu0 0
        %907 = vmatpush1.bf16.msra.mxu0 0
        %908 = vmatprep.subr.bf16.mxu0 0
        %909 = vmatpush1.bf16.msra.mxu0 0
        %910 = vmatprep.subr.bf16.mxu0 0
        %911 = vmatpush1.bf16.msra.mxu0 0
        %912 = vmatprep.subr.bf16.mxu0 0
        %913 = vmatpush1.bf16.msra.mxu0 0
        %914 = vmatprep.subr.bf16.mxu0 0
        %915 = vmatpush1.bf16.msra.mxu0 0
        %916 = vmatprep.subr.bf16.mxu0 0
        %917 = vmatpush1.bf16.msra.mxu0 0
        %918 = vmatprep.subr.bf16.mxu0 0
        %919 = vmatpush1.bf16.msra.mxu0 0
        %920 = vmatprep.subr.bf16.mxu0 0
        %921 = vmatpush1.bf16.msra.mxu0 0
        %922 = vmatprep.subr.bf16.mxu0 0
        %923 = vmatpush1.bf16.msra.mxu0 0
        %924 = vmatprep.subr.bf16.mxu0 0
        %925 = vmatpush1.bf16.msra.mxu0 0
        %926 = vmatprep.subr.bf16.mxu0 0
        %927 = vmatpush1.bf16.msra.mxu0 0
        %928 = vmatprep.subr.bf16.mxu0 0
        %929 = vmatpush1.bf16.msra.mxu0 0
        %930 = vmatprep.mubr.bf16.mxu0 0
        %931 = vmatmul.mubr.bf16.gmra.mrb[0].mxu0 %v887
        %v932 = vpop.f32.mrb[0].mxu0
        %v933 = vadd.f32 0.0, %v932
        %v934 = vpop.f32.mrb[0].mxu0
        %v935 = vpop.f32.mrb[0].mxu0
        %v936 = vadd.f32 0.0, %v935
        %v937 = vpop.f32.mrb[0].mxu0
        %938 = vmatprep.mubr.bf16.mxu0 0
        %939 = vmatmul.mubr.bf16.gmra.mrb[0].mxu0 %v890
        %v940 = vpop.f32.mrb[0].mxu0
        %v941 = vadd.f32 0.0, %v940
        %v942 = vpop.f32.mrb[0].mxu0
        %v943 = vpop.f32.mrb[0].mxu0
        %v944 = vadd.f32 0.0, %v943
        %v945 = vpop.f32.mrb[0].mxu0
        %946 = vmatprep.mubr.bf16.mxu0 0
        %947 = vmatmul.mubr.bf16.gmra.mrb[0].mxu0 %v893
        %v948 = vpop.f32.mrb[0].mxu0
        %v949 = vadd.f32 0.0, %v948
        %v950 = vpop.f32.mrb[0].mxu0
        %v951 = vpop.f32.mrb[0].mxu0
        %v952 = vadd.f32 0.0, %v951
        %v953 = vpop.f32.mrb[0].mxu0
        %954 = vmatprep.mubr.bf16.mxu0 0
        %955 = vmatmul.mubr.bf16.gmra.mrb[0].mxu0 %v896
        %v956 = vpop.f32.mrb[0].mxu0
        %v957 = vadd.f32 0.0, %v956
        %v958 = vpop.f32.mrb[0].mxu0
        %v959 = vpop.f32.mrb[0].mxu0
        %v960 = vadd.f32 0.0, %v959
        %v961 = vpop.f32.mrb[0].mxu0
        %962 = vdwg.mxu0
        %v971 = vunpack.c.l.b16 %v848
        %v972 = vunpack.c.l.b16 %v849
        %v973 = vunpack.c.l.b16 %v850
        %v974 = vunpack.c.l.b16 %v851
        %v975 = vunpack.c.l.b16 %v852
        %v976 = vunpack.c.l.b16 %v853
        %v977 = vunpack.c.l.b16 %v854
        %v978 = vunpack.c.l.b16 %v855
        %v979 = vpack.c.b16 %v972, %v971
        %v980 = vpack.c.b16 %v974, %v973
        %v981 = vpack.c.b16 %v976, %v975
        %v982 = vpack.c.b16 %v978, %v977
        %v984 = vsel %vm885, %v979, 0
        %v987 = vsel %vm885, %v980, 0
        %v990 = vsel %vm885, %v981, 0
        %v993 = vsel %vm885, %v982, 0
        %995 = vmatprep.subr.bf16.mxu0 0
        %996 = vmatpush1.bf16.msra.mxu0 %v790
        %997 = vmatprep.subr.bf16.mxu0 0
        %998 = vmatpush1.bf16.msra.mxu0 0
        %999 = vmatprep.subr.bf16.mxu0 0
        %1000 = vmatpush1.bf16.msra.mxu0 0
        %1001 = vmatprep.subr.bf16.mxu0 0
        %1002 = vmatpush1.bf16.msra.mxu0 0
        %1003 = vmatprep.subr.bf16.mxu0 0
        %1004 = vmatpush1.bf16.msra.mxu0 0
        %1005 = vmatprep.subr.bf16.mxu0 0
        %1006 = vmatpush1.bf16.msra.mxu0 0
        %1007 = vmatprep.subr.bf16.mxu0 0
        %1008 = vmatpush1.bf16.msra.mxu0 0
        %1009 = vmatprep.subr.bf16.mxu0 0
        %1010 = vmatpush1.bf16.msra.mxu0 0
        %1011 = vmatprep.subr.bf16.mxu0 0
        %1012 = vmatpush1.bf16.msra.mxu0 0
        %1013 = vmatprep.subr.bf16.mxu0 0
        %1014 = vmatpush1.bf16.msra.mxu0 0
        %1015 = vmatprep.subr.bf16.mxu0 0
        %1016 = vmatpush1.bf16.msra.mxu0 0
        %1017 = vmatprep.subr.bf16.mxu0 0
        %1018 = vmatpush1.bf16.msra.mxu0 0
        %1019 = vmatprep.subr.bf16.mxu0 0
        %1020 = vmatpush1.bf16.msra.mxu0 0
        %1021 = vmatprep.subr.bf16.mxu0 0
        %1022 = vmatpush1.bf16.msra.mxu0 0
        %1023 = vmatprep.subr.bf16.mxu0 0
        %1024 = vmatpush1.bf16.msra.mxu0 0
        %1025 = vmatprep.subr.bf16.mxu0 0
        %1026 = vmatpush1.bf16.msra.mxu0 0
        %1027 = vmatprep.mubr.bf16.mxu0 0
        %1028 = vmatmul.mubr.bf16.gmra.mrb[0].mxu0 %v984
        %v1029 = vpop.f32.mrb[0].mxu0
        %v1030 = vadd.f32 %v933, %v1029
        %v1031 = vpop.f32.mrb[0].mxu0
        %v1032 = vpop.f32.mrb[0].mxu0
        %v1033 = vadd.f32 %v936, %v1032
        %v1034 = vpop.f32.mrb[0].mxu0
        %1035 = vmatprep.mubr.bf16.mxu0 0
        %1036 = vmatmul.mubr.bf16.gmra.mrb[0].mxu0 %v987
        %v1037 = vpop.f32.mrb[0].mxu0
        %v1038 = vadd.f32 %v941, %v1037
        %v1039 = vpop.f32.mrb[0].mxu0
        %v1040 = vpop.f32.mrb[0].mxu0
        %v1041 = vadd.f32 %v944, %v1040
        %v1042 = vpop.f32.mrb[0].mxu0
        %1043 = vmatprep.mubr.bf16.mxu0 0
        %1044 = vmatmul.mubr.bf16.gmra.mrb[0].mxu0 %v990
        %v1045 = vpop.f32.mrb[0].mxu0
        %v1046 = vadd.f32 %v949, %v1045
        %v1047 = vpop.f32.mrb[0].mxu0
        %v1048 = vpop.f32.mrb[0].mxu0
        %v1049 = vadd.f32 %v952, %v1048
        %v1050 = vpop.f32.mrb[0].mxu0
        %1051 = vmatprep.mubr.bf16.mxu0 0
        %1052 = vmatmul.mubr.bf16.gmra.mrb[0].mxu0 %v993
        %v1053 = vpop.f32.mrb[0].mxu0
        %v1054 = vadd.f32 %v957, %v1053
        %v1055 = vpop.f32.mrb[0].mxu0
        %v1056 = vpop.f32.mrb[0].mxu0
        %v1057 = vadd.f32 %v960, %v1056
        %v1058 = vpop.f32.mrb[0].mxu0
        %1059 = vdwg.mxu0
        %s1060 = scalar_lea.vmem %s5, 64
        %v1061 = vld [vmem:[%s1060] sm:$0xf]
        %v1062 = vld [vmem:[%s1060 + $0x4] sm:$0xf]
        %v1063 = vld [vmem:[%s1060 + $0x8] sm:$0xf]
        %v1064 = vld [vmem:[%s1060 + $0xc] sm:$0xf]
        %v1065 = vld [vmem:[%s1060 + $0x10] sm:$0xf]
        %v1066 = vld [vmem:[%s1060 + $0x14] sm:$0xf]
        %v1067 = vld [vmem:[%s1060 + $0x18] sm:$0xf]
        %v1068 = vld [vmem:[%s1060 + $0x1c] sm:$0xf]
        %v1077 = vunpack.c.l.b16 %v1061
        %v1078 = vunpack.c.l.b16 %v1062
        %v1079 = vunpack.c.l.b16 %v1063
        %v1080 = vunpack.c.l.b16 %v1064
        %v1081 = vunpack.c.l.b16 %v1065
        %v1082 = vunpack.c.l.b16 %v1066
        %v1083 = vunpack.c.l.b16 %v1067
        %v1084 = vunpack.c.l.b16 %v1068
        %v1085 = vpack.c.b16 %v1078, %v1077
        %v1086 = vpack.c.b16 %v1080, %v1079
        %v1087 = vpack.c.b16 %v1082, %v1081
        %v1088 = vpack.c.b16 %v1084, %v1083
        %v1090 = vsel %vm885, %v1085, 0
        %v1093 = vsel %vm885, %v1086, 0
        %v1096 = vsel %vm885, %v1087, 0
        %v1099 = vsel %vm885, %v1088, 0
        %1101 = vmatprep.subr.bf16.mxu0 0
        %1102 = vmatpush1.bf16.msra.mxu0 %v828
        %1103 = vmatprep.subr.bf16.mxu0 0
        %1104 = vmatpush1.bf16.msra.mxu0 0
        %1105 = vmatprep.subr.bf16.mxu0 0
        %1106 = vmatpush1.bf16.msra.mxu0 0
        %1107 = vmatprep.subr.bf16.mxu0 0
        %1108 = vmatpush1.bf16.msra.mxu0 0
        %1109 = vmatprep.subr.bf16.mxu0 0
        %1110 = vmatpush1.bf16.msra.mxu0 0
        %1111 = vmatprep.subr.bf16.mxu0 0
        %1112 = vmatpush1.bf16.msra.mxu0 0
        %1113 = vmatprep.subr.bf16.mxu0 0
        %1114 = vmatpush1.bf16.msra.mxu0 0
        %1115 = vmatprep.subr.bf16.mxu0 0
        %1116 = vmatpush1.bf16.msra.mxu0 0
        %1117 = vmatprep.subr.bf16.mxu0 0
        %1118 = vmatpush1.bf16.msra.mxu0 0
        %1119 = vmatprep.subr.bf16.mxu0 0
        %1120 = vmatpush1.bf16.msra.mxu0 0
        %1121 = vmatprep.subr.bf16.mxu0 0
        %1122 = vmatpush1.bf16.msra.mxu0 0
        %1123 = vmatprep.subr.bf16.mxu0 0
        %1124 = vmatpush1.bf16.msra.mxu0 0
        %1125 = vmatprep.subr.bf16.mxu0 0
        %1126 = vmatpush1.bf16.msra.mxu0 0
        %1127 = vmatprep.subr.bf16.mxu0 0
        %1128 = vmatpush1.bf16.msra.mxu0 0
        %1129 = vmatprep.subr.bf16.mxu0 0
        %1130 = vmatpush1.bf16.msra.mxu0 0
        %1131 = vmatprep.subr.bf16.mxu0 0
        %1132 = vmatpush1.bf16.msra.mxu0 0
        %1133 = vmatprep.mubr.bf16.mxu0 0
        %1134 = vmatmul.mubr.bf16.gmra.mrb[0].mxu0 %v1090
        %v1135 = vpop.f32.mrb[0].mxu0
        %v1136 = vadd.f32 0.0, %v1135
        %v1137 = vpop.f32.mrb[0].mxu0
        %v1138 = vpop.f32.mrb[0].mxu0
        %v1139 = vadd.f32 0.0, %v1138
        %v1140 = vpop.f32.mrb[0].mxu0
        %1141 = vmatprep.mubr.bf16.mxu0 0
        %1142 = vmatmul.mubr.bf16.gmra.mrb[0].mxu0 %v1093
        %v1143 = vpop.f32.mrb[0].mxu0
        %v1144 = vadd.f32 0.0, %v1143
        %v1145 = vpop.f32.mrb[0].mxu0
        %v1146 = vpop.f32.mrb[0].mxu0
        %v1147 = vadd.f32 0.0, %v1146
        %v1148 = vpop.f32.mrb[0].mxu0
        %1149 = vmatprep.mubr.bf16.mxu0 0
        %1150 = vmatmul.mubr.bf16.gmra.mrb[0].mxu0 %v1096
        %v1151 = vpop.f32.mrb[0].mxu0
        %v1152 = vadd.f32 0.0, %v1151
        %v1153 = vpop.f32.mrb[0].mxu0
        %v1154 = vpop.f32.mrb[0].mxu0
        %v1155 = vadd.f32 0.0, %v1154
        %v1156 = vpop.f32.mrb[0].mxu0
        %1157 = vmatprep.mubr.bf16.mxu0 0
        %1158 = vmatmul.mubr.bf16.gmra.mrb[0].mxu0 %v1099
        %v1159 = vpop.f32.mrb[0].mxu0
        %v1160 = vadd.f32 0.0, %v1159
        %v1161 = vpop.f32.mrb[0].mxu0
        %v1162 = vpop.f32.mrb[0].mxu0
        %v1163 = vadd.f32 0.0, %v1162
        %v1164 = vpop.f32.mrb[0].mxu0
        %1165 = vdwg.mxu0
        %v1166 = vadd.f32 %v1030, %v1136
        %v1167 = vadd.f32 %v1033, %v1139
        %v1168 = vadd.f32 %v1038, %v1144
        %v1169 = vadd.f32 %v1041, %v1147
        %v1170 = vadd.f32 %v1046, %v1152
        %v1171 = vadd.f32 %v1049, %v1155
        %v1172 = vadd.f32 %v1054, %v1160
        %v1173 = vadd.f32 %v1057, %v1163
        %s1174 = scalar_lea.vmem %s5, 96
        %v1175 = vld [vmem:[%s1174] sm:$0xf]
        %v1176 = vld [vmem:[%s1174 + $0x4] sm:$0xf]
        %v1177 = vld [vmem:[%s1174 + $0x8] sm:$0xf]
        %v1178 = vld [vmem:[%s1174 + $0xc] sm:$0xf]
        %v1179 = vld [vmem:[%s1174 + $0x10] sm:$0xf]
        %v1180 = vld [vmem:[%s1174 + $0x14] sm:$0xf]
        %v1181 = vld [vmem:[%s1174 + $0x18] sm:$0xf]
        %v1182 = vld [vmem:[%s1174 + $0x1c] sm:$0xf]
        %v1191 = vunpack.c.l.b16 %v1175
        %v1192 = vunpack.c.l.b16 %v1176
        %v1193 = vunpack.c.l.b16 %v1177
        %v1194 = vunpack.c.l.b16 %v1178
        %v1195 = vunpack.c.l.b16 %v1179
        %v1196 = vunpack.c.l.b16 %v1180
        %v1197 = vunpack.c.l.b16 %v1181
        %v1198 = vunpack.c.l.b16 %v1182
        %v1199 = vpack.c.b16 %v1192, %v1191
        %v1200 = vpack.c.b16 %v1194, %v1193
        %v1201 = vpack.c.b16 %v1196, %v1195
        %v1202 = vpack.c.b16 %v1198, %v1197
        %v1204 = vsel %vm885, %v1199, 0
        %v1207 = vsel %vm885, %v1200, 0
        %v1210 = vsel %vm885, %v1201, 0
        %v1213 = vsel %vm885, %v1202, 0
        %1215 = vmatprep.subr.bf16.mxu0 0
        %1216 = vmatpush1.bf16.msra.mxu0 %v847
        %1217 = vmatprep.subr.bf16.mxu0 0
        %1218 = vmatpush1.bf16.msra.mxu0 0
        %1219 = vmatprep.subr.bf16.mxu0 0
        %1220 = vmatpush1.bf16.msra.mxu0 0
        %1221 = vmatprep.subr.bf16.mxu0 0
        %1222 = vmatpush1.bf16.msra.mxu0 0
        %1223 = vmatprep.subr.bf16.mxu0 0
        %1224 = vmatpush1.bf16.msra.mxu0 0
        %1225 = vmatprep.subr.bf16.mxu0 0
        %1226 = vmatpush1.bf16.msra.mxu0 0
        %1227 = vmatprep.subr.bf16.mxu0 0
        %1228 = vmatpush1.bf16.msra.mxu0 0
        %1229 = vmatprep.subr.bf16.mxu0 0
        %1230 = vmatpush1.bf16.msra.mxu0 0
        %1231 = vmatprep.subr.bf16.mxu0 0
        %1232 = vmatpush1.bf16.msra.mxu0 0
        %1233 = vmatprep.subr.bf16.mxu0 0
        %1234 = vmatpush1.bf16.msra.mxu0 0
        %1235 = vmatprep.subr.bf16.mxu0 0
        %1236 = vmatpush1.bf16.msra.mxu0 0
        %1237 = vmatprep.subr.bf16.mxu0 0
        %1238 = vmatpush1.bf16.msra.mxu0 0
        %1239 = vmatprep.subr.bf16.mxu0 0
        %1240 = vmatpush1.bf16.msra.mxu0 0
        %1241 = vmatprep.subr.bf16.mxu0 0
        %1242 = vmatpush1.bf16.msra.mxu0 0
        %1243 = vmatprep.subr.bf16.mxu0 0
        %1244 = vmatpush1.bf16.msra.mxu0 0
        %1245 = vmatprep.subr.bf16.mxu0 0
        %1246 = vmatpush1.bf16.msra.mxu0 0
        %1247 = vmatprep.mubr.bf16.mxu0 0
        %1248 = vmatmul.mubr.bf16.gmra.mrb[0].mxu0 %v1204
        %v1249 = vpop.f32.mrb[0].mxu0
        %v1250 = vadd.f32 0.0, %v1249
        %v1251 = vpop.f32.mrb[0].mxu0
        %v1252 = vpop.f32.mrb[0].mxu0
        %v1253 = vadd.f32 0.0, %v1252
        %v1254 = vpop.f32.mrb[0].mxu0
        %1255 = vmatprep.mubr.bf16.mxu0 0
        %1256 = vmatmul.mubr.bf16.gmra.mrb[0].mxu0 %v1207
        %v1257 = vpop.f32.mrb[0].mxu0
        %v1258 = vadd.f32 0.0, %v1257
        %v1259 = vpop.f32.mrb[0].mxu0
        %v1260 = vpop.f32.mrb[0].mxu0
        %v1261 = vadd.f32 0.0, %v1260
        %v1262 = vpop.f32.mrb[0].mxu0
        %1263 = vmatprep.mubr.bf16.mxu0 0
        %1264 = vmatmul.mubr.bf16.gmra.mrb[0].mxu0 %v1210
        %v1265 = vpop.f32.mrb[0].mxu0
        %v1266 = vadd.f32 0.0, %v1265
        %v1267 = vpop.f32.mrb[0].mxu0
        %v1268 = vpop.f32.mrb[0].mxu0
        %v1269 = vadd.f32 0.0, %v1268
        %v1270 = vpop.f32.mrb[0].mxu0
        %1271 = vmatprep.mubr.bf16.mxu0 0
        %1272 = vmatmul.mubr.bf16.gmra.mrb[0].mxu0 %v1213
        %v1273 = vpop.f32.mrb[0].mxu0
        %v1274 = vadd.f32 0.0, %v1273
        %v1275 = vpop.f32.mrb[0].mxu0
        %v1276 = vpop.f32.mrb[0].mxu0
        %v1277 = vadd.f32 0.0, %v1276
        %v1278 = vpop.f32.mrb[0].mxu0
        %1279 = vdwg.mxu0
        %v1280 = vadd.f32 %v1166, %v1250
        %v1281 = vadd.f32 %v1167, %v1253
        %v1282 = vadd.f32 %v1168, %v1258
        %v1283 = vadd.f32 %v1169, %v1261
        %v1284 = vadd.f32 %v1170, %v1266
        %v1285 = vadd.f32 %v1171, %v1269
        %v1286 = vadd.f32 %v1172, %v1274
        %v1287 = vadd.f32 %v1173, %v1277
        %v1288 = vpack.c.bf16 %v1281, %v1280
        %v1289 = vld [vmem:[%s7] sm:$0xf]
        %v1290 = vld [vmem:[%s7 + $0x4] sm:$0xf]
        %v1291 = vpack.c.bf16 %v1283, %v1282
        %s1292 = scalar_lea.vmem %s7, 8
        %v1293 = vld [vmem:[%s1292] sm:$0xf]
        %v1294 = vld [vmem:[%s1292 + $0x4] sm:$0xf]
        %v1297 = vunpack.c.l.b16 %v1293
        %v1298 = vunpack.c.l.b16 %v1294
        %v1299 = vpack.c.b16 %v1298, %v1297
        %v1302 = vsel %vm885, %v1291, 0
        %1304 = vmatprep.subr.bf16.mxu0 0
        %1305 = vmatpush1.bf16.msra.mxu0 %v1299
        %1306 = vmatprep.subr.bf16.mxu0 0
        %1307 = vmatpush1.bf16.msra.mxu0 0
        %1308 = vmatprep.subr.bf16.mxu0 0
        %1309 = vmatpush1.bf16.msra.mxu0 0
        %1310 = vmatprep.subr.bf16.mxu0 0
        %1311 = vmatpush1.bf16.msra.mxu0 0
        %1312 = vmatprep.subr.bf16.mxu0 0
        %1313 = vmatpush1.bf16.msra.mxu0 0
        %1314 = vmatprep.subr.bf16.mxu0 0
        %1315 = vmatpush1.bf16.msra.mxu0 0
        %1316 = vmatprep.subr.bf16.mxu0 0
        %1317 = vmatpush1.bf16.msra.mxu0 0
        %1318 = vmatprep.subr.bf16.mxu0 0
        %1319 = vmatpush1.bf16.msra.mxu0 0
        %1320 = vmatprep.subr.bf16.mxu0 0
        %1321 = vmatpush1.bf16.msra.mxu0 0
        %1322 = vmatprep.subr.bf16.mxu0 0
        %1323 = vmatpush1.bf16.msra.mxu0 0
        %1324 = vmatprep.subr.bf16.mxu0 0
        %1325 = vmatpush1.bf16.msra.mxu0 0
        %1326 = vmatprep.subr.bf16.mxu0 0
        %1327 = vmatpush1.bf16.msra.mxu0 0
        %1328 = vmatprep.subr.bf16.mxu0 0
        %1329 = vmatpush1.bf16.msra.mxu0 0
        %1330 = vmatprep.subr.bf16.mxu0 0
        %1331 = vmatpush1.bf16.msra.mxu0 0
        %1332 = vmatprep.subr.bf16.mxu0 0
        %1333 = vmatpush1.bf16.msra.mxu0 0
        %1334 = vmatprep.subr.bf16.mxu0 0
        %1335 = vmatpush1.bf16.msra.mxu0 0
        %1336 = vmatprep.mubr.bf16.mxu0 0
        %1337 = vmatmul.mubr.bf16.gmra.mrb[0].mxu0 %v1302
        %v1338 = vpop.f32.mrb[0].mxu0
        %v1339 = vadd.f32 0.0, %v1338
        %v1340 = vpop.f32.mrb[0].mxu0
        %v1341 = vpop.f32.mrb[0].mxu0
        %v1342 = vadd.f32 0.0, %v1341
        %v1343 = vpop.f32.mrb[0].mxu0
        %1344 = vdwg.mxu0
        %v1347 = vunpack.c.l.b16 %v1289
        %v1348 = vunpack.c.l.b16 %v1290
        %v1349 = vpack.c.b16 %v1348, %v1347
        %v1352 = vsel %vm885, %v1288, 0
        %1354 = vmatprep.subr.bf16.mxu0 0
        %1355 = vmatpush1.bf16.msra.mxu0 %v1349
        %1356 = vmatprep.subr.bf16.mxu0 0
        %1357 = vmatpush1.bf16.msra.mxu0 0
        %1358 = vmatprep.subr.bf16.mxu0 0
        %1359 = vmatpush1.bf16.msra.mxu0 0
        %1360 = vmatprep.subr.bf16.mxu0 0
        %1361 = vmatpush1.bf16.msra.mxu0 0
        %1362 = vmatprep.subr.bf16.mxu0 0
        %1363 = vmatpush1.bf16.msra.mxu0 0
        %1364 = vmatprep.subr.bf16.mxu0 0
        %1365 = vmatpush1.bf16.msra.mxu0 0
        %1366 = vmatprep.subr.bf16.mxu0 0
        %1367 = vmatpush1.bf16.msra.mxu0 0
        %1368 = vmatprep.subr.bf16.mxu0 0
        %1369 = vmatpush1.bf16.msra.mxu0 0
        %1370 = vmatprep.subr.bf16.mxu0 0
        %1371 = vmatpush1.bf16.msra.mxu0 0
        %1372 = vmatprep.subr.bf16.mxu0 0
        %1373 = vmatpush1.bf16.msra.mxu0 0
        %1374 = vmatprep.subr.bf16.mxu0 0
        %1375 = vmatpush1.bf16.msra.mxu0 0
        %1376 = vmatprep.subr.bf16.mxu0 0
        %1377 = vmatpush1.bf16.msra.mxu0 0
        %1378 = vmatprep.subr.bf16.mxu0 0
        %1379 = vmatpush1.bf16.msra.mxu0 0
        %1380 = vmatprep.subr.bf16.mxu0 0
        %1381 = vmatpush1.bf16.msra.mxu0 0
        %1382 = vmatprep.subr.bf16.mxu0 0
        %1383 = vmatpush1.bf16.msra.mxu0 0
        %1384 = vmatprep.subr.bf16.mxu0 0
        %1385 = vmatpush1.bf16.msra.mxu0 0
        %1386 = vmatprep.mubr.bf16.mxu0 0
        %1387 = vmatmul.mubr.bf16.gmra.mrb[0].mxu0 %v1352
        %v1388 = vpop.f32.mrb[0].mxu0
        %v1389 = vadd.f32 %v1339, %v1388
        %v1390 = vpop.f32.mrb[0].mxu0
        %v1391 = vpop.f32.mrb[0].mxu0
        %v1392 = vadd.f32 %v1342, %v1391
        %v1393 = vpop.f32.mrb[0].mxu0
        %1394 = vdwg.mxu0
        %v1395 = vpack.c.bf16 %v1285, %v1284
        %s1396 = scalar_lea.vmem %s7, 16
        %v1397 = vld [vmem:[%s1396] sm:$0xf]
        %v1398 = vld [vmem:[%s1396 + $0x4] sm:$0xf]
        %v1401 = vunpack.c.l.b16 %v1397
        %v1402 = vunpack.c.l.b16 %v1398
        %v1403 = vpack.c.b16 %v1402, %v1401
        %v1406 = vsel %vm885, %v1395, 0
        %1408 = vmatprep.subr.bf16.mxu0 0
        %1409 = vmatpush1.bf16.msra.mxu0 %v1403
        %1410 = vmatprep.subr.bf16.mxu0 0
        %1411 = vmatpush1.bf16.msra.mxu0 0
        %1412 = vmatprep.subr.bf16.mxu0 0
        %1413 = vmatpush1.bf16.msra.mxu0 0
        %1414 = vmatprep.subr.bf16.mxu0 0
        %1415 = vmatpush1.bf16.msra.mxu0 0
        %1416 = vmatprep.subr.bf16.mxu0 0
        %1417 = vmatpush1.bf16.msra.mxu0 0
        %1418 = vmatprep.subr.bf16.mxu0 0
        %1419 = vmatpush1.bf16.msra.mxu0 0
        %1420 = vmatprep.subr.bf16.mxu0 0
        %1421 = vmatpush1.bf16.msra.mxu0 0
        %1422 = vmatprep.subr.bf16.mxu0 0
        %1423 = vmatpush1.bf16.msra.mxu0 0
        %1424 = vmatprep.subr.bf16.mxu0 0
        %1425 = vmatpush1.bf16.msra.mxu0 0
        %1426 = vmatprep.subr.bf16.mxu0 0
        %1427 = vmatpush1.bf16.msra.mxu0 0
        %1428 = vmatprep.subr.bf16.mxu0 0
        %1429 = vmatpush1.bf16.msra.mxu0 0
        %1430 = vmatprep.subr.bf16.mxu0 0
        %1431 = vmatpush1.bf16.msra.mxu0 0
        %1432 = vmatprep.subr.bf16.mxu0 0
        %1433 = vmatpush1.bf16.msra.mxu0 0
        %1434 = vmatprep.subr.bf16.mxu0 0
        %1435 = vmatpush1.bf16.msra.mxu0 0
        %1436 = vmatprep.subr.bf16.mxu0 0
        %1437 = vmatpush1.bf16.msra.mxu0 0
        %1438 = vmatprep.subr.bf16.mxu0 0
        %1439 = vmatpush1.bf16.msra.mxu0 0
        %1440 = vmatprep.mubr.bf16.mxu0 0
        %1441 = vmatmul.mubr.bf16.gmra.mrb[0].mxu0 %v1406
        %v1442 = vpop.f32.mrb[0].mxu0
        %v1443 = vadd.f32 0.0, %v1442
        %v1444 = vpop.f32.mrb[0].mxu0
        %v1445 = vpop.f32.mrb[0].mxu0
        %v1446 = vadd.f32 0.0, %v1445
        %v1447 = vpop.f32.mrb[0].mxu0
        %1448 = vdwg.mxu0
        %v1449 = vadd.f32 %v1389, %v1443
        %v1450 = vadd.f32 %v1392, %v1446
        %v1451 = vpack.c.bf16 %v1287, %v1286
        %s1452 = scalar_lea.vmem %s7, 24
        %v1453 = vld [vmem:[%s1452] sm:$0xf]
        %v1454 = vld [vmem:[%s1452 + $0x4] sm:$0xf]
        %v1457 = vunpack.c.l.b16 %v1453
        %v1458 = vunpack.c.l.b16 %v1454
        %v1459 = vpack.c.b16 %v1458, %v1457
        %v1462 = vsel %vm885, %v1451, 0
        %1464 = vmatprep.subr.bf16.mxu0 0
        %1465 = vmatpush1.bf16.msra.mxu0 %v1459
        %1466 = vmatprep.subr.bf16.mxu0 0
        %1467 = vmatpush1.bf16.msra.mxu0 0
        %1468 = vmatprep.subr.bf16.mxu0 0
        %1469 = vmatpush1.bf16.msra.mxu0 0
        %1470 = vmatprep.subr.bf16.mxu0 0
        %1471 = vmatpush1.bf16.msra.mxu0 0
        %1472 = vmatprep.subr.bf16.mxu0 0
        %1473 = vmatpush1.bf16.msra.mxu0 0
        %1474 = vmatprep.subr.bf16.mxu0 0
        %1475 = vmatpush1.bf16.msra.mxu0 0
        %1476 = vmatprep.subr.bf16.mxu0 0
        %1477 = vmatpush1.bf16.msra.mxu0 0
        %1478 = vmatprep.subr.bf16.mxu0 0
        %1479 = vmatpush1.bf16.msra.mxu0 0
        %1480 = vmatprep.subr.bf16.mxu0 0
        %1481 = vmatpush1.bf16.msra.mxu0 0
        %1482 = vmatprep.subr.bf16.mxu0 0
        %1483 = vmatpush1.bf16.msra.mxu0 0
        %1484 = vmatprep.subr.bf16.mxu0 0
        %1485 = vmatpush1.bf16.msra.mxu0 0
        %1486 = vmatprep.subr.bf16.mxu0 0
        %1487 = vmatpush1.bf16.msra.mxu0 0
        %1488 = vmatprep.subr.bf16.mxu0 0
        %1489 = vmatpush1.bf16.msra.mxu0 0
        %1490 = vmatprep.subr.bf16.mxu0 0
        %1491 = vmatpush1.bf16.msra.mxu0 0
        %1492 = vmatprep.subr.bf16.mxu0 0
        %1493 = vmatpush1.bf16.msra.mxu0 0
        %1494 = vmatprep.subr.bf16.mxu0 0
        %1495 = vmatpush1.bf16.msra.mxu0 0
        %1496 = vmatprep.mubr.bf16.mxu0 0
        %1497 = vmatmul.mubr.bf16.gmra.mrb[0].mxu0 %v1462
        %v1498 = vpop.f32.mrb[0].mxu0
        %v1499 = vadd.f32 0.0, %v1498
        %v1500 = vpop.f32.mrb[0].mxu0
        %v1501 = vpop.f32.mrb[0].mxu0
        %v1502 = vadd.f32 0.0, %v1501
        %v1503 = vpop.f32.mrb[0].mxu0
        %1504 = vdwg.mxu0
        %v1505 = vadd.f32 %v1449, %v1499
        %v1506 = vadd.f32 %v1450, %v1502
        %v1507 = vld [vmem:[%s8] sm:$0xff]
        %v1508 = vld [vmem:[%s8 + $0x8] sm:$0xff]
        %1510 = vset.pattern.permute.xlu0 0
        %1511 = vperm.xlu0 %1510, %v1507
        %v1512 = vpop.permute.xlu0 %1511
        %1515 = vset.pattern.permute.xlu0 0
        %1516 = vperm.xlu0 %1515, %v1508
        %v1517 = vpop.permute.xlu0 %1516
        %v1519 = vadd.f32 %v1505, %v1512
        %v1520 = vadd.f32 %v1506, %v1517
        %v1521 = vmax.f32 %v1519, 0.0
        %v1522 = vmax.f32 %v1520, 0.0
        %v1523 = vld [vmem:[%s10] sm:$0x1]
        %s1524 = scalar_lea.vmem %s10, 1
        %v1525 = vld [vmem:[%s1524] sm:$0x1]
        %v1526 = vpack.c.bf16 %v1522, %v1521
        %1529 = vrot.lane.b32.xlu0 %v1521, 127
        %v1530 = vpop.permute.xlu0 %1529
        %1531 = vrot.lane.b32.xlu0 %v1522, 127
        %v1532 = vpop.permute.xlu0 %1531
        %vm1535 = vcmask 515072
        %v1536 = vsel %vm1535, %v1530, 0.0
        %v1537 = vsel %vm1535, %v1532, 0.0
        %v1539 = vlaneseq
        %v1540 = vshrl.u32 %v1539, 7
        %v1541 = vsub.s32 0, %v1540
        %v1542 = vrot.slane %v1523, %v1541
        %v1544 = vmul.f32 %v1536, %v1542
        %v1545 = vmul.f32 %v1537, %v1542
        %v1546 = vpack.c.bf16 %v1545, %v1544
        %1547 = vrot.lane.b32.xlu0 %v1521, 120
        %v1548 = vpop.permute.xlu0 %1547
        %1549 = vrot.lane.b32.xlu0 %v1522, 120
        %v1550 = vpop.permute.xlu0 %1549
        %vm1553 = vcmask 457728
        %v1554 = vsel %vm1553, %v1548, 0.0
        %v1555 = vsel %vm1553, %v1550, 0.0
        %v1557 = vlaneseq
        %v1558 = vshrl.u32 %v1557, 7
        %v1559 = vsub.s32 0, %v1558
        %v1560 = vrot.slane %v1525, %v1559
        %v1562 = vmul.f32 %v1554, %v1560
        %v1563 = vmul.f32 %v1555, %v1560
        %v1564 = vpack.c.bf16 %v1563, %v1562
        %1565 = vrot.lane.b32.xlu0 %v1521, 119
        %v1566 = vpop.permute.xlu0 %1565
        %1567 = vrot.lane.b32.xlu0 %v1522, 119
        %v1568 = vpop.permute.xlu0 %1567
        %vm1571 = vcmask 449536
        %v1572 = vsel %vm1571, %v1566, 0.0
        %v1573 = vsel %vm1571, %v1568, 0.0
        %v1574 = vmul.f32 %v1523, %v1525
        %v1576 = vlaneseq
        %v1577 = vshrl.u32 %v1576, 7
        %v1578 = vsub.s32 0, %v1577
        %v1579 = vrot.slane %v1574, %v1578
        %v1581 = vmul.f32 %v1572, %v1579
        %v1582 = vmul.f32 %v1573, %v1579
        %v1583 = vpack.c.bf16 %v1582, %v1581
        %v1584 = vld [vmem:[%s9] sm:$0xf]
        %v1585 = vld [vmem:[%s9 + $0x4] sm:$0xf]
        %v1586 = vld [vmem:[%s9 + $0x8] sm:$0xf]
        %v1587 = vld [vmem:[%s9 + $0xc] sm:$0xf]
        %s1588 = scalar_lea.vmem %s9, 16
        %v1589 = vld [vmem:[%s1588] sm:$0xf]
        %v1590 = vld [vmem:[%s1588 + $0x4] sm:$0xf]
        %v1591 = vld [vmem:[%s1588 + $0x8] sm:$0xf]
        %v1592 = vld [vmem:[%s1588 + $0xc] sm:$0xf]
        %v1597 = vunpack.c.l.b16 %v1589
        %v1598 = vunpack.c.l.b16 %v1590
        %v1599 = vunpack.c.l.b16 %v1591
        %v1600 = vunpack.c.l.b16 %v1592
        %v1601 = vpack.c.b16 %v1598, %v1597
        %v1602 = vpack.c.b16 %v1600, %v1599
        %v1604 = vsel %vm885, %v1601, 0
        %v1607 = vsel %vm885, %v1602, 0
        %1609 = vmatprep.subr.bf16.mxu0 0
        %1610 = vmatpush1.bf16.msra.mxu0 %v1546
        %1611 = vmatprep.subr.bf16.mxu0 0
        %1612 = vmatpush1.bf16.msra.mxu0 0
        %1613 = vmatprep.subr.bf16.mxu0 0
        %1614 = vmatpush1.bf16.msra.mxu0 0
        %1615 = vmatprep.subr.bf16.mxu0 0
        %1616 = vmatpush1.bf16.msra.mxu0 0
        %1617 = vmatprep.subr.bf16.mxu0 0
        %1618 = vmatpush1.bf16.msra.mxu0 0
        %1619 = vmatprep.subr.bf16.mxu0 0
        %1620 = vmatpush1.bf16.msra.mxu0 0
        %1621 = vmatprep.subr.bf16.mxu0 0
        %1622 = vmatpush1.bf16.msra.mxu0 0
        %1623 = vmatprep.subr.bf16.mxu0 0
        %1624 = vmatpush1.bf16.msra.mxu0 0
        %1625 = vmatprep.subr.bf16.mxu0 0
        %1626 = vmatpush1.bf16.msra.mxu0 0
        %1627 = vmatprep.subr.bf16.mxu0 0
        %1628 = vmatpush1.bf16.msra.mxu0 0
        %1629 = vmatprep.subr.bf16.mxu0 0
        %1630 = vmatpush1.bf16.msra.mxu0 0
        %1631 = vmatprep.subr.bf16.mxu0 0
        %1632 = vmatpush1.bf16.msra.mxu0 0
        %1633 = vmatprep.subr.bf16.mxu0 0
        %1634 = vmatpush1.bf16.msra.mxu0 0
        %1635 = vmatprep.subr.bf16.mxu0 0
        %1636 = vmatpush1.bf16.msra.mxu0 0
        %1637 = vmatprep.subr.bf16.mxu0 0
        %1638 = vmatpush1.bf16.msra.mxu0 0
        %1639 = vmatprep.subr.bf16.mxu0 0
        %1640 = vmatpush1.bf16.msra.mxu0 0
        %1641 = vmatprep.mubr.bf16.mxu0 0
        %1642 = vmatmul.mubr.bf16.gmra.mrb[0].mxu0 %v1604
        %v1643 = vpop.f32.mrb[0].mxu0
        %v1644 = vadd.f32 0.0, %v1643
        %v1645 = vpop.f32.mrb[0].mxu0
        %v1646 = vpop.f32.mrb[0].mxu0
        %v1647 = vadd.f32 0.0, %v1646
        %v1648 = vpop.f32.mrb[0].mxu0
        %1649 = vmatprep.mubr.bf16.mxu0 0
        %1650 = vmatmul.mubr.bf16.gmra.mrb[0].mxu0 %v1607
        %v1651 = vpop.f32.mrb[0].mxu0
        %v1652 = vadd.f32 0.0, %v1651
        %v1653 = vpop.f32.mrb[0].mxu0
        %v1654 = vpop.f32.mrb[0].mxu0
        %v1655 = vadd.f32 0.0, %v1654
        %v1656 = vpop.f32.mrb[0].mxu0
        %1657 = vdwg.mxu0
        %v1662 = vunpack.c.l.b16 %v1584
        %v1663 = vunpack.c.l.b16 %v1585
        %v1664 = vunpack.c.l.b16 %v1586
        %v1665 = vunpack.c.l.b16 %v1587
        %v1666 = vpack.c.b16 %v1663, %v1662
        %v1667 = vpack.c.b16 %v1665, %v1664
        %v1669 = vsel %vm885, %v1666, 0
        %v1672 = vsel %vm885, %v1667, 0
        %1674 = vmatprep.subr.bf16.mxu0 0
        %1675 = vmatpush1.bf16.msra.mxu0 %v1526
        %1676 = vmatprep.subr.bf16.mxu0 0
        %1677 = vmatpush1.bf16.msra.mxu0 0
        %1678 = vmatprep.subr.bf16.mxu0 0
        %1679 = vmatpush1.bf16.msra.mxu0 0
        %1680 = vmatprep.subr.bf16.mxu0 0
        %1681 = vmatpush1.bf16.msra.mxu0 0
        %1682 = vmatprep.subr.bf16.mxu0 0
        %1683 = vmatpush1.bf16.msra.mxu0 0
        %1684 = vmatprep.subr.bf16.mxu0 0
        %1685 = vmatpush1.bf16.msra.mxu0 0
        %1686 = vmatprep.subr.bf16.mxu0 0
        %1687 = vmatpush1.bf16.msra.mxu0 0
        %1688 = vmatprep.subr.bf16.mxu0 0
        %1689 = vmatpush1.bf16.msra.mxu0 0
        %1690 = vmatprep.subr.bf16.mxu0 0
        %1691 = vmatpush1.bf16.msra.mxu0 0
        %1692 = vmatprep.subr.bf16.mxu0 0
        %1693 = vmatpush1.bf16.msra.mxu0 0
        %1694 = vmatprep.subr.bf16.mxu0 0
        %1695 = vmatpush1.bf16.msra.mxu0 0
        %1696 = vmatprep.subr.bf16.mxu0 0
        %1697 = vmatpush1.bf16.msra.mxu0 0
        %1698 = vmatprep.subr.bf16.mxu0 0
        %1699 = vmatpush1.bf16.msra.mxu0 0
        %1700 = vmatprep.subr.bf16.mxu0 0
        %1701 = vmatpush1.bf16.msra.mxu0 0
        %1702 = vmatprep.subr.bf16.mxu0 0
        %1703 = vmatpush1.bf16.msra.mxu0 0
        %1704 = vmatprep.subr.bf16.mxu0 0
        %1705 = vmatpush1.bf16.msra.mxu0 0
        %1706 = vmatprep.mubr.bf16.mxu0 0
        %1707 = vmatmul.mubr.bf16.gmra.mrb[0].mxu0 %v1669
        %v1708 = vpop.f32.mrb[0].mxu0
        %v1709 = vadd.f32 %v1644, %v1708
        %v1710 = vpop.f32.mrb[0].mxu0
        %v1711 = vpop.f32.mrb[0].mxu0
        %v1712 = vadd.f32 %v1647, %v1711
        %v1713 = vpop.f32.mrb[0].mxu0
        %1714 = vmatprep.mubr.bf16.mxu0 0
        %1715 = vmatmul.mubr.bf16.gmra.mrb[0].mxu0 %v1672
        %v1716 = vpop.f32.mrb[0].mxu0
        %v1717 = vadd.f32 %v1652, %v1716
        %v1718 = vpop.f32.mrb[0].mxu0
        %v1719 = vpop.f32.mrb[0].mxu0
        %v1720 = vadd.f32 %v1655, %v1719
        %v1721 = vpop.f32.mrb[0].mxu0
        %1722 = vdwg.mxu0
        %s1723 = scalar_lea.vmem %s9, 32
        %v1724 = vld [vmem:[%s1723] sm:$0xf]
        %v1725 = vld [vmem:[%s1723 + $0x4] sm:$0xf]
        %v1726 = vld [vmem:[%s1723 + $0x8] sm:$0xf]
        %v1727 = vld [vmem:[%s1723 + $0xc] sm:$0xf]
        %v1732 = vunpack.c.l.b16 %v1724
        %v1733 = vunpack.c.l.b16 %v1725
        %v1734 = vunpack.c.l.b16 %v1726
        %v1735 = vunpack.c.l.b16 %v1727
        %v1736 = vpack.c.b16 %v1733, %v1732
        %v1737 = vpack.c.b16 %v1735, %v1734
        %v1739 = vsel %vm885, %v1736, 0
        %v1742 = vsel %vm885, %v1737, 0
        %1744 = vmatprep.subr.bf16.mxu0 0
        %1745 = vmatpush1.bf16.msra.mxu0 %v1564
        %1746 = vmatprep.subr.bf16.mxu0 0
        %1747 = vmatpush1.bf16.msra.mxu0 0
        %1748 = vmatprep.subr.bf16.mxu0 0
        %1749 = vmatpush1.bf16.msra.mxu0 0
        %1750 = vmatprep.subr.bf16.mxu0 0
        %1751 = vmatpush1.bf16.msra.mxu0 0
        %1752 = vmatprep.subr.bf16.mxu0 0
        %1753 = vmatpush1.bf16.msra.mxu0 0
        %1754 = vmatprep.subr.bf16.mxu0 0
        %1755 = vmatpush1.bf16.msra.mxu0 0
        %1756 = vmatprep.subr.bf16.mxu0 0
        %1757 = vmatpush1.bf16.msra.mxu0 0
        %1758 = vmatprep.subr.bf16.mxu0 0
        %1759 = vmatpush1.bf16.msra.mxu0 0
        %1760 = vmatprep.subr.bf16.mxu0 0
        %1761 = vmatpush1.bf16.msra.mxu0 0
        %1762 = vmatprep.subr.bf16.mxu0 0
        %1763 = vmatpush1.bf16.msra.mxu0 0
        %1764 = vmatprep.subr.bf16.mxu0 0
        %1765 = vmatpush1.bf16.msra.mxu0 0
        %1766 = vmatprep.subr.bf16.mxu0 0
        %1767 = vmatpush1.bf16.msra.mxu0 0
        %1768 = vmatprep.subr.bf16.mxu0 0
        %1769 = vmatpush1.bf16.msra.mxu0 0
        %1770 = vmatprep.subr.bf16.mxu0 0
        %1771 = vmatpush1.bf16.msra.mxu0 0
        %1772 = vmatprep.subr.bf16.mxu0 0
        %1773 = vmatpush1.bf16.msra.mxu0 0
        %1774 = vmatprep.subr.bf16.mxu0 0
        %1775 = vmatpush1.bf16.msra.mxu0 0
        %1776 = vmatprep.mubr.bf16.mxu0 0
        %1777 = vmatmul.mubr.bf16.gmra.mrb[0].mxu0 %v1739
        %v1778 = vpop.f32.mrb[0].mxu0
        %v1779 = vadd.f32 0.0, %v1778
        %v1780 = vpop.f32.mrb[0].mxu0
        %v1781 = vpop.f32.mrb[0].mxu0
        %v1782 = vadd.f32 0.0, %v1781
        %v1783 = vpop.f32.mrb[0].mxu0
        %1784 = vmatprep.mubr.bf16.mxu0 0
        %1785 = vmatmul.mubr.bf16.gmra.mrb[0].mxu0 %v1742
        %v1786 = vpop.f32.mrb[0].mxu0
        %v1787 = vadd.f32 0.0, %v1786
        %v1788 = vpop.f32.mrb[0].mxu0
        %v1789 = vpop.f32.mrb[0].mxu0
        %v1790 = vadd.f32 0.0, %v1789
        %v1791 = vpop.f32.mrb[0].mxu0
        %1792 = vdwg.mxu0
        %v1793 = vadd.f32 %v1709, %v1779
        %v1794 = vadd.f32 %v1712, %v1782
        %v1795 = vadd.f32 %v1717, %v1787
        %v1796 = vadd.f32 %v1720, %v1790
        %s1797 = scalar_lea.vmem %s9, 48
        %v1798 = vld [vmem:[%s1797] sm:$0xf]
        %v1799 = vld [vmem:[%s1797 + $0x4] sm:$0xf]
        %v1800 = vld [vmem:[%s1797 + $0x8] sm:$0xf]
        %v1801 = vld [vmem:[%s1797 + $0xc] sm:$0xf]
        %v1806 = vunpack.c.l.b16 %v1798
        %v1807 = vunpack.c.l.b16 %v1799
        %v1808 = vunpack.c.l.b16 %v1800
        %v1809 = vunpack.c.l.b16 %v1801
        %v1810 = vpack.c.b16 %v1807, %v1806
        %v1811 = vpack.c.b16 %v1809, %v1808
        %v1813 = vsel %vm885, %v1810, 0
        %v1816 = vsel %vm885, %v1811, 0
        %1818 = vmatprep.subr.bf16.mxu0 0
        %1819 = vmatpush1.bf16.msra.mxu0 %v1583
        %1820 = vmatprep.subr.bf16.mxu0 0
        %1821 = vmatpush1.bf16.msra.mxu0 0
        %1822 = vmatprep.subr.bf16.mxu0 0
        %1823 = vmatpush1.bf16.msra.mxu0 0
        %1824 = vmatprep.subr.bf16.mxu0 0
        %1825 = vmatpush1.bf16.msra.mxu0 0
        %1826 = vmatprep.subr.bf16.mxu0 0
        %1827 = vmatpush1.bf16.msra.mxu0 0
        %1828 = vmatprep.subr.bf16.mxu0 0
        %1829 = vmatpush1.bf16.msra.mxu0 0
        %1830 = vmatprep.subr.bf16.mxu0 0
        %1831 = vmatpush1.bf16.msra.mxu0 0
        %1832 = vmatprep.subr.bf16.mxu0 0
        %1833 = vmatpush1.bf16.msra.mxu0 0
        %1834 = vmatprep.subr.bf16.mxu0 0
        %1835 = vmatpush1.bf16.msra.mxu0 0
        %1836 = vmatprep.subr.bf16.mxu0 0
        %1837 = vmatpush1.bf16.msra.mxu0 0
        %1838 = vmatprep.subr.bf16.mxu0 0
        %1839 = vmatpush1.bf16.msra.mxu0 0
        %1840 = vmatprep.subr.bf16.mxu0 0
        %1841 = vmatpush1.bf16.msra.mxu0 0
        %1842 = vmatprep.subr.bf16.mxu0 0
        %1843 = vmatpush1.bf16.msra.mxu0 0
        %1844 = vmatprep.subr.bf16.mxu0 0
        %1845 = vmatpush1.bf16.msra.mxu0 0
        %1846 = vmatprep.subr.bf16.mxu0 0
        %1847 = vmatpush1.bf16.msra.mxu0 0
        %1848 = vmatprep.subr.bf16.mxu0 0
        %1849 = vmatpush1.bf16.msra.mxu0 0
        %1850 = vmatprep.mubr.bf16.mxu0 0
        %1851 = vmatmul.mubr.bf16.gmra.mrb[0].mxu0 %v1813
        %v1852 = vpop.f32.mrb[0].mxu0
        %v1853 = vadd.f32 0.0, %v1852
        %v1854 = vpop.f32.mrb[0].mxu0
        %v1855 = vpop.f32.mrb[0].mxu0
        %v1856 = vadd.f32 0.0, %v1855
        %v1857 = vpop.f32.mrb[0].mxu0
        %1858 = vmatprep.mubr.bf16.mxu0 0
        %1859 = vmatmul.mubr.bf16.gmra.mrb[0].mxu0 %v1816
        %v1860 = vpop.f32.mrb[0].mxu0
        %v1861 = vadd.f32 0.0, %v1860
        %v1862 = vpop.f32.mrb[0].mxu0
        %v1863 = vpop.f32.mrb[0].mxu0
        %v1864 = vadd.f32 0.0, %v1863
        %v1865 = vpop.f32.mrb[0].mxu0
        %1866 = vdwg.mxu0
        %v1867 = vadd.f32 %v1793, %v1853
        %v1868 = vadd.f32 %v1794, %v1856
        %v1869 = vadd.f32 %v1795, %v1861
        %v1870 = vadd.f32 %v1796, %v1864
        %v1871 = vpack.c.bf16 %v1867, %v1867
        %v1872 = vld [vmem:[%s11] sm:$0xff]
        %v1873 = vld [vmem:[%s11 + $0x8] sm:$0xff]
        %v1874 = vld [vmem:[%s11 + $0x10] sm:$0xff]
        %v1875 = vld [vmem:[%s11 + $0x18] sm:$0xff]
        %v1876 = vld [vmem:[%s11 + $0x20] sm:$0xff]
        %v1877 = vld [vmem:[%s11 + $0x28] sm:$0xff]
        %v1878 = vld [vmem:[%s11 + $0x30] sm:$0xff]
        %v1879 = vld [vmem:[%s11 + $0x38] sm:$0xff]
        %v1880 = vpack.c.bf16 %v1868, %v1868
        %s1881 = scalar_lea.vmem %s11, 64
        %v1882 = vld [vmem:[%s1881] sm:$0xff]
        %v1883 = vld [vmem:[%s1881 + $0x8] sm:$0xff]
        %v1884 = vld [vmem:[%s1881 + $0x10] sm:$0xff]
        %v1885 = vld [vmem:[%s1881 + $0x18] sm:$0xff]
        %v1886 = vld [vmem:[%s1881 + $0x20] sm:$0xff]
        %v1887 = vld [vmem:[%s1881 + $0x28] sm:$0xff]
        %v1888 = vld [vmem:[%s1881 + $0x30] sm:$0xff]
        %v1889 = vld [vmem:[%s1881 + $0x38] sm:$0xff]
        %v1898 = vunpack.c.l.b16 %v1882
        %v1899 = vunpack.c.h.b16 %v1882
        %v1900 = vunpack.c.l.b16 %v1883
        %v1901 = vunpack.c.h.b16 %v1883
        %v1902 = vunpack.c.l.b16 %v1884
        %v1903 = vunpack.c.h.b16 %v1884
        %v1904 = vunpack.c.l.b16 %v1885
        %v1905 = vunpack.c.h.b16 %v1885
        %v1906 = vunpack.c.l.b16 %v1886
        %v1907 = vunpack.c.h.b16 %v1886
        %v1908 = vunpack.c.l.b16 %v1887
        %v1909 = vunpack.c.h.b16 %v1887
        %v1910 = vunpack.c.l.b16 %v1888
        %v1911 = vunpack.c.h.b16 %v1888
        %v1912 = vunpack.c.l.b16 %v1889
        %v1913 = vunpack.c.h.b16 %v1889
        %v1914 = vpack.c.b16 %v1900, %v1898
        %v1915 = vpack.c.b16 %v1901, %v1899
        %v1916 = vpack.c.b16 %v1904, %v1902
        %v1917 = vpack.c.b16 %v1905, %v1903
        %v1918 = vpack.c.b16 %v1908, %v1906
        %v1919 = vpack.c.b16 %v1909, %v1907
        %v1920 = vpack.c.b16 %v1912, %v1910
        %v1921 = vpack.c.b16 %v1913, %v1911
        %vm1930 = vcmask 523264
        %v1932 = vsel %vm1930, %v1880, 0
        %1934 = vmatprep.subr.bf16.mxu0 %v1915
        %1935 = vmatpush1.bf16.msra.mxu0 %v1914
        %1936 = vmatprep.subr.bf16.mxu0 %v1917
        %1937 = vmatpush1.bf16.msra.mxu0 %v1916
        %1938 = vmatprep.subr.bf16.mxu0 %v1919
        %1939 = vmatpush1.bf16.msra.mxu0 %v1918
        %1940 = vmatprep.subr.bf16.mxu0 %v1921
        %1941 = vmatpush1.bf16.msra.mxu0 %v1920
        %1942 = vmatprep.subr.bf16.mxu0 0
        %1943 = vmatpush1.bf16.msra.mxu0 0
        %1944 = vmatprep.subr.bf16.mxu0 0
        %1945 = vmatpush1.bf16.msra.mxu0 0
        %1946 = vmatprep.subr.bf16.mxu0 0
        %1947 = vmatpush1.bf16.msra.mxu0 0
        %1948 = vmatprep.subr.bf16.mxu0 0
        %1949 = vmatpush1.bf16.msra.mxu0 0
        %1950 = vmatprep.subr.bf16.mxu0 0
        %1951 = vmatpush1.bf16.msra.mxu0 0
        %1952 = vmatprep.subr.bf16.mxu0 0
        %1953 = vmatpush1.bf16.msra.mxu0 0
        %1954 = vmatprep.subr.bf16.mxu0 0
        %1955 = vmatpush1.bf16.msra.mxu0 0
        %1956 = vmatprep.subr.bf16.mxu0 0
        %1957 = vmatpush1.bf16.msra.mxu0 0
        %1958 = vmatprep.subr.bf16.mxu0 0
        %1959 = vmatpush1.bf16.msra.mxu0 0
        %1960 = vmatprep.subr.bf16.mxu0 0
        %1961 = vmatpush1.bf16.msra.mxu0 0
        %1962 = vmatprep.subr.bf16.mxu0 0
        %1963 = vmatpush1.bf16.msra.mxu0 0
        %1964 = vmatprep.subr.bf16.mxu0 0
        %1965 = vmatpush1.bf16.msra.mxu0 0
        %1966 = vmatprep.mubr.bf16.mxu0 0
        %1967 = vmatmul.mubr.bf16.gmra.mrb[0].mxu0 %v1932
        %v1968 = vpop.f32.mrb[0].mxu0
        %v1969 = vadd.f32 0.0, %v1968
        %v1970 = vpop.f32.mrb[0].mxu0
        %v1971 = vadd.f32 0.0, %v1970
        %v1972 = vpop.f32.mrb[0].mxu0
        %v1973 = vpop.f32.mrb[0].mxu0
        %1974 = vdwg.mxu0
        %v1983 = vunpack.c.l.b16 %v1872
        %v1984 = vunpack.c.h.b16 %v1872
        %v1985 = vunpack.c.l.b16 %v1873
        %v1986 = vunpack.c.h.b16 %v1873
        %v1987 = vunpack.c.l.b16 %v1874
        %v1988 = vunpack.c.h.b16 %v1874
        %v1989 = vunpack.c.l.b16 %v1875
        %v1990 = vunpack.c.h.b16 %v1875
        %v1991 = vunpack.c.l.b16 %v1876
        %v1992 = vunpack.c.h.b16 %v1876
        %v1993 = vunpack.c.l.b16 %v1877
        %v1994 = vunpack.c.h.b16 %v1877
        %v1995 = vunpack.c.l.b16 %v1878
        %v1996 = vunpack.c.h.b16 %v1878
        %v1997 = vunpack.c.l.b16 %v1879
        %v1998 = vunpack.c.h.b16 %v1879
        %v1999 = vpack.c.b16 %v1985, %v1983
        %v2000 = vpack.c.b16 %v1986, %v1984
        %v2001 = vpack.c.b16 %v1989, %v1987
        %v2002 = vpack.c.b16 %v1990, %v1988
        %v2003 = vpack.c.b16 %v1993, %v1991
        %v2004 = vpack.c.b16 %v1994, %v1992
        %v2005 = vpack.c.b16 %v1997, %v1995
        %v2006 = vpack.c.b16 %v1998, %v1996
        %v2016 = vsel %vm1930, %v1871, 0
        %2018 = vmatprep.subr.bf16.mxu0 %v2000
        %2019 = vmatpush1.bf16.msra.mxu0 %v1999
        %2020 = vmatprep.subr.bf16.mxu0 %v2002
        %2021 = vmatpush1.bf16.msra.mxu0 %v2001
        %2022 = vmatprep.subr.bf16.mxu0 %v2004
        %2023 = vmatpush1.bf16.msra.mxu0 %v2003
        %2024 = vmatprep.subr.bf16.mxu0 %v2006
        %2025 = vmatpush1.bf16.msra.mxu0 %v2005
        %2026 = vmatprep.subr.bf16.mxu0 0
        %2027 = vmatpush1.bf16.msra.mxu0 0
        %2028 = vmatprep.subr.bf16.mxu0 0
        %2029 = vmatpush1.bf16.msra.mxu0 0
        %2030 = vmatprep.subr.bf16.mxu0 0
        %2031 = vmatpush1.bf16.msra.mxu0 0
        %2032 = vmatprep.subr.bf16.mxu0 0
        %2033 = vmatpush1.bf16.msra.mxu0 0
        %2034 = vmatprep.subr.bf16.mxu0 0
        %2035 = vmatpush1.bf16.msra.mxu0 0
        %2036 = vmatprep.subr.bf16.mxu0 0
        %2037 = vmatpush1.bf16.msra.mxu0 0
        %2038 = vmatprep.subr.bf16.mxu0 0
        %2039 = vmatpush1.bf16.msra.mxu0 0
        %2040 = vmatprep.subr.bf16.mxu0 0
        %2041 = vmatpush1.bf16.msra.mxu0 0
        %2042 = vmatprep.subr.bf16.mxu0 0
        %2043 = vmatpush1.bf16.msra.mxu0 0
        %2044 = vmatprep.subr.bf16.mxu0 0
        %2045 = vmatpush1.bf16.msra.mxu0 0
        %2046 = vmatprep.subr.bf16.mxu0 0
        %2047 = vmatpush1.bf16.msra.mxu0 0
        %2048 = vmatprep.subr.bf16.mxu0 0
        %2049 = vmatpush1.bf16.msra.mxu0 0
        %2050 = vmatprep.mubr.bf16.mxu0 0
        %2051 = vmatmul.mubr.bf16.gmra.mrb[0].mxu0 %v2016
        %v2052 = vpop.f32.mrb[0].mxu0
        %v2053 = vadd.f32 %v1969, %v2052
        %v2054 = vpop.f32.mrb[0].mxu0
        %v2055 = vadd.f32 %v1971, %v2054
        %v2056 = vpop.f32.mrb[0].mxu0
        %v2057 = vpop.f32.mrb[0].mxu0
        %2058 = vdwg.mxu0
        %v2059 = vpack.c.bf16 %v1869, %v1869
        %s2060 = scalar_lea.vmem %s11, 128
        %v2061 = vld [vmem:[%s2060] sm:$0xff]
        %v2062 = vld [vmem:[%s2060 + $0x8] sm:$0xff]
        %v2063 = vld [vmem:[%s2060 + $0x10] sm:$0xff]
        %v2064 = vld [vmem:[%s2060 + $0x18] sm:$0xff]
        %v2065 = vld [vmem:[%s2060 + $0x20] sm:$0xff]
        %v2066 = vld [vmem:[%s2060 + $0x28] sm:$0xff]
        %v2067 = vld [vmem:[%s2060 + $0x30] sm:$0xff]
        %v2068 = vld [vmem:[%s2060 + $0x38] sm:$0xff]
        %v2077 = vunpack.c.l.b16 %v2061
        %v2078 = vunpack.c.h.b16 %v2061
        %v2079 = vunpack.c.l.b16 %v2062
        %v2080 = vunpack.c.h.b16 %v2062
        %v2081 = vunpack.c.l.b16 %v2063
        %v2082 = vunpack.c.h.b16 %v2063
        %v2083 = vunpack.c.l.b16 %v2064
        %v2084 = vunpack.c.h.b16 %v2064
        %v2085 = vunpack.c.l.b16 %v2065
        %v2086 = vunpack.c.h.b16 %v2065
        %v2087 = vunpack.c.l.b16 %v2066
        %v2088 = vunpack.c.h.b16 %v2066
        %v2089 = vunpack.c.l.b16 %v2067
        %v2090 = vunpack.c.h.b16 %v2067
        %v2091 = vunpack.c.l.b16 %v2068
        %v2092 = vunpack.c.h.b16 %v2068
        %v2093 = vpack.c.b16 %v2079, %v2077
        %v2094 = vpack.c.b16 %v2080, %v2078
        %v2095 = vpack.c.b16 %v2083, %v2081
        %v2096 = vpack.c.b16 %v2084, %v2082
        %v2097 = vpack.c.b16 %v2087, %v2085
        %v2098 = vpack.c.b16 %v2088, %v2086
        %v2099 = vpack.c.b16 %v2091, %v2089
        %v2100 = vpack.c.b16 %v2092, %v2090
        %v2110 = vsel %vm1930, %v2059, 0
        %2112 = vmatprep.subr.bf16.mxu0 %v2094
        %2113 = vmatpush1.bf16.msra.mxu0 %v2093
        %2114 = vmatprep.subr.bf16.mxu0 %v2096
        %2115 = vmatpush1.bf16.msra.mxu0 %v2095
        %2116 = vmatprep.subr.bf16.mxu0 %v2098
        %2117 = vmatpush1.bf16.msra.mxu0 %v2097
        %2118 = vmatprep.subr.bf16.mxu0 %v2100
        %2119 = vmatpush1.bf16.msra.mxu0 %v2099
        %2120 = vmatprep.subr.bf16.mxu0 0
        %2121 = vmatpush1.bf16.msra.mxu0 0
        %2122 = vmatprep.subr.bf16.mxu0 0
        %2123 = vmatpush1.bf16.msra.mxu0 0
        %2124 = vmatprep.subr.bf16.mxu0 0
        %2125 = vmatpush1.bf16.msra.mxu0 0
        %2126 = vmatprep.subr.bf16.mxu0 0
        %2127 = vmatpush1.bf16.msra.mxu0 0
        %2128 = vmatprep.subr.bf16.mxu0 0
        %2129 = vmatpush1.bf16.msra.mxu0 0
        %2130 = vmatprep.subr.bf16.mxu0 0
        %2131 = vmatpush1.bf16.msra.mxu0 0
        %2132 = vmatprep.subr.bf16.mxu0 0
        %2133 = vmatpush1.bf16.msra.mxu0 0
        %2134 = vmatprep.subr.bf16.mxu0 0
        %2135 = vmatpush1.bf16.msra.mxu0 0
        %2136 = vmatprep.subr.bf16.mxu0 0
        %2137 = vmatpush1.bf16.msra.mxu0 0
        %2138 = vmatprep.subr.bf16.mxu0 0
        %2139 = vmatpush1.bf16.msra.mxu0 0
        %2140 = vmatprep.subr.bf16.mxu0 0
        %2141 = vmatpush1.bf16.msra.mxu0 0
        %2142 = vmatprep.subr.bf16.mxu0 0
        %2143 = vmatpush1.bf16.msra.mxu0 0
        %2144 = vmatprep.mubr.bf16.mxu0 0
        %2145 = vmatmul.mubr.bf16.gmra.mrb[0].mxu0 %v2110
        %v2146 = vpop.f32.mrb[0].mxu0
        %v2147 = vadd.f32 0.0, %v2146
        %v2148 = vpop.f32.mrb[0].mxu0
        %v2149 = vadd.f32 0.0, %v2148
        %v2150 = vpop.f32.mrb[0].mxu0
        %v2151 = vpop.f32.mrb[0].mxu0
        %2152 = vdwg.mxu0
        %v2153 = vadd.f32 %v2053, %v2147
        %v2154 = vadd.f32 %v2055, %v2149
        %v2155 = vpack.c.bf16 %v1870, %v1870
        %s2156 = scalar_lea.vmem %s11, 192
        %v2157 = vld [vmem:[%s2156] sm:$0xff]
        %v2158 = vld [vmem:[%s2156 + $0x8] sm:$0xff]
        %v2159 = vld [vmem:[%s2156 + $0x10] sm:$0xff]
        %v2160 = vld [vmem:[%s2156 + $0x18] sm:$0xff]
        %v2161 = vld [vmem:[%s2156 + $0x20] sm:$0xff]
        %v2162 = vld [vmem:[%s2156 + $0x28] sm:$0xff]
        %v2163 = vld [vmem:[%s2156 + $0x30] sm:$0xff]
        %v2164 = vld [vmem:[%s2156 + $0x38] sm:$0xff]
        %v2173 = vunpack.c.l.b16 %v2157
        %v2174 = vunpack.c.h.b16 %v2157
        %v2175 = vunpack.c.l.b16 %v2158
        %v2176 = vunpack.c.h.b16 %v2158
        %v2177 = vunpack.c.l.b16 %v2159
        %v2178 = vunpack.c.h.b16 %v2159
        %v2179 = vunpack.c.l.b16 %v2160
        %v2180 = vunpack.c.h.b16 %v2160
        %v2181 = vunpack.c.l.b16 %v2161
        %v2182 = vunpack.c.h.b16 %v2161
        %v2183 = vunpack.c.l.b16 %v2162
        %v2184 = vunpack.c.h.b16 %v2162
        %v2185 = vunpack.c.l.b16 %v2163
        %v2186 = vunpack.c.h.b16 %v2163
        %v2187 = vunpack.c.l.b16 %v2164
        %v2188 = vunpack.c.h.b16 %v2164
        %v2189 = vpack.c.b16 %v2175, %v2173
        %v2190 = vpack.c.b16 %v2176, %v2174
        %v2191 = vpack.c.b16 %v2179, %v2177
        %v2192 = vpack.c.b16 %v2180, %v2178
        %v2193 = vpack.c.b16 %v2183, %v2181
        %v2194 = vpack.c.b16 %v2184, %v2182
        %v2195 = vpack.c.b16 %v2187, %v2185
        %v2196 = vpack.c.b16 %v2188, %v2186
        %v2206 = vsel %vm1930, %v2155, 0
        %2208 = vmatprep.subr.bf16.mxu0 %v2190
        %2209 = vmatpush1.bf16.msra.mxu0 %v2189
        %2210 = vmatprep.subr.bf16.mxu0 %v2192
        %2211 = vmatpush1.bf16.msra.mxu0 %v2191
        %2212 = vmatprep.subr.bf16.mxu0 %v2194
        %2213 = vmatpush1.bf16.msra.mxu0 %v2193
        %2214 = vmatprep.subr.bf16.mxu0 %v2196
        %2215 = vmatpush1.bf16.msra.mxu0 %v2195
        %2216 = vmatprep.subr.bf16.mxu0 0
        %2217 = vmatpush1.bf16.msra.mxu0 0
        %2218 = vmatprep.subr.bf16.mxu0 0
        %2219 = vmatpush1.bf16.msra.mxu0 0
        %2220 = vmatprep.subr.bf16.mxu0 0
        %2221 = vmatpush1.bf16.msra.mxu0 0
        %2222 = vmatprep.subr.bf16.mxu0 0
        %2223 = vmatpush1.bf16.msra.mxu0 0
        %2224 = vmatprep.subr.bf16.mxu0 0
        %2225 = vmatpush1.bf16.msra.mxu0 0
        %2226 = vmatprep.subr.bf16.mxu0 0
        %2227 = vmatpush1.bf16.msra.mxu0 0
        %2228 = vmatprep.subr.bf16.mxu0 0
        %2229 = vmatpush1.bf16.msra.mxu0 0
        %2230 = vmatprep.subr.bf16.mxu0 0
        %2231 = vmatpush1.bf16.msra.mxu0 0
        %2232 = vmatprep.subr.bf16.mxu0 0
        %2233 = vmatpush1.bf16.msra.mxu0 0
        %2234 = vmatprep.subr.bf16.mxu0 0
        %2235 = vmatpush1.bf16.msra.mxu0 0
        %2236 = vmatprep.subr.bf16.mxu0 0
        %2237 = vmatpush1.bf16.msra.mxu0 0
        %2238 = vmatprep.subr.bf16.mxu0 0
        %2239 = vmatpush1.bf16.msra.mxu0 0
        %2240 = vmatprep.mubr.bf16.mxu0 0
        %2241 = vmatmul.mubr.bf16.gmra.mrb[0].mxu0 %v2206
        %v2242 = vpop.f32.mrb[0].mxu0
        %v2243 = vadd.f32 0.0, %v2242
        %v2244 = vpop.f32.mrb[0].mxu0
        %v2245 = vadd.f32 0.0, %v2244
        %v2246 = vpop.f32.mrb[0].mxu0
        %v2247 = vpop.f32.mrb[0].mxu0
        %2248 = vdwg.mxu0
        %v2249 = vadd.f32 %v2153, %v2243
        %v2250 = vadd.f32 %v2154, %v2245
        %v2251 = vld [vmem:[%s12] sm:$0xff]
        %2253 = vset.pattern.permute.xlu0 0
        %2254 = vperm.xlu0 %2253, %v2251
        %v2255 = vpop.permute.xlu0 %2254
        %v2257 = vadd.f32 %v2249, %v2255
        %v2258 = vadd.f32 %v2250, %v2255
        %v2259 = vmax.f32 %v2257, 0.0
        %v2260 = vmax.f32 %v2258, 0.0
        %2261 = vrot.lane.b32.xlu0 %v2259, 17
        %v2262 = vpop.permute.xlu0 %2261
        %2263 = vrot.lane.b32.xlu0 %v2260, 17
        %v2264 = vpop.permute.xlu0 %2263
        %v2265 = vlaneseq
        %v2266 = vand.u32 %v2265, 127
        %vm2267 = vcmp.lt.s32.totalorder %v2266, 17
        %v2268 = vsel %vm2267, %v2262, %v2264
        %v2269 = vsel %vm2267, %v2264, %v2262
        %v2270 = vld [vmem:[%s14] sm:$0x3]
        %v2272 = vlaneseq
        %v2273 = vshrl.u32 %v2272, 7
        %v2274 = vsub.s32 0, %v2273
        %v2275 = vrot.slane %v2270, %v2274
        %v2276 = vlaneseq
        %v2277 = vshrl.u32 %v2276, 7
        %v2278 = vsub.s32 1, %v2277
        %v2279 = vrot.slane %v2270, %v2278
        %v2282 = vmul.f32 %v2269, %v2275
        %v2283 = vmul.f32 %v2268, %v2279
        %v2284 = vpack.c.bf16 %v2282, %v2282
        %v2285 = vpack.c.bf16 %v2283, %v2283
        %v2286 = vld [vmem:[%s13] sm:$0xf]
        %2287 = vrot.lane.b32.xlu0 %v2259, 16
        %v2288 = vpop.permute.xlu0 %2287
        %2289 = vrot.lane.b32.xlu0 %v2260, 16
        %v2290 = vpop.permute.xlu0 %2289
        %vm2291 = vcmp.lt.s32.totalorder %v2266, 16
        %v2292 = vsel %vm2291, %v2288, %v2290
        %v2293 = vsel %vm2291, %v2290, %v2288
        %s2294 = scalar_lea.vmem %s14, 2
        %v2295 = vld [vmem:[%s2294] sm:$0x3]
        %v2297 = vlaneseq
        %v2298 = vshrl.u32 %v2297, 7
        %v2299 = vsub.s32 0, %v2298
        %v2300 = vrot.slane %v2295, %v2299
        %v2301 = vlaneseq
        %v2302 = vshrl.u32 %v2301, 7
        %v2303 = vsub.s32 1, %v2302
        %v2304 = vrot.slane %v2295, %v2303
        %v2307 = vmul.f32 %v2293, %v2300
        %v2308 = vmul.f32 %v2292, %v2304
        %v2309 = vpack.c.bf16 %v2307, %v2307
        %v2310 = vpack.c.bf16 %v2308, %v2308
        %s2311 = scalar_lea.vmem %s13, 4
        %v2312 = vld [vmem:[%s2311] sm:$0xf]
        %vm2313 = vcmask 64512
        %v2315 = vsel %vm2313, %v2312, 0
        %vm2317 = vcmask 1043456
        %v2319 = vsel %vm2317, %v2309, 0
        %v2322 = vsel %vm2317, %v2310, 0
        %2324 = vmatprep.subr.bf16.mxu0 %v2322
        %2325 = vmatpush1.bf16.msra.mxu0 %v2319
        %2326 = vmatprep.subr.bf16.mxu0 0
        %2327 = vmatpush1.bf16.msra.mxu0 0
        %2328 = vmatprep.subr.bf16.mxu0 0
        %2329 = vmatpush1.bf16.msra.mxu0 0
        %2330 = vmatprep.subr.bf16.mxu0 0
        %2331 = vmatpush1.bf16.msra.mxu0 0
        %2332 = vmatprep.subr.bf16.mxu0 0
        %2333 = vmatpush1.bf16.msra.mxu0 0
        %2334 = vmatprep.subr.bf16.mxu0 0
        %2335 = vmatpush1.bf16.msra.mxu0 0
        %2336 = vmatprep.subr.bf16.mxu0 0
        %2337 = vmatpush1.bf16.msra.mxu0 0
        %2338 = vmatprep.subr.bf16.mxu0 0
        %2339 = vmatpush1.bf16.msra.mxu0 0
        %2340 = vmatprep.subr.bf16.mxu0 0
        %2341 = vmatpush1.bf16.msra.mxu0 0
        %2342 = vmatprep.subr.bf16.mxu0 0
        %2343 = vmatpush1.bf16.msra.mxu0 0
        %2344 = vmatprep.subr.bf16.mxu0 0
        %2345 = vmatpush1.bf16.msra.mxu0 0
        %2346 = vmatprep.subr.bf16.mxu0 0
        %2347 = vmatpush1.bf16.msra.mxu0 0
        %2348 = vmatprep.subr.bf16.mxu0 0
        %2349 = vmatpush1.bf16.msra.mxu0 0
        %2350 = vmatprep.subr.bf16.mxu0 0
        %2351 = vmatpush1.bf16.msra.mxu0 0
        %2352 = vmatprep.subr.bf16.mxu0 0
        %2353 = vmatpush1.bf16.msra.mxu0 0
        %2354 = vmatprep.subr.bf16.mxu0 0
        %2355 = vmatpush1.bf16.msra.mxu0 0
        %2356 = vmatprep.mubr.bf16.mxu0 0
        %2357 = vmatmul.mubr.bf16.gmra.mrb[0].mxu0 %v2315
        %v2358 = vpop.f32.mrb[0].mxu0
        %v2359 = vadd.f32 0.0, %v2358
        %v2360 = vpop.f32.mrb[0].mxu0
        %v2361 = vadd.f32 0.0, %v2360
        %v2362 = vpop.f32.mrb[0].mxu0
        %v2363 = vpop.f32.mrb[0].mxu0
        %2364 = vdwg.mxu0
        %v2366 = vsel %vm2313, %v2286, 0
        %v2369 = vsel %vm2317, %v2284, 0
        %v2372 = vsel %vm2317, %v2285, 0
        %2374 = vmatprep.subr.bf16.mxu0 %v2372
        %2375 = vmatpush1.bf16.msra.mxu0 %v2369
        %2376 = vmatprep.subr.bf16.mxu0 0
        %2377 = vmatpush1.bf16.msra.mxu0 0
        %2378 = vmatprep.subr.bf16.mxu0 0
        %2379 = vmatpush1.bf16.msra.mxu0 0
        %2380 = vmatprep.subr.bf16.mxu0 0
        %2381 = vmatpush1.bf16.msra.mxu0 0
        %2382 = vmatprep.subr.bf16.mxu0 0
        %2383 = vmatpush1.bf16.msra.mxu0 0
        %2384 = vmatprep.subr.bf16.mxu0 0
        %2385 = vmatpush1.bf16.msra.mxu0 0
        %2386 = vmatprep.subr.bf16.mxu0 0
        %2387 = vmatpush1.bf16.msra.mxu0 0
        %2388 = vmatprep.subr.bf16.mxu0 0
        %2389 = vmatpush1.bf16.msra.mxu0 0
        %2390 = vmatprep.subr.bf16.mxu0 0
        %2391 = vmatpush1.bf16.msra.mxu0 0
        %2392 = vmatprep.subr.bf16.mxu0 0
        %2393 = vmatpush1.bf16.msra.mxu0 0
        %2394 = vmatprep.subr.bf16.mxu0 0
        %2395 = vmatpush1.bf16.msra.mxu0 0
        %2396 = vmatprep.subr.bf16.mxu0 0
        %2397 = vmatpush1.bf16.msra.mxu0 0
        %2398 = vmatprep.subr.bf16.mxu0 0
        %2399 = vmatpush1.bf16.msra.mxu0 0
        %2400 = vmatprep.subr.bf16.mxu0 0
        %2401 = vmatpush1.bf16.msra.mxu0 0
        %2402 = vmatprep.subr.bf16.mxu0 0
        %2403 = vmatpush1.bf16.msra.mxu0 0
        %2404 = vmatprep.subr.bf16.mxu0 0
        %2405 = vmatpush1.bf16.msra.mxu0 0
        %2406 = vmatprep.mubr.bf16.mxu0 0
        %2407 = vmatmul.mubr.bf16.gmra.mrb[0].mxu0 %v2366
        %v2408 = vpop.f32.mrb[0].mxu0
        %v2409 = vadd.f32 %v2359, %v2408
        %v2410 = vpop.f32.mrb[0].mxu0
        %v2411 = vadd.f32 %v2361, %v2410
        %v2412 = vpop.f32.mrb[0].mxu0
        %v2413 = vpop.f32.mrb[0].mxu0
        %2414 = vdwg.mxu0
        %2415 = vrot.lane.b32.xlu0 %v2259, 15
        %v2416 = vpop.permute.xlu0 %2415
        %2417 = vrot.lane.b32.xlu0 %v2260, 15
        %v2418 = vpop.permute.xlu0 %2417
        %vm2419 = vcmp.lt.s32.totalorder %v2266, 15
        %v2420 = vsel %vm2419, %v2416, %v2418
        %v2421 = vsel %vm2419, %v2418, %v2416
        %s2422 = scalar_lea.vmem %s14, 4
        %v2423 = vld [vmem:[%s2422] sm:$0x3]
        %v2425 = vlaneseq
        %v2426 = vshrl.u32 %v2425, 7
        %v2427 = vsub.s32 0, %v2426
        %v2428 = vrot.slane %v2423, %v2427
        %v2429 = vlaneseq
        %v2430 = vshrl.u32 %v2429, 7
        %v2431 = vsub.s32 1, %v2430
        %v2432 = vrot.slane %v2423, %v2431
        %v2435 = vmul.f32 %v2421, %v2428
        %v2436 = vmul.f32 %v2420, %v2432
        %v2437 = vpack.c.bf16 %v2435, %v2435
        %v2438 = vpack.c.bf16 %v2436, %v2436
        %s2439 = scalar_lea.vmem %s13, 8
        %v2440 = vld [vmem:[%s2439] sm:$0xf]
        %v2442 = vsel %vm2313, %v2440, 0
        %v2445 = vsel %vm2317, %v2437, 0
        %v2448 = vsel %vm2317, %v2438, 0
        %2450 = vmatprep.subr.bf16.mxu0 %v2448
        %2451 = vmatpush1.bf16.msra.mxu0 %v2445
        %2452 = vmatprep.subr.bf16.mxu0 0
        %2453 = vmatpush1.bf16.msra.mxu0 0
        %2454 = vmatprep.subr.bf16.mxu0 0
        %2455 = vmatpush1.bf16.msra.mxu0 0
        %2456 = vmatprep.subr.bf16.mxu0 0
        %2457 = vmatpush1.bf16.msra.mxu0 0
        %2458 = vmatprep.subr.bf16.mxu0 0
        %2459 = vmatpush1.bf16.msra.mxu0 0
        %2460 = vmatprep.subr.bf16.mxu0 0
        %2461 = vmatpush1.bf16.msra.mxu0 0
        %2462 = vmatprep.subr.bf16.mxu0 0
        %2463 = vmatpush1.bf16.msra.mxu0 0
        %2464 = vmatprep.subr.bf16.mxu0 0
        %2465 = vmatpush1.bf16.msra.mxu0 0
        %2466 = vmatprep.subr.bf16.mxu0 0
        %2467 = vmatpush1.bf16.msra.mxu0 0
        %2468 = vmatprep.subr.bf16.mxu0 0
        %2469 = vmatpush1.bf16.msra.mxu0 0
        %2470 = vmatprep.subr.bf16.mxu0 0
        %2471 = vmatpush1.bf16.msra.mxu0 0
        %2472 = vmatprep.subr.bf16.mxu0 0
        %2473 = vmatpush1.bf16.msra.mxu0 0
        %2474 = vmatprep.subr.bf16.mxu0 0
        %2475 = vmatpush1.bf16.msra.mxu0 0
        %2476 = vmatprep.subr.bf16.mxu0 0
        %2477 = vmatpush1.bf16.msra.mxu0 0
        %2478 = vmatprep.subr.bf16.mxu0 0
        %2479 = vmatpush1.bf16.msra.mxu0 0
        %2480 = vmatprep.subr.bf16.mxu0 0
        %2481 = vmatpush1.bf16.msra.mxu0 0
        %2482 = vmatprep.mubr.bf16.mxu0 0
        %2483 = vmatmul.mubr.bf16.gmra.mrb[0].mxu0 %v2442
        %v2484 = vpop.f32.mrb[0].mxu0
        %v2485 = vadd.f32 0.0, %v2484
        %v2486 = vpop.f32.mrb[0].mxu0
        %v2487 = vadd.f32 0.0, %v2486
        %v2488 = vpop.f32.mrb[0].mxu0
        %v2489 = vpop.f32.mrb[0].mxu0
        %2490 = vdwg.mxu0
        %v2491 = vadd.f32 %v2409, %v2485
        %v2492 = vadd.f32 %v2411, %v2487
        %2493 = vrot.lane.b32.xlu0 %v2259, 1
        %v2494 = vpop.permute.xlu0 %2493
        %2495 = vrot.lane.b32.xlu0 %v2260, 1
        %v2496 = vpop.permute.xlu0 %2495
        %vm2497 = vcmp.lt.s32.totalorder %v2266, 1
        %v2498 = vsel %vm2497, %v2494, %v2496
        %v2499 = vsel %vm2497, %v2496, %v2494
        %s2500 = scalar_lea.vmem %s14, 6
        %v2501 = vld [vmem:[%s2500] sm:$0x3]
        %v2503 = vlaneseq
        %v2504 = vshrl.u32 %v2503, 7
        %v2505 = vsub.s32 0, %v2504
        %v2506 = vrot.slane %v2501, %v2505
        %v2507 = vlaneseq
        %v2508 = vshrl.u32 %v2507, 7
        %v2509 = vsub.s32 1, %v2508
        %v2510 = vrot.slane %v2501, %v2509
        %v2513 = vmul.f32 %v2499, %v2506
        %v2514 = vmul.f32 %v2498, %v2510
        %v2515 = vpack.c.bf16 %v2513, %v2513
        %v2516 = vpack.c.bf16 %v2514, %v2514
        %s2517 = scalar_lea.vmem %s13, 12
        %v2518 = vld [vmem:[%s2517] sm:$0xf]
        %v2520 = vsel %vm2313, %v2518, 0
        %v2523 = vsel %vm2317, %v2515, 0
        %v2526 = vsel %vm2317, %v2516, 0
        %2528 = vmatprep.subr.bf16.mxu0 %v2526
        %2529 = vmatpush1.bf16.msra.mxu0 %v2523
        %2530 = vmatprep.subr.bf16.mxu0 0
        %2531 = vmatpush1.bf16.msra.mxu0 0
        %2532 = vmatprep.subr.bf16.mxu0 0
        %2533 = vmatpush1.bf16.msra.mxu0 0
        %2534 = vmatprep.subr.bf16.mxu0 0
        %2535 = vmatpush1.bf16.msra.mxu0 0
        %2536 = vmatprep.subr.bf16.mxu0 0
        %2537 = vmatpush1.bf16.msra.mxu0 0
        %2538 = vmatprep.subr.bf16.mxu0 0
        %2539 = vmatpush1.bf16.msra.mxu0 0
        %2540 = vmatprep.subr.bf16.mxu0 0
        %2541 = vmatpush1.bf16.msra.mxu0 0
        %2542 = vmatprep.subr.bf16.mxu0 0
        %2543 = vmatpush1.bf16.msra.mxu0 0
        %2544 = vmatprep.subr.bf16.mxu0 0
        %2545 = vmatpush1.bf16.msra.mxu0 0
        %2546 = vmatprep.subr.bf16.mxu0 0
        %2547 = vmatpush1.bf16.msra.mxu0 0
        %2548 = vmatprep.subr.bf16.mxu0 0
        %2549 = vmatpush1.bf16.msra.mxu0 0
        %2550 = vmatprep.subr.bf16.mxu0 0
        %2551 = vmatpush1.bf16.msra.mxu0 0
        %2552 = vmatprep.subr.bf16.mxu0 0
        %2553 = vmatpush1.bf16.msra.mxu0 0
        %2554 = vmatprep.subr.bf16.mxu0 0
        %2555 = vmatpush1.bf16.msra.mxu0 0
        %2556 = vmatprep.subr.bf16.mxu0 0
        %2557 = vmatpush1.bf16.msra.mxu0 0
        %2558 = vmatprep.subr.bf16.mxu0 0
        %2559 = vmatpush1.bf16.msra.mxu0 0
        %2560 = vmatprep.mubr.bf16.mxu0 0
        %2561 = vmatmul.mubr.bf16.gmra.mrb[0].mxu0 %v2520
        %v2562 = vpop.f32.mrb[0].mxu0
        %v2563 = vadd.f32 0.0, %v2562
        %v2564 = vpop.f32.mrb[0].mxu0
        %v2565 = vadd.f32 0.0, %v2564
        %v2566 = vpop.f32.mrb[0].mxu0
        %v2567 = vpop.f32.mrb[0].mxu0
        %2568 = vdwg.mxu0
        %v2569 = vadd.f32 %v2491, %v2563
        %v2570 = vadd.f32 %v2492, %v2565
        %v2571 = vpack.c.bf16 %v2259, %v2259
        %v2572 = vpack.c.bf16 %v2260, %v2260
        %s2573 = scalar_lea.vmem %s13, 16
        %v2574 = vld [vmem:[%s2573] sm:$0xf]
        %v2576 = vsel %vm2313, %v2574, 0
        %v2579 = vsel %vm2317, %v2571, 0
        %v2582 = vsel %vm2317, %v2572, 0
        %2584 = vmatprep.subr.bf16.mxu0 %v2582
        %2585 = vmatpush1.bf16.msra.mxu0 %v2579
        %2586 = vmatprep.subr.bf16.mxu0 0
        %2587 = vmatpush1.bf16.msra.mxu0 0
        %2588 = vmatprep.subr.bf16.mxu0 0
        %2589 = vmatpush1.bf16.msra.mxu0 0
        %2590 = vmatprep.subr.bf16.mxu0 0
        %2591 = vmatpush1.bf16.msra.mxu0 0
        %2592 = vmatprep.subr.bf16.mxu0 0
        %2593 = vmatpush1.bf16.msra.mxu0 0
        %2594 = vmatprep.subr.bf16.mxu0 0
        %2595 = vmatpush1.bf16.msra.mxu0 0
        %2596 = vmatprep.subr.bf16.mxu0 0
        %2597 = vmatpush1.bf16.msra.mxu0 0
        %2598 = vmatprep.subr.bf16.mxu0 0
        %2599 = vmatpush1.bf16.msra.mxu0 0
        %2600 = vmatprep.subr.bf16.mxu0 0
        %2601 = vmatpush1.bf16.msra.mxu0 0
        %2602 = vmatprep.subr.bf16.mxu0 0
        %2603 = vmatpush1.bf16.msra.mxu0 0
        %2604 = vmatprep.subr.bf16.mxu0 0
        %2605 = vmatpush1.bf16.msra.mxu0 0
        %2606 = vmatprep.subr.bf16.mxu0 0
        %2607 = vmatpush1.bf16.msra.mxu0 0
        %2608 = vmatprep.subr.bf16.mxu0 0
        %2609 = vmatpush1.bf16.msra.mxu0 0
        %2610 = vmatprep.subr.bf16.mxu0 0
        %2611 = vmatpush1.bf16.msra.mxu0 0
        %2612 = vmatprep.subr.bf16.mxu0 0
        %2613 = vmatpush1.bf16.msra.mxu0 0
        %2614 = vmatprep.subr.bf16.mxu0 0
        %2615 = vmatpush1.bf16.msra.mxu0 0
        %2616 = vmatprep.mubr.bf16.mxu0 0
        %2617 = vmatmul.mubr.bf16.gmra.mrb[0].mxu0 %v2576
        %v2618 = vpop.f32.mrb[0].mxu0
        %v2619 = vadd.f32 0.0, %v2618
        %v2620 = vpop.f32.mrb[0].mxu0
        %v2621 = vadd.f32 0.0, %v2620
        %v2622 = vpop.f32.mrb[0].mxu0
        %v2623 = vpop.f32.mrb[0].mxu0
        %2624 = vdwg.mxu0
        %v2625 = vadd.f32 %v2569, %v2619
        %v2626 = vadd.f32 %v2570, %v2621
        %2627 = vrot.lane.b32.xlu0 %v2259, 127
        %v2628 = vpop.permute.xlu0 %2627
        %2629 = vrot.lane.b32.xlu0 %v2260, 127
        %v2630 = vpop.permute.xlu0 %2629
        %vm2631 = vcmp.lt.s32.totalorder %v2266, 127
        %v2632 = vsel %vm2631, %v2628, %v2630
        %v2633 = vsel %vm2631, %v2630, %v2628
        %s2634 = scalar_lea.vmem %s14, 10
        %v2635 = vld [vmem:[%s2634] sm:$0x3]
        %v2637 = vlaneseq
        %v2638 = vshrl.u32 %v2637, 7
        %v2639 = vsub.s32 0, %v2638
        %v2640 = vrot.slane %v2635, %v2639
        %v2641 = vlaneseq
        %v2642 = vshrl.u32 %v2641, 7
        %v2643 = vsub.s32 1, %v2642
        %v2644 = vrot.slane %v2635, %v2643
        %v2647 = vmul.f32 %v2632, %v2640
        %v2648 = vmul.f32 %v2633, %v2644
        %v2649 = vpack.c.bf16 %v2647, %v2647
        %v2650 = vpack.c.bf16 %v2648, %v2648
        %s2651 = scalar_lea.vmem %s13, 20
        %v2652 = vld [vmem:[%s2651] sm:$0xf]
        %v2654 = vsel %vm2313, %v2652, 0
        %v2657 = vsel %vm2317, %v2649, 0
        %v2660 = vsel %vm2317, %v2650, 0
        %2662 = vmatprep.subr.bf16.mxu0 %v2660
        %2663 = vmatpush1.bf16.msra.mxu0 %v2657
        %2664 = vmatprep.subr.bf16.mxu0 0
        %2665 = vmatpush1.bf16.msra.mxu0 0
        %2666 = vmatprep.subr.bf16.mxu0 0
        %2667 = vmatpush1.bf16.msra.mxu0 0
        %2668 = vmatprep.subr.bf16.mxu0 0
        %2669 = vmatpush1.bf16.msra.mxu0 0
        %2670 = vmatprep.subr.bf16.mxu0 0
        %2671 = vmatpush1.bf16.msra.mxu0 0
        %2672 = vmatprep.subr.bf16.mxu0 0
        %2673 = vmatpush1.bf16.msra.mxu0 0
        %2674 = vmatprep.subr.bf16.mxu0 0
        %2675 = vmatpush1.bf16.msra.mxu0 0
        %2676 = vmatprep.subr.bf16.mxu0 0
        %2677 = vmatpush1.bf16.msra.mxu0 0
        %2678 = vmatprep.subr.bf16.mxu0 0
        %2679 = vmatpush1.bf16.msra.mxu0 0
        %2680 = vmatprep.subr.bf16.mxu0 0
        %2681 = vmatpush1.bf16.msra.mxu0 0
        %2682 = vmatprep.subr.bf16.mxu0 0
        %2683 = vmatpush1.bf16.msra.mxu0 0
        %2684 = vmatprep.subr.bf16.mxu0 0
        %2685 = vmatpush1.bf16.msra.mxu0 0
        %2686 = vmatprep.subr.bf16.mxu0 0
        %2687 = vmatpush1.bf16.msra.mxu0 0
        %2688 = vmatprep.subr.bf16.mxu0 0
        %2689 = vmatpush1.bf16.msra.mxu0 0
        %2690 = vmatprep.subr.bf16.mxu0 0
        %2691 = vmatpush1.bf16.msra.mxu0 0
        %2692 = vmatprep.subr.bf16.mxu0 0
        %2693 = vmatpush1.bf16.msra.mxu0 0
        %2694 = vmatprep.mubr.bf16.mxu0 0
        %2695 = vmatmul.mubr.bf16.gmra.mrb[0].mxu0 %v2654
        %v2696 = vpop.f32.mrb[0].mxu0
        %v2697 = vadd.f32 0.0, %v2696
        %v2698 = vpop.f32.mrb[0].mxu0
        %v2699 = vadd.f32 0.0, %v2698
        %v2700 = vpop.f32.mrb[0].mxu0
        %v2701 = vpop.f32.mrb[0].mxu0
        %2702 = vdwg.mxu0
        %v2703 = vadd.f32 %v2625, %v2697
        %v2704 = vadd.f32 %v2626, %v2699
        %2705 = vrot.lane.b32.xlu0 %v2259, 113
        %v2706 = vpop.permute.xlu0 %2705
        %2707 = vrot.lane.b32.xlu0 %v2260, 113
        %v2708 = vpop.permute.xlu0 %2707
        %vm2709 = vcmp.lt.s32.totalorder %v2266, 113
        %v2710 = vsel %vm2709, %v2706, %v2708
        %v2711 = vsel %vm2709, %v2708, %v2706
        %s2712 = scalar_lea.vmem %s14, 12
        %v2713 = vld [vmem:[%s2712] sm:$0x3]
        %v2715 = vlaneseq
        %v2716 = vshrl.u32 %v2715, 7
        %v2717 = vsub.s32 0, %v2716
        %v2718 = vrot.slane %v2713, %v2717
        %v2719 = vlaneseq
        %v2720 = vshrl.u32 %v2719, 7
        %v2721 = vsub.s32 1, %v2720
        %v2722 = vrot.slane %v2713, %v2721
        %v2725 = vmul.f32 %v2710, %v2718
        %v2726 = vmul.f32 %v2711, %v2722
        %v2727 = vpack.c.bf16 %v2725, %v2725
        %v2728 = vpack.c.bf16 %v2726, %v2726
        %s2729 = scalar_lea.vmem %s13, 24
        %v2730 = vld [vmem:[%s2729] sm:$0xf]
        %v2732 = vsel %vm2313, %v2730, 0
        %v2735 = vsel %vm2317, %v2727, 0
        %v2738 = vsel %vm2317, %v2728, 0
        %2740 = vmatprep.subr.bf16.mxu0 %v2738
        %2741 = vmatpush1.bf16.msra.mxu0 %v2735
        %2742 = vmatprep.subr.bf16.mxu0 0
        %2743 = vmatpush1.bf16.msra.mxu0 0
        %2744 = vmatprep.subr.bf16.mxu0 0
        %2745 = vmatpush1.bf16.msra.mxu0 0
        %2746 = vmatprep.subr.bf16.mxu0 0
        %2747 = vmatpush1.bf16.msra.mxu0 0
        %2748 = vmatprep.subr.bf16.mxu0 0
        %2749 = vmatpush1.bf16.msra.mxu0 0
        %2750 = vmatprep.subr.bf16.mxu0 0
        %2751 = vmatpush1.bf16.msra.mxu0 0
        %2752 = vmatprep.subr.bf16.mxu0 0
        %2753 = vmatpush1.bf16.msra.mxu0 0
        %2754 = vmatprep.subr.bf16.mxu0 0
        %2755 = vmatpush1.bf16.msra.mxu0 0
        %2756 = vmatprep.subr.bf16.mxu0 0
        %2757 = vmatpush1.bf16.msra.mxu0 0
        %2758 = vmatprep.subr.bf16.mxu0 0
        %2759 = vmatpush1.bf16.msra.mxu0 0
        %2760 = vmatprep.subr.bf16.mxu0 0
        %2761 = vmatpush1.bf16.msra.mxu0 0
        %2762 = vmatprep.subr.bf16.mxu0 0
        %2763 = vmatpush1.bf16.msra.mxu0 0
        %2764 = vmatprep.subr.bf16.mxu0 0
        %2765 = vmatpush1.bf16.msra.mxu0 0
        %2766 = vmatprep.subr.bf16.mxu0 0
        %2767 = vmatpush1.bf16.msra.mxu0 0
        %2768 = vmatprep.subr.bf16.mxu0 0
        %2769 = vmatpush1.bf16.msra.mxu0 0
        %2770 = vmatprep.subr.bf16.mxu0 0
        %2771 = vmatpush1.bf16.msra.mxu0 0
        %2772 = vmatprep.mubr.bf16.mxu0 0
        %2773 = vmatmul.mubr.bf16.gmra.mrb[0].mxu0 %v2732
        %v2774 = vpop.f32.mrb[0].mxu0
        %v2775 = vadd.f32 0.0, %v2774
        %v2776 = vpop.f32.mrb[0].mxu0
        %v2777 = vadd.f32 0.0, %v2776
        %v2778 = vpop.f32.mrb[0].mxu0
        %v2779 = vpop.f32.mrb[0].mxu0
        %2780 = vdwg.mxu0
        %v2781 = vadd.f32 %v2703, %v2775
        %v2782 = vadd.f32 %v2704, %v2777
        %2783 = vrot.lane.b32.xlu0 %v2259, 112
        %v2784 = vpop.permute.xlu0 %2783
        %2785 = vrot.lane.b32.xlu0 %v2260, 112
        %v2786 = vpop.permute.xlu0 %2785
        %vm2787 = vcmp.lt.s32.totalorder %v2266, 112
        %v2788 = vsel %vm2787, %v2784, %v2786
        %v2789 = vsel %vm2787, %v2786, %v2784
        %s2790 = scalar_lea.vmem %s14, 14
        %v2791 = vld [vmem:[%s2790] sm:$0x3]
        %v2793 = vlaneseq
        %v2794 = vshrl.u32 %v2793, 7
        %v2795 = vsub.s32 0, %v2794
        %v2796 = vrot.slane %v2791, %v2795
        %v2797 = vlaneseq
        %v2798 = vshrl.u32 %v2797, 7
        %v2799 = vsub.s32 1, %v2798
        %v2800 = vrot.slane %v2791, %v2799
        %v2803 = vmul.f32 %v2788, %v2796
        %v2804 = vmul.f32 %v2789, %v2800
        %v2805 = vpack.c.bf16 %v2803, %v2803
        %v2806 = vpack.c.bf16 %v2804, %v2804
        %s2807 = scalar_lea.vmem %s13, 28
        %v2808 = vld [vmem:[%s2807] sm:$0xf]
        %v2810 = vsel %vm2313, %v2808, 0
        %v2813 = vsel %vm2317, %v2805, 0
        %v2816 = vsel %vm2317, %v2806, 0
        %2818 = vmatprep.subr.bf16.mxu0 %v2816
        %2819 = vmatpush1.bf16.msra.mxu0 %v2813
        %2820 = vmatprep.subr.bf16.mxu0 0
        %2821 = vmatpush1.bf16.msra.mxu0 0
        %2822 = vmatprep.subr.bf16.mxu0 0
        %2823 = vmatpush1.bf16.msra.mxu0 0
        %2824 = vmatprep.subr.bf16.mxu0 0
        %2825 = vmatpush1.bf16.msra.mxu0 0
        %2826 = vmatprep.subr.bf16.mxu0 0
        %2827 = vmatpush1.bf16.msra.mxu0 0
        %2828 = vmatprep.subr.bf16.mxu0 0
        %2829 = vmatpush1.bf16.msra.mxu0 0
        %2830 = vmatprep.subr.bf16.mxu0 0
        %2831 = vmatpush1.bf16.msra.mxu0 0
        %2832 = vmatprep.subr.bf16.mxu0 0
        %2833 = vmatpush1.bf16.msra.mxu0 0
        %2834 = vmatprep.subr.bf16.mxu0 0
        %2835 = vmatpush1.bf16.msra.mxu0 0
        %2836 = vmatprep.subr.bf16.mxu0 0
        %2837 = vmatpush1.bf16.msra.mxu0 0
        %2838 = vmatprep.subr.bf16.mxu0 0
        %2839 = vmatpush1.bf16.msra.mxu0 0
        %2840 = vmatprep.subr.bf16.mxu0 0
        %2841 = vmatpush1.bf16.msra.mxu0 0
        %2842 = vmatprep.subr.bf16.mxu0 0
        %2843 = vmatpush1.bf16.msra.mxu0 0
        %2844 = vmatprep.subr.bf16.mxu0 0
        %2845 = vmatpush1.bf16.msra.mxu0 0
        %2846 = vmatprep.subr.bf16.mxu0 0
        %2847 = vmatpush1.bf16.msra.mxu0 0
        %2848 = vmatprep.subr.bf16.mxu0 0
        %2849 = vmatpush1.bf16.msra.mxu0 0
        %2850 = vmatprep.mubr.bf16.mxu0 0
        %2851 = vmatmul.mubr.bf16.gmra.mrb[0].mxu0 %v2810
        %v2852 = vpop.f32.mrb[0].mxu0
        %v2853 = vadd.f32 0.0, %v2852
        %v2854 = vpop.f32.mrb[0].mxu0
        %v2855 = vadd.f32 0.0, %v2854
        %v2856 = vpop.f32.mrb[0].mxu0
        %v2857 = vpop.f32.mrb[0].mxu0
        %2858 = vdwg.mxu0
        %v2859 = vadd.f32 %v2781, %v2853
        %v2860 = vadd.f32 %v2782, %v2855
        %2861 = vrot.lane.b32.xlu0 %v2259, 111
        %v2862 = vpop.permute.xlu0 %2861
        %2863 = vrot.lane.b32.xlu0 %v2260, 111
        %v2864 = vpop.permute.xlu0 %2863
        %vm2865 = vcmp.lt.s32.totalorder %v2266, 111
        %v2866 = vsel %vm2865, %v2862, %v2864
        %v2867 = vsel %vm2865, %v2864, %v2862
        %s2868 = scalar_lea.vmem %s14, 16
        %v2869 = vld [vmem:[%s2868] sm:$0x3]
        %v2871 = vlaneseq
        %v2872 = vshrl.u32 %v2871, 7
        %v2873 = vsub.s32 0, %v2872
        %v2874 = vrot.slane %v2869, %v2873
        %v2875 = vlaneseq
        %v2876 = vshrl.u32 %v2875, 7
        %v2877 = vsub.s32 1, %v2876
        %v2878 = vrot.slane %v2869, %v2877
        %v2881 = vmul.f32 %v2866, %v2874
        %v2882 = vmul.f32 %v2867, %v2878
        %v2883 = vpack.c.bf16 %v2881, %v2881
        %v2884 = vpack.c.bf16 %v2882, %v2882
        %s2885 = scalar_lea.vmem %s13, 32
        %v2886 = vld [vmem:[%s2885] sm:$0xf]
        %v2888 = vsel %vm2313, %v2886, 0
        %v2891 = vsel %vm2317, %v2883, 0
        %v2894 = vsel %vm2317, %v2884, 0
        %2896 = vmatprep.subr.bf16.mxu0 %v2894
        %2897 = vmatpush1.bf16.msra.mxu0 %v2891
        %2898 = vmatprep.subr.bf16.mxu0 0
        %2899 = vmatpush1.bf16.msra.mxu0 0
        %2900 = vmatprep.subr.bf16.mxu0 0
        %2901 = vmatpush1.bf16.msra.mxu0 0
        %2902 = vmatprep.subr.bf16.mxu0 0
        %2903 = vmatpush1.bf16.msra.mxu0 0
        %2904 = vmatprep.subr.bf16.mxu0 0
        %2905 = vmatpush1.bf16.msra.mxu0 0
        %2906 = vmatprep.subr.bf16.mxu0 0
        %2907 = vmatpush1.bf16.msra.mxu0 0
        %2908 = vmatprep.subr.bf16.mxu0 0
        %2909 = vmatpush1.bf16.msra.mxu0 0
        %2910 = vmatprep.subr.bf16.mxu0 0
        %2911 = vmatpush1.bf16.msra.mxu0 0
        %2912 = vmatprep.subr.bf16.mxu0 0
        %2913 = vmatpush1.bf16.msra.mxu0 0
        %2914 = vmatprep.subr.bf16.mxu0 0
        %2915 = vmatpush1.bf16.msra.mxu0 0
        %2916 = vmatprep.subr.bf16.mxu0 0
        %2917 = vmatpush1.bf16.msra.mxu0 0
        %2918 = vmatprep.subr.bf16.mxu0 0
        %2919 = vmatpush1.bf16.msra.mxu0 0
        %2920 = vmatprep.subr.bf16.mxu0 0
        %2921 = vmatpush1.bf16.msra.mxu0 0
        %2922 = vmatprep.subr.bf16.mxu0 0
        %2923 = vmatpush1.bf16.msra.mxu0 0
        %2924 = vmatprep.subr.bf16.mxu0 0
        %2925 = vmatpush1.bf16.msra.mxu0 0
        %2926 = vmatprep.subr.bf16.mxu0 0
        %2927 = vmatpush1.bf16.msra.mxu0 0
        %2928 = vmatprep.mubr.bf16.mxu0 0
        %2929 = vmatmul.mubr.bf16.gmra.mrb[0].mxu0 %v2888
        %v2930 = vpop.f32.mrb[0].mxu0
        %v2931 = vadd.f32 0.0, %v2930
        %v2932 = vpop.f32.mrb[0].mxu0
        %v2933 = vadd.f32 0.0, %v2932
        %v2934 = vpop.f32.mrb[0].mxu0
        %v2935 = vpop.f32.mrb[0].mxu0
        %2936 = vdwg.mxu0
        %v2937 = vadd.f32 %v2859, %v2931
        %v2938 = vadd.f32 %v2860, %v2933
        %v2939 = vld [vmem:[%s15] sm:$0xff]
        %2941 = vset.pattern.permute.xlu0 0
        %2942 = vperm.xlu0 %2941, %v2939
        %v2943 = vpop.permute.xlu0 %2942
        %v2945 = vadd.f32 %v2937, %v2943
        %v2946 = vadd.f32 %v2938, %v2943
        %v2947 = vxor.u32 %v2945, 2147483648
        %v2948 = vxor.u32 %v2946, 2147483648
        %v2949 = vmul.f32 %v2947, 1.442695
        %v2950 = vpow.pop %v2949
        %v2951 = vmul.f32 %v2948, 1.442695
        %v2952 = vpow.pop %v2951
        %v2953 = vadd.f32 %v2950, 1.0
        %v2954 = vadd.f32 %v2952, 1.0
        %v2955 = vrcp.pop %v2953
        %v2956 = vmul.f32 1.0, %v2955
        %v2957 = vrcp.pop %v2954
        %v2958 = vmul.f32 1.0, %v2957
        %2959 = vst [vmem:[%s510] sm:$0xff] %v2956
        %2960 = vst [vmem:[%s510 + $0x8] sm:$0xff] %v2958
        %s2961 = sand.u32 %s379, 1
        %s2962 = scalar_lea.sflag [#allocation3], %s2961
        %s2963 = sand.u32 %s379, 1
        %s2964 = smul.addr %s2963, 16
        %s2965 = scalar_lea.vmem [#allocation2], %s2964
        // Predicated region
        $region85: #{tpu_custom_call.1} parent=83 // pred_check
          %p2966 = pneg %p389
        $region86: #{tpu_custom_call.1} parent=83 // pred_check_branch
          %2968 = sbr.rel (%p2966) target = $region88
        $region87: #{tpu_custom_call.1} parent=83 // pred_region
          %s2970 = ssub.s32 256, 256
          %2971 = vsyncadd %s2962, %s2970
          %s2972 = smul.addr %s30, 2
          %s2973 = smul.addr %s2972, 128
          %s2974 = scalar_lea.hbm %s16, %s2973
          %s2976 = sshll.u32 %s2965, 4
          %s2977 = int_to_ptr.vmem [resolvable:$true] %s2976
          %2979 = dma.vmem_to_hbm [thread:$0]  %s2977, 256, %s2974, %s2962
        $region88: #{tpu_custom_call.1} parent=83 // pred_fallthru
          _
      $region84: #{tpu_custom_call.1} parent=5 // pred_fallthru
        _
      %p2980 = scmp.le.s32.totalorder 2, %s25
      // Predicated region
      $region89: #{tpu_custom_call.1} parent=5 // pred_check
        %p2981 = pneg %p2980
      $region90: #{tpu_custom_call.1} parent=5 // pred_check_branch
        %2983 = sbr.rel (%p2981) target = $region92
      $region91: #{tpu_custom_call.1} parent=5 // pred_region
        %s2984 = ssub.s32 %s25, 2
        // Predicated region
        $region93: #{tpu_custom_call.1} parent=91 // pred_check
          %p2985 = pneg %p395
        $region94: #{tpu_custom_call.1} parent=91 // pred_check_branch
          %2987 = sbr.rel (%p2985) target = $region96
        $region95: #{tpu_custom_call.1} parent=91 // pred_region
          %s2988 = sand.u32 %s380, 1
          %s2989 = scalar_lea.sflag [#allocation3], %s2988
          %s2990 = sand.u32 %s380, 1
          %s2991 = smul.addr %s2990, 16
          %s2992 = scalar_lea.vmem [#allocation2], %s2991
          %2993 = dma.done %s2989, 256
        $region96: #{tpu_custom_call.1} parent=91 // pred_fallthru
          _
      $region92: #{tpu_custom_call.1} parent=5 // pred_fallthru
        _
    $region6: #{tpu_custom_call.1} parent=1 // loop_footer
      %s29 = sadd.s32 1, %s25
    $region7: #{tpu_custom_call.1} parent=1 // loop_footer_branch
      %24 = sbr.rel target = $region3
    $region8: #{tpu_custom_call.1} parent=1 // loop_exit
      _
    %2994 = vsyncpa [#allocation3], 1
    %s2995 = scalar_lea.sflag [#allocation3], 1
    %2996 = vsyncpa %s2995, 1

</llo_original>
